<compile_context>
chip_gen: v5e
topology: v5e:2x2
jax: 0.10.0
libtpu: 0.0.40
codegen_flags: <defaults>
</compile_context>

<pallas_src>
import numpy as np
import jax
import jax.numpy as jnp
from jax.experimental import pallas as pl
from jax.experimental.pallas import tpu as pltpu

PAD = 0                        # constants.PAD

# ---- module-default configuration (small batch/seq) ----
B           = 2                # batch
L           = 8                # sequence length (<= encoder_max_len)
N_SRC_DIM   = 16               # input feature dim
D_MODEL     = 256
N_HEAD      = 3
D_K         = 64
D_V         = 64
D_INNER     = 256
N_LAYERS    = 2
ENC_MAX_LEN = 16
SUB         = (-1, 1)          # sub_sequence (time-restricted attention window)
LN_EPS      = 1e-3
NEG_INF     = -1e30

BL   = B * L
DP   = 128                     # per-head dim padded to one lane tile
NHP  = N_HEAD * DP             # 384 (lane-aligned head concat width)


def position_encoding_init(n_position, d_pos_vec):
    """Sinusoid position encoding table (same as the PyTorch helper)."""
    pe = np.array(
        [[pos / np.power(10000, 2 * (j // 2) / d_pos_vec) for j in range(d_pos_vec)]
         if pos != 0 else np.zeros(d_pos_vec)
         for pos in range(n_position)])
    pe[1:, 0::2] = np.sin(pe[1:, 0::2])
    pe[1:, 1::2] = np.cos(pe[1:, 1::2])
    return jnp.asarray(pe, dtype=jnp.float32)


# ---------------------------------------------------------------------------
# Pallas kernel: one encoder layer per grid step, activations resident in VMEM.
# ---------------------------------------------------------------------------
def encoder_kernel(x_ref, pos_src_ref, pos_trans_ref, amask_ref, wproj_ref,
                   wqkv_ref, wo_ref, bo_ref, ln1g_ref, ln1b_ref,
                   w1_ref, b1_ref, w2_ref, b2_ref, ln2g_ref, ln2b_ref,
                   out_ref, enc_ref):
    f32  = jnp.float32
    bf16 = jnp.bfloat16
    l = pl.program_id(0)

    # ----- first step: src_projection (no bias) + position encoding -----
    @pl.when(l == 0)
    def _():
        enc_ref[...] = (jnp.dot(x_ref[...].astype(bf16), wproj_ref[...],
                                preferred_element_type=f32)
                        + pos_src_ref[...])

    enc = enc_ref[...]                               # (BL, D_MODEL) f32

    inv_nm1 = 1.0 / (D_MODEL - 1.0)                  # unbiased variance (torch .std())

    def layer_norm(z, g, b):
        mu  = jnp.mean(z, axis=-1, keepdims=True)
        var = jnp.sum((z - mu) ** 2, axis=-1, keepdims=True) * inv_nm1
        # exact reciprocal: LN feeds every later layer, keep it tight
        inv = 1.0 / (jnp.sqrt(var) + LN_EPS)
        return (z - mu) * inv * g + b

    # ---------------- multi-head self attention ----------------
    residual = enc
    # One fused projection for Q|K|V of all heads; each head's 64-wide block is
    # zero-padded to 128 lanes so slices below are lane-tile aligned.  The
    # 1/sqrt(d_model) attention scale is pre-folded into the Q columns.
    qkv = jnp.dot(enc.astype(bf16), wqkv_ref[0],
                  preferred_element_type=f32)        # (BL, 3*NHP) f32

    # per-head scores, stacked along the sublane axis for one fused softmax
    scores = []
    for h in range(N_HEAD):
        q = qkv[:, h * DP:(h + 1) * DP]                          # (BL, DP)
        k = qkv[:, NHP + h * DP: NHP + (h + 1) * DP]             # (BL, DP)
        scores.append(jax.lax.dot_general(q, k, (((1,), (1,)), ((), ())),
                                          preferred_element_type=f32))
    s_all = jnp.concatenate(scores, axis=0) + amask_ref[...]      # (3*BL, BL)

    # TODO(synk): fully-masked query rows degenerate to uniform attention over
    # masked keys (exp(-1e30 - (-1e30)) == 1); not hit by this configuration.
    m = jnp.max(s_all, axis=-1, keepdims=True)
    e = jnp.exp(s_all - m)
    p = e * pl.reciprocal(jnp.sum(e, axis=-1, keepdims=True), approx=True)

    heads = []
    for h in range(N_HEAD):
        ph = p[h * BL:(h + 1) * BL]                              # (BL, BL)
        v  = qkv[:, 2 * NHP + h * DP: 2 * NHP + (h + 1) * DP]    # (BL, DP)
        heads.append(jnp.dot(ph, v, preferred_element_type=f32)) # (BL, DP)
    concat = jnp.concatenate(heads, axis=-1)                     # (BL, NHP) lane-aligned
    mha = jnp.dot(concat.astype(bf16), wo_ref[0],
                  preferred_element_type=f32) + bo_ref[0]
    enc = layer_norm(mha + residual, ln1g_ref[0], ln1b_ref[0])

    # ---------------- position-wise feed forward ----------------
    residual = enc
    hid = jnp.maximum(
        jnp.dot(enc.astype(bf16), w1_ref[0], preferred_element_type=f32)
        + b1_ref[0], 0.0)
    ff = jnp.dot(hid.astype(bf16), w2_ref[0],
                 preferred_element_type=f32) + b2_ref[0]
    enc = layer_norm(ff + residual, ln2g_ref[0], ln2b_ref[0])

    enc_ref[...] = enc

    # ----- last step: + trans_pos_enc and lane-dense (BL, 256) store -----
    @pl.when(l == pl.num_programs(0) - 1)
    def _():
        out_ref[...] = enc + pos_trans_ref[...]


# ---------------------------------------------------------------------------
# Wrapper: build masks / pos tables / packed bf16 weights and call pallas_call.
# ---------------------------------------------------------------------------
def _pack_heads_padded(w):
    """(NL, NH, D_MODEL, D) -> (NL, D_MODEL, NH*DP), each head zero-padded to DP lanes."""
    nl, nh, dm, d = w.shape
    wp = jnp.zeros((nl, nh, dm, DP), w.dtype).at[..., :d].set(w)
    return jnp.transpose(wp, (0, 2, 1, 3)).reshape(nl, dm, nh * DP)


def encoder_forward(src_seq, src_pad_mask, params):
    Bb, Ll, Din = src_seq.shape
    BLl = Bb * Ll

    pos_src   = params["pos_table"][:Ll]        # position_enc(arange(L))   (L, D_MODEL)
    pos_trans = params["trans_pos_table"][:Ll]  # trans_pos_enc(arange(L))  (L, D_MODEL)
    pos_src2d   = jnp.tile(pos_src,   (Bb, 1))  # (B*L, D_MODEL)
    pos_trans2d = jnp.tile(pos_trans, (Bb, 1))  # (B*L, D_MODEL)

    # get_attn_padding_mask + get_attn_subsequent_mask + gt(..., 0)
    pad_mask = jnp.broadcast_to((src_pad_mask == PAD)[:, None, :], (Bb, Ll, Ll))
    idx = jnp.arange(Ll)
    rel = idx[None, :] - idx[:, None]                     # j - i
    sub_mask = (rel < SUB[0]) | (rel > SUB[1])            # outside [start, end]
    full_mask = pad_mask | sub_mask[None]                 # (B, L, L) bool

    # Block-diagonal additive mask over the batch-folded (B*L, B*L) scores.
    # TODO(synk): this folded layout is a small-B trick (O(B^2 L^2) scores);
    # for larger B move batch to a 'parallel' grid axis with per-batch (L,L)
    # masks (also claims the second TensorCore on v7x).
    same_b = (jnp.arange(Bb)[:, None] == jnp.arange(Bb)[None, :])[:, None, :, None]
    folded = jnp.where(same_b, full_mask[:, :, None, :], True)          # (B,L,B,L)
    addmask = jnp.where(folded, NEG_INF, 0.0).reshape(BLl, BLl).astype(jnp.float32)
    amask3 = jnp.tile(addmask, (N_HEAD, 1))               # (N_HEAD*BL, BL), per-head stack

    # Pack weights (f32 math), then cast MXU operands to bf16 for half the DMA bytes.
    temper = float(np.sqrt(D_MODEL))                      # ScaledDotProductAttention scale
    wqkv = jnp.concatenate([_pack_heads_padded(params["wqs"] / temper),
                            _pack_heads_padded(params["wks"]),
                            _pack_heads_padded(params["wvs"])],
                           axis=-1).astype(jnp.bfloat16)  # (NL, D_MODEL, 3*NHP)
    wo_pad = jnp.zeros((N_LAYERS, N_HEAD, DP, D_MODEL), jnp.float32)
    wo_pad = wo_pad.at[:, :, :D_V, :].set(params["wo"])
    wo_p = wo_pad.reshape(N_LAYERS, NHP, D_MODEL).astype(jnp.bfloat16)   # (NL, NHP, D_MODEL)

    wproj_b = params["wproj"].astype(jnp.bfloat16)
    w1_b    = params["w1"].astype(jnp.bfloat16)
    w2_b    = params["w2"].astype(jnp.bfloat16)

    x2d = src_seq.reshape(BLl, Din)

    def _const(shape):           # fetched once, resident across all layer steps
        nd = len(shape)
        return pl.BlockSpec(shape, lambda l, nd=nd: (0,) * nd)

    def _per_layer(shape):       # double-buffered per-layer weight block
        nd = len(shape)
        return pl.BlockSpec((1,) + shape, lambda l, nd=nd: (l,) + (0,) * nd)

    in_specs = [
        _const((BLl, Din)),                        # x
        _const((BLl, D_MODEL)),                    # pos_src
        _const((BLl, D_MODEL)),                    # pos_trans
        _const((N_HEAD * BLl, BLl)),               # additive mask (per-head stacked)
        _const((Din, D_MODEL)),                    # wproj (bf16)
        _per_layer((D_MODEL, 3 * NHP)),            # wqkv (bf16, fused, Q pre-scaled, padded)
        _per_layer((NHP, D_MODEL)),                # wo   (bf16, fused, padded rows)
        _per_layer((1, D_MODEL)),                  # bo
        _per_layer((1, D_MODEL)),                  # ln1g
        _per_layer((1, D_MODEL)),                  # ln1b
        _per_layer((D_MODEL, D_INNER)),            # w1 (bf16)
        _per_layer((1, D_INNER)),                  # b1
        _per_layer((D_INNER, D_MODEL)),            # w2 (bf16)
        _per_layer((1, D_MODEL)),                  # b2
        _per_layer((1, D_MODEL)),                  # ln2g
        _per_layer((1, D_MODEL)),                  # ln2b
    ]

    out2d = pl.pallas_call(
        encoder_kernel,
        out_shape=jax.ShapeDtypeStruct((BLl, D_MODEL), jnp.float32),
        grid=(N_LAYERS,),                          # one encoder layer per grid step
        in_specs=in_specs,
        out_specs=_const((BLl, D_MODEL)),          # lane-dense (last dim 256)
        scratch_shapes=[pltpu.VMEM((BLl, D_MODEL), jnp.float32)],   # resident `enc`
        compiler_params=pltpu.CompilerParams(dimension_semantics=("arbitrary",)),
    )(x2d, pos_src2d, pos_trans2d, amask3, wproj_b, wqkv, wo_p,
      params["bo"], params["ln1g"], params["ln1b"], w1_b, params["b1"],
      w2_b, params["b2"], params["ln2g"], params["ln2b"])

    return out2d.reshape(Bb, Ll, D_MODEL), full_mask, pos_src, pos_trans


# ---------------------------------------------------------------------------
# Pure-JAX reference (original per-head / per-batch math) for correctness.
# ---------------------------------------------------------------------------
def encoder_ref(src_seq, full_mask, pos_src, pos_trans, p):
    enc = jnp.einsum('bld,dm->blm', src_seq, p["wproj"]) + pos_src[None]
    temper = float(np.sqrt(D_MODEL))

    def ln(z, g, b):
        mu  = jnp.mean(z, -1, keepdims=True)
        var = jnp.sum((z - mu) ** 2, -1, keepdims=True) / (D_MODEL - 1)
        return (z - mu) / (jnp.sqrt(var) + LN_EPS) * g + b

    for l in range(N_LAYERS):
        residual = enc
        mha = 0.0
        for h in range(N_HEAD):
            q = enc @ p["wqs"][l, h]
            k = enc @ p["wks"][l, h]
            v = enc @ p["wvs"][l, h]
            attn = jnp.einsum('bqd,bkd->bqk', q, k) / temper
            attn = jnp.where(full_mask, NEG_INF, attn)
            attn = jax.nn.softmax(attn, axis=-1)
            head = jnp.einsum('bqk,bkd->bqd', attn, v)
            mha = mha + jnp.einsum('bld,dm->blm', head, p["wo"][l, h])
        mha = mha + p["bo"][l]
        enc = ln(mha + residual, p["ln1g"][l], p["ln1b"][l])

        residual = enc
        hid = jax.nn.relu(jnp.einsum('blm,mi->bli', enc, p["w1"][l]) + p["b1"][l])
        ff  = jnp.einsum('bli,im->blm', hid, p["w2"][l]) + p["b2"][l]
        enc = ln(ff + residual, p["ln2g"][l], p["ln2b"][l])
    return enc + pos_trans[None]


def init_params(key):
    ks = jax.random.split(key, 10)
    n = lambda k, s, scale=0.1: (scale * jax.random.normal(k, s)).astype(jnp.float32)
    pos_table = position_encoding_init(ENC_MAX_LEN, D_MODEL)
    return {
        "pos_table": pos_table,
        "trans_pos_table": pos_table,     # trans_pos_enc is init'd identically & frozen
        "wproj": n(ks[0], (N_SRC_DIM, D_MODEL)),
        "wqs":   n(ks[1], (N_LAYERS, N_HEAD, D_MODEL, D_K)),
        "wks":   n(ks[2], (N_LAYERS, N_HEAD, D_MODEL, D_K)),
        "wvs":   n(ks[3], (N_LAYERS, N_HEAD, D_MODEL, D_V)),
        "wo":    n(ks[4], (N_LAYERS, N_HEAD, D_V, D_MODEL)),
        "bo":    n(ks[5], (N_LAYERS, 1, D_MODEL)),
        "ln1g":  jnp.ones((N_LAYERS, 1, D_MODEL), jnp.float32),
        "ln1b":  jnp.zeros((N_LAYERS, 1, D_MODEL), jnp.float32),
        "w1":    n(ks[6], (N_LAYERS, D_MODEL, D_INNER)),
        "b1":    n(ks[7], (N_LAYERS, 1, D_INNER)),
        "w2":    n(ks[8], (N_LAYERS, D_INNER, D_MODEL)),
        "b2":    n(ks[9], (N_LAYERS, 1, D_MODEL)),
        "ln2g":  jnp.ones((N_LAYERS, 1, D_MODEL), jnp.float32),
        "ln2b":  jnp.zeros((N_LAYERS, 1, D_MODEL), jnp.float32),
    }
    # TODO(synk): dropout layers are identity here (inference semantics).


if __name__ == "__main__":
    key = jax.random.PRNGKey(0)
    kp, kx = jax.random.split(key)
    params = init_params(kp)

    src_seq = jax.random.normal(kx, (B, L, N_SRC_DIM), dtype=jnp.float32)
    # src_pad_mask: non-PAD everywhere except the last position of batch 1
    src_pad_mask = jnp.ones((B, L), dtype=jnp.int32)
    src_pad_mask = src_pad_mask.at[1, L - 1].set(PAD)

    out, full_mask, pos_src, pos_trans = encoder_forward(src_seq, src_pad_mask, params)
    out = jax.block_until_ready(out)

    ref = encoder_ref(src_seq, full_mask, pos_src, pos_trans, params)
    # bf16 MXU operands (f32 accumulation) + approx softmax reciprocal on the
    # kernel side vs f32 reference -> modest tolerance
    np.testing.assert_allclose(np.asarray(out), np.asarray(ref), rtol=2e-2, atol=2e-2)

    print("KERNEL_OK")
</pallas_src>

<mosaic_0001>
module attributes {stable_mosaic.version = 11 : i64} {
  func.func @encoder_kernel(%arg0: i32, %arg1: memref<16x16xf32, #tpu.memory_space<vmem>>, %arg2: memref<16x256xf32, #tpu.memory_space<vmem>>, %arg3: memref<16x256xf32, #tpu.memory_space<vmem>>, %arg4: memref<48x16xf32, #tpu.memory_space<vmem>>, %arg5: memref<16x256xbf16, #tpu.memory_space<vmem>>, %arg6: memref<1x256x1152xbf16, #tpu.memory_space<vmem>>, %arg7: memref<1x384x256xbf16, #tpu.memory_space<vmem>>, %arg8: memref<1x1x256xf32, #tpu.memory_space<vmem>>, %arg9: memref<1x1x256xf32, #tpu.memory_space<vmem>>, %arg10: memref<1x1x256xf32, #tpu.memory_space<vmem>>, %arg11: memref<1x256x256xbf16, #tpu.memory_space<vmem>>, %arg12: memref<1x1x256xf32, #tpu.memory_space<vmem>>, %arg13: memref<1x256x256xbf16, #tpu.memory_space<vmem>>, %arg14: memref<1x1x256xf32, #tpu.memory_space<vmem>>, %arg15: memref<1x1x256xf32, #tpu.memory_space<vmem>>, %arg16: memref<1x1x256xf32, #tpu.memory_space<vmem>>, %arg17: memref<16x256xf32, #tpu.memory_space<vmem>>, %arg18: memref<16x256xf32, #tpu.memory_space<vmem>>) attributes {dimension_semantics = [#tpu.dimension_semantics<arbitrary>], iteration_bounds = array<i64: 2>, scalar_prefetch = 0 : i64, scratch_operands = 1 : i64, tpu.core_type = #tpu.core_type<tc>, window_params = [{pipeline_mode = #tpu.pipeline_mode<synchronous>, transform_indices = @transform_0, window_bounds = array<i64: 16, 16>}, {pipeline_mode = #tpu.pipeline_mode<synchronous>, transform_indices = @transform_1, window_bounds = array<i64: 16, 256>}, {pipeline_mode = #tpu.pipeline_mode<synchronous>, transform_indices = @transform_2, window_bounds = array<i64: 16, 256>}, {pipeline_mode = #tpu.pipeline_mode<synchronous>, transform_indices = @transform_3, window_bounds = array<i64: 48, 16>}, {pipeline_mode = #tpu.pipeline_mode<synchronous>, transform_indices = @transform_4, window_bounds = array<i64: 16, 256>}, {transform_indices = @transform_5, window_bounds = array<i64: 1, 256, 1152>}, {transform_indices = @transform_6, window_bounds = array<i64: 1, 384, 256>}, {transform_indices = @transform_7, window_bounds = array<i64: 1, 1, 256>}, {transform_indices = @transform_8, window_bounds = array<i64: 1, 1, 256>}, {transform_indices = @transform_9, window_bounds = array<i64: 1, 1, 256>}, {transform_indices = @transform_10, window_bounds = array<i64: 1, 256, 256>}, {transform_indices = @transform_11, window_bounds = array<i64: 1, 1, 256>}, {transform_indices = @transform_12, window_bounds = array<i64: 1, 256, 256>}, {transform_indices = @transform_13, window_bounds = array<i64: 1, 1, 256>}, {transform_indices = @transform_14, window_bounds = array<i64: 1, 1, 256>}, {transform_indices = @transform_15, window_bounds = array<i64: 1, 1, 256>}, {pipeline_mode = #tpu.pipeline_mode<synchronous>, transform_indices = @transform_16, window_bounds = array<i64: 16, 256>}]} {
    %c0_i32 = arith.constant 0 : i32
    %0 = arith.cmpi eq, %arg0, %c0_i32 : i32
    %1 = arith.extui %0 : i1 to i32
    %c0_i32_0 = arith.constant 0 : i32
    %2 = arith.cmpi ne, %1, %c0_i32_0 : i32
    scf.if %2 {
      %c0_64 = arith.constant 0 : index
      %c0_65 = arith.constant 0 : index
      %128 = vector.load %arg1[%c0_64, %c0_65] : memref<16x16xf32, #tpu.memory_space<vmem>>, vector<16x16xf32>
      %129 = arith.truncf %128 : vector<16x16xf32> to vector<16x16xbf16>
      %c0_66 = arith.constant 0 : index
      %c0_67 = arith.constant 0 : index
      %130 = vector.load %arg5[%c0_66, %c0_67] : memref<16x256xbf16, #tpu.memory_space<vmem>>, vector<16x256xbf16>
      %cst_68 = arith.constant dense<0.000000e+00> : vector<16x256xf32>
      %131 = tpu.matmul %129, %130, %cst_68 {dimension_numbers = #tpu.dot_dimension_numbers<[1], [0], [0], [1], [0, 0, 1, 1], [], []>} : vector<16x16xbf16>, vector<16x256xbf16>, vector<16x256xf32> -> vector<16x256xf32>
      %c0_69 = arith.constant 0 : index
      %c0_70 = arith.constant 0 : index
      %132 = vector.load %arg2[%c0_69, %c0_70] : memref<16x256xf32, #tpu.memory_space<vmem>>, vector<16x256xf32>
      %133 = arith.addf %131, %132 : vector<16x256xf32>
      %c0_71 = arith.constant 0 : index
      %c0_72 = arith.constant 0 : index
      %134 = vector.load %arg18[%c0_71, %c0_72] : memref<16x256xf32, #tpu.memory_space<vmem>>, vector<16x256xf32>
      tpu.vector_store %arg18[%c0_71, %c0_72], %133 {strides = array<i32>} : memref<16x256xf32, #tpu.memory_space<vmem>>, vector<16x256xf32>,
    } else {
    }
    %c0 = arith.constant 0 : index
    %c0_1 = arith.constant 0 : index
    %3 = vector.load %arg18[%c0, %c0_1] : memref<16x256xf32, #tpu.memory_space<vmem>>, vector<16x256xf32>
    %4 = arith.truncf %3 : vector<16x256xf32> to vector<16x256xbf16>
    %c0_2 = arith.constant 0 : index
    %c0_3 = arith.constant 0 : index
    %c0_4 = arith.constant 0 : index
    %5 = vector.load %arg6[%c0_2, %c0_3, %c0_4] : memref<1x256x1152xbf16, #tpu.memory_space<vmem>>, vector<1x256x1152xbf16>
    %6 = vector.shape_cast %5 : vector<1x256x1152xbf16> to vector<256x1152xbf16>
    %cst = arith.constant dense<0.000000e+00> : vector<16x1152xf32>
    %7 = tpu.matmul %4, %6, %cst {dimension_numbers = #tpu.dot_dimension_numbers<[1], [0], [0], [1], [0, 0, 1, 1], [], []>} : vector<16x256xbf16>, vector<256x1152xbf16>, vector<16x1152xf32> -> vector<16x1152xf32>
    %8 = vector.extract_strided_slice %7 {offsets = [0, 0], sizes = [16, 128], strides = [1, 1]} : vector<16x1152xf32> to vector<16x128xf32>
    %9 = vector.extract_strided_slice %7 {offsets = [0, 384], sizes = [16, 128], strides = [1, 1]} : vector<16x1152xf32> to vector<16x128xf32>
    %cst_5 = arith.constant dense<0.000000e+00> : vector<16x16xf32>
    %10 = tpu.matmul %8, %9, %cst_5 {dimension_numbers = #tpu.dot_dimension_numbers<[1], [1], [0], [0], [0, 0, 1, 0], [], []>} : vector<16x128xf32>, vector<16x128xf32>, vector<16x16xf32> -> vector<16x16xf32>
    %11 = vector.extract_strided_slice %7 {offsets = [0, 128], sizes = [16, 128], strides = [1, 1]} : vector<16x1152xf32> to vector<16x128xf32>
    %12 = vector.extract_strided_slice %7 {offsets = [0, 512], sizes = [16, 128], strides = [1, 1]} : vector<16x1152xf32> to vector<16x128xf32>
    %cst_6 = arith.constant dense<0.000000e+00> : vector<16x16xf32>
    %13 = tpu.matmul %11, %12, %cst_6 {dimension_numbers = #tpu.dot_dimension_numbers<[1], [1], [0], [0], [0, 0, 1, 0], [], []>} : vector<16x128xf32>, vector<16x128xf32>, vector<16x16xf32> -> vector<16x16xf32>
    %14 = vector.extract_strided_slice %7 {offsets = [0, 256], sizes = [16, 128], strides = [1, 1]} : vector<16x1152xf32> to vector<16x128xf32>
    %15 = vector.extract_strided_slice %7 {offsets = [0, 640], sizes = [16, 128], strides = [1, 1]} : vector<16x1152xf32> to vector<16x128xf32>
    %cst_7 = arith.constant dense<0.000000e+00> : vector<16x16xf32>
    %16 = tpu.matmul %14, %15, %cst_7 {dimension_numbers = #tpu.dot_dimension_numbers<[1], [1], [0], [0], [0, 0, 1, 0], [], []>} : vector<16x128xf32>, vector<16x128xf32>, vector<16x16xf32> -> vector<16x16xf32>
    %17 = tpu.concatenate %10, %13, %16 in 0 : vector<16x16xf32>, vector<16x16xf32>, vector<16x16xf32> -> vector<48x16xf32>
    %c0_8 = arith.constant 0 : index
    %c0_9 = arith.constant 0 : index
    %18 = vector.load %arg4[%c0_8, %c0_9] : memref<48x16xf32, #tpu.memory_space<vmem>>, vector<48x16xf32>
    %19 = arith.addf %17, %18 : vector<48x16xf32>
    %cst_10 = arith.constant dense<0xFF800000> : vector<48xf32>
    %20 = vector.multi_reduction <maximumf>, %19, %cst_10 [1] : vector<48x16xf32> to vector<48xf32>
    %21 = vector.shape_cast %20 : vector<48xf32> to vector<48x1xf32>
    %22 = vector.broadcast %21 : vector<48x1xf32> to vector<48x16xf32>
    %23 = arith.subf %19, %22 : vector<48x16xf32>
    %24 = math.exp %23 : vector<48x16xf32>
    %cst_11 = arith.constant dense<0.000000e+00> : vector<48xf32>
    %25 = vector.multi_reduction <add>, %24, %cst_11 [1] : vector<48x16xf32> to vector<48xf32>
    %26 = vector.shape_cast %25 : vector<48xf32> to vector<48x1xf32>
    %27 = tpu.reciprocal %26 {approx = true} : vector<48x1xf32> -> vector<48x1xf32>
    %28 = vector.broadcast %27 : vector<48x1xf32> to vector<48x16xf32>
    %29 = arith.mulf %24, %28 : vector<48x16xf32>
    %30 = vector.extract_strided_slice %29 {offsets = [0, 0], sizes = [16, 16], strides = [1, 1]} : vector<48x16xf32> to vector<16x16xf32>
    %31 = vector.extract_strided_slice %7 {offsets = [0, 768], sizes = [16, 128], strides = [1, 1]} : vector<16x1152xf32> to vector<16x128xf32>
    %cst_12 = arith.constant dense<0.000000e+00> : vector<16x128xf32>
    %32 = tpu.matmul %30, %31, %cst_12 {dimension_numbers = #tpu.dot_dimension_numbers<[1], [0], [0], [1], [0, 0, 1, 1], [], []>} : vector<16x16xf32>, vector<16x128xf32>, vector<16x128xf32> -> vector<16x128xf32>
    %33 = vector.extract_strided_slice %29 {offsets = [16, 0], sizes = [16, 16], strides = [1, 1]} : vector<48x16xf32> to vector<16x16xf32>
    %34 = vector.extract_strided_slice %7 {offsets = [0, 896], sizes = [16, 128], strides = [1, 1]} : vector<16x1152xf32> to vector<16x128xf32>
    %cst_13 = arith.constant dense<0.000000e+00> : vector<16x128xf32>
    %35 = tpu.matmul %33, %34, %cst_13 {dimension_numbers = #tpu.dot_dimension_numbers<[1], [0], [0], [1], [0, 0, 1, 1], [], []>} : vector<16x16xf32>, vector<16x128xf32>, vector<16x128xf32> -> vector<16x128xf32>
    %36 = vector.extract_strided_slice %29 {offsets = [32, 0], sizes = [16, 16], strides = [1, 1]} : vector<48x16xf32> to vector<16x16xf32>
    %37 = vector.extract_strided_slice %7 {offsets = [0, 1024], sizes = [16, 128], strides = [1, 1]} : vector<16x1152xf32> to vector<16x128xf32>
    %cst_14 = arith.constant dense<0.000000e+00> : vector<16x128xf32>
    %38 = tpu.matmul %36, %37, %cst_14 {dimension_numbers = #tpu.dot_dimension_numbers<[1], [0], [0], [1], [0, 0, 1, 1], [], []>} : vector<16x16xf32>, vector<16x128xf32>, vector<16x128xf32> -> vector<16x128xf32>
    %39 = tpu.concatenate %32, %35, %38 in 1 : vector<16x128xf32>, vector<16x128xf32>, vector<16x128xf32> -> vector<16x384xf32>
    %40 = arith.truncf %39 : vector<16x384xf32> to vector<16x384xbf16>
    %c0_15 = arith.constant 0 : index
    %c0_16 = arith.constant 0 : index
    %c0_17 = arith.constant 0 : index
    %41 = vector.load %arg7[%c0_15, %c0_16, %c0_17] : memref<1x384x256xbf16, #tpu.memory_space<vmem>>, vector<1x384x256xbf16>
    %42 = vector.shape_cast %41 : vector<1x384x256xbf16> to vector<384x256xbf16>
    %cst_18 = arith.constant dense<0.000000e+00> : vector<16x256xf32>
    %43 = tpu.matmul %40, %42, %cst_18 {dimension_numbers = #tpu.dot_dimension_numbers<[1], [0], [0], [1], [0, 0, 1, 1], [], []>} : vector<16x384xbf16>, vector<384x256xbf16>, vector<16x256xf32> -> vector<16x256xf32>
    %c0_19 = arith.constant 0 : index
    %c0_20 = arith.constant 0 : index
    %c0_21 = arith.constant 0 : index
    %44 = vector.load %arg8[%c0_19, %c0_20, %c0_21] : memref<1x1x256xf32, #tpu.memory_space<vmem>>, vector<1x1x256xf32>
    %45 = vector.shape_cast %44 : vector<1x1x256xf32> to vector<1x256xf32>
    %46 = vector.broadcast %45 : vector<1x256xf32> to vector<16x256xf32>
    %47 = arith.addf %43, %46 : vector<16x256xf32>
    %48 = arith.addf %47, %3 : vector<16x256xf32>
    %c0_22 = arith.constant 0 : index
    %c0_23 = arith.constant 0 : index
    %c0_24 = arith.constant 0 : index
    %49 = vector.load %arg9[%c0_22, %c0_23, %c0_24] : memref<1x1x256xf32, #tpu.memory_space<vmem>>, vector<1x1x256xf32>
    %50 = vector.shape_cast %49 : vector<1x1x256xf32> to vector<1x256xf32>
    %c0_25 = arith.constant 0 : index
    %c0_26 = arith.constant 0 : index
    %c0_27 = arith.constant 0 : index
    %51 = vector.load %arg10[%c0_25, %c0_26, %c0_27] : memref<1x1x256xf32, #tpu.memory_space<vmem>>, vector<1x1x256xf32>
    %52 = vector.shape_cast %51 : vector<1x1x256xf32> to vector<1x256xf32>
    %cst_28 = arith.constant dense<0.000000e+00> : vector<16xf32>
    %53 = vector.multi_reduction <add>, %48, %cst_28 [1] : vector<16x256xf32> to vector<16xf32>
    %54 = vector.shape_cast %53 : vector<16xf32> to vector<16x1xf32>
    %cst_29 = arith.constant 2.560000e+02 : f32
    %55 = vector.broadcast %cst_29 : f32 to vector<16x1xf32>
    %56 = arith.divf %54, %55 : vector<16x1xf32>
    %57 = vector.broadcast %56 : vector<16x1xf32> to vector<16x256xf32>
    %58 = arith.subf %48, %57 : vector<16x256xf32>
    %59 = arith.mulf %58, %58 : vector<16x256xf32>
    %cst_30 = arith.constant dense<0.000000e+00> : vector<16xf32>
    %60 = vector.multi_reduction <add>, %59, %cst_30 [1] : vector<16x256xf32> to vector<16xf32>
    %61 = vector.shape_cast %60 : vector<16xf32> to vector<16x1xf32>
    %cst_31 = arith.constant 0.00392156886 : f32
    %62 = vector.broadcast %cst_31 : f32 to vector<16x1xf32>
    %63 = arith.mulf %61, %62 : vector<16x1xf32>
    %64 = math.sqrt %63 : vector<16x1xf32>
    %cst_32 = arith.constant 1.000000e-03 : f32
    %65 = vector.broadcast %cst_32 : f32 to vector<16x1xf32>
    %66 = arith.addf %64, %65 : vector<16x1xf32>
    %cst_33 = arith.constant 1.000000e+00 : f32
    %67 = vector.broadcast %cst_33 : f32 to vector<16x1xf32>
    %68 = arith.divf %67, %66 : vector<16x1xf32>
    %69 = vector.broadcast %56 : vector<16x1xf32> to vector<16x256xf32>
    %70 = arith.subf %48, %69 : vector<16x256xf32>
    %71 = vector.broadcast %68 : vector<16x1xf32> to vector<16x256xf32>
    %72 = arith.mulf %70, %71 : vector<16x256xf32>
    %73 = vector.broadcast %50 : vector<1x256xf32> to vector<16x256xf32>
    %74 = arith.mulf %72, %73 : vector<16x256xf32>
    %75 = vector.broadcast %52 : vector<1x256xf32> to vector<16x256xf32>
    %76 = arith.addf %74, %75 : vector<16x256xf32>
    %77 = arith.truncf %76 : vector<16x256xf32> to vector<16x256xbf16>
    %c0_34 = arith.constant 0 : index
    %c0_35 = arith.constant 0 : index
    %c0_36 = arith.constant 0 : index
    %78 = vector.load %arg11[%c0_34, %c0_35, %c0_36] : memref<1x256x256xbf16, #tpu.memory_space<vmem>>, vector<1x256x256xbf16>
    %79 = vector.shape_cast %78 : vector<1x256x256xbf16> to vector<256x256xbf16>
    %cst_37 = arith.constant dense<0.000000e+00> : vector<16x256xf32>
    %80 = tpu.matmul %77, %79, %cst_37 {dimension_numbers = #tpu.dot_dimension_numbers<[1], [0], [0], [1], [0, 0, 1, 1], [], []>} : vector<16x256xbf16>, vector<256x256xbf16>, vector<16x256xf32> -> vector<16x256xf32>
    %c0_38 = arith.constant 0 : index
    %c0_39 = arith.constant 0 : index
    %c0_40 = arith.constant 0 : index
    %81 = vector.load %arg12[%c0_38, %c0_39, %c0_40] : memref<1x1x256xf32, #tpu.memory_space<vmem>>, vector<1x1x256xf32>
    %82 = vector.shape_cast %81 : vector<1x1x256xf32> to vector<1x256xf32>
    %83 = vector.broadcast %82 : vector<1x256xf32> to vector<16x256xf32>
    %84 = arith.addf %80, %83 : vector<16x256xf32>
    %cst_41 = arith.constant 0.000000e+00 : f32
    %85 = vector.broadcast %cst_41 : f32 to vector<16x256xf32>
    %86 = arith.maximumf %84, %85 : vector<16x256xf32>
    %87 = arith.truncf %86 : vector<16x256xf32> to vector<16x256xbf16>
    %c0_42 = arith.constant 0 : index
    %c0_43 = arith.constant 0 : index
    %c0_44 = arith.constant 0 : index
    %88 = vector.load %arg13[%c0_42, %c0_43, %c0_44] : memref<1x256x256xbf16, #tpu.memory_space<vmem>>, vector<1x256x256xbf16>
    %89 = vector.shape_cast %88 : vector<1x256x256xbf16> to vector<256x256xbf16>
    %cst_45 = arith.constant dense<0.000000e+00> : vector<16x256xf32>
    %90 = tpu.matmul %87, %89, %cst_45 {dimension_numbers = #tpu.dot_dimension_numbers<[1], [0], [0], [1], [0, 0, 1, 1], [], []>} : vector<16x256xbf16>, vector<256x256xbf16>, vector<16x256xf32> -> vector<16x256xf32>
    %c0_46 = arith.constant 0 : index
    %c0_47 = arith.constant 0 : index
    %c0_48 = arith.constant 0 : index
    %91 = vector.load %arg14[%c0_46, %c0_47, %c0_48] : memref<1x1x256xf32, #tpu.memory_space<vmem>>, vector<1x1x256xf32>
    %92 = vector.shape_cast %91 : vector<1x1x256xf32> to vector<1x256xf32>
    %93 = vector.broadcast %92 : vector<1x256xf32> to vector<16x256xf32>
    %94 = arith.addf %90, %93 : vector<16x256xf32>
    %95 = arith.addf %94, %76 : vector<16x256xf32>
    %c0_49 = arith.constant 0 : index
    %c0_50 = arith.constant 0 : index
    %c0_51 = arith.constant 0 : index
    %96 = vector.load %arg15[%c0_49, %c0_50, %c0_51] : memref<1x1x256xf32, #tpu.memory_space<vmem>>, vector<1x1x256xf32>
    %97 = vector.shape_cast %96 : vector<1x1x256xf32> to vector<1x256xf32>
    %c0_52 = arith.constant 0 : index
    %c0_53 = arith.constant 0 : index
    %c0_54 = arith.constant 0 : index
    %98 = vector.load %arg16[%c0_52, %c0_53, %c0_54] : memref<1x1x256xf32, #tpu.memory_space<vmem>>, vector<1x1x256xf32>
    %99 = vector.shape_cast %98 : vector<1x1x256xf32> to vector<1x256xf32>
    %cst_55 = arith.constant dense<0.000000e+00> : vector<16xf32>
    %100 = vector.multi_reduction <add>, %95, %cst_55 [1] : vector<16x256xf32> to vector<16xf32>
    %101 = vector.shape_cast %100 : vector<16xf32> to vector<16x1xf32>
    %cst_56 = arith.constant 2.560000e+02 : f32
    %102 = vector.broadcast %cst_56 : f32 to vector<16x1xf32>
    %103 = arith.divf %101, %102 : vector<16x1xf32>
    %104 = vector.broadcast %103 : vector<16x1xf32> to vector<16x256xf32>
    %105 = arith.subf %95, %104 : vector<16x256xf32>
    %106 = arith.mulf %105, %105 : vector<16x256xf32>
    %cst_57 = arith.constant dense<0.000000e+00> : vector<16xf32>
    %107 = vector.multi_reduction <add>, %106, %cst_57 [1] : vector<16x256xf32> to vector<16xf32>
    %108 = vector.shape_cast %107 : vector<16xf32> to vector<16x1xf32>
    %cst_58 = arith.constant 0.00392156886 : f32
    %109 = vector.broadcast %cst_58 : f32 to vector<16x1xf32>
    %110 = arith.mulf %108, %109 : vector<16x1xf32>
    %111 = math.sqrt %110 : vector<16x1xf32>
    %cst_59 = arith.constant 1.000000e-03 : f32
    %112 = vector.broadcast %cst_59 : f32 to vector<16x1xf32>
    %113 = arith.addf %111, %112 : vector<16x1xf32>
    %cst_60 = arith.constant 1.000000e+00 : f32
    %114 = vector.broadcast %cst_60 : f32 to vector<16x1xf32>
    %115 = arith.divf %114, %113 : vector<16x1xf32>
    %116 = vector.broadcast %103 : vector<16x1xf32> to vector<16x256xf32>
    %117 = arith.subf %95, %116 : vector<16x256xf32>
    %118 = vector.broadcast %115 : vector<16x1xf32> to vector<16x256xf32>
    %119 = arith.mulf %117, %118 : vector<16x256xf32>
    %120 = vector.broadcast %97 : vector<1x256xf32> to vector<16x256xf32>
    %121 = arith.mulf %119, %120 : vector<16x256xf32>
    %122 = vector.broadcast %99 : vector<1x256xf32> to vector<16x256xf32>
    %123 = arith.addf %121, %122 : vector<16x256xf32>
    %c0_61 = arith.constant 0 : index
    %c0_62 = arith.constant 0 : index
    %124 = vector.load %arg18[%c0_61, %c0_62] : memref<16x256xf32, #tpu.memory_space<vmem>>, vector<16x256xf32>
    tpu.vector_store %arg18[%c0_61, %c0_62], %123 {strides = array<i32>} : memref<16x256xf32, #tpu.memory_space<vmem>>, vector<16x256xf32>,
    %c1_i32 = arith.constant 1 : i32
    %125 = arith.cmpi eq, %arg0, %c1_i32 : i32
    %126 = arith.extui %125 : i1 to i32
    %c0_i32_63 = arith.constant 0 : i32
    %127 = arith.cmpi ne, %126, %c0_i32_63 : i32
    scf.if %127 {
      %c0_64 = arith.constant 0 : index
      %c0_65 = arith.constant 0 : index
      %128 = vector.load %arg3[%c0_64, %c0_65] : memref<16x256xf32, #tpu.memory_space<vmem>>, vector<16x256xf32>
      %129 = arith.addf %123, %128 : vector<16x256xf32>
      %c0_66 = arith.constant 0 : index
      %c0_67 = arith.constant 0 : index
      %130 = vector.load %arg17[%c0_66, %c0_67] : memref<16x256xf32, #tpu.memory_space<vmem>>, vector<16x256xf32>
      tpu.vector_store %arg17[%c0_66, %c0_67], %129 {strides = array<i32>} : memref<16x256xf32, #tpu.memory_space<vmem>>, vector<16x256xf32>,
    } else {
    }
    return
  }
  func.func @transform_0(%arg0: i32) -> (i32, i32) {
    %c0_i32 = arith.constant 0 : i32
    %c0_i32_0 = arith.constant 0 : i32
    %c0_i32_1 = arith.constant 0 : i32
    return %c0_i32, %c0_i32_0 : i32, i32
  }
  func.func @transform_1(%arg0: i32) -> (i32, i32) {
    %c0_i32 = arith.constant 0 : i32
    %c0_i32_0 = arith.constant 0 : i32
    %c0_i32_1 = arith.constant 0 : i32
    return %c0_i32, %c0_i32_0 : i32, i32
  }
  func.func @transform_2(%arg0: i32) -> (i32, i32) {
    %c0_i32 = arith.constant 0 : i32
    %c0_i32_0 = arith.constant 0 : i32
    %c0_i32_1 = arith.constant 0 : i32
    return %c0_i32, %c0_i32_0 : i32, i32
  }
  func.func @transform_3(%arg0: i32) -> (i32, i32) {
    %c0_i32 = arith.constant 0 : i32
    %c0_i32_0 = arith.constant 0 : i32
    %c0_i32_1 = arith.constant 0 : i32
    return %c0_i32, %c0_i32_0 : i32, i32
  }
  func.func @transform_4(%arg0: i32) -> (i32, i32) {
    %c0_i32 = arith.constant 0 : i32
    %c0_i32_0 = arith.constant 0 : i32
    %c0_i32_1 = arith.constant 0 : i32
    return %c0_i32, %c0_i32_0 : i32, i32
  }
  func.func @transform_5(%arg0: i32) -> (i32, i32, i32) {
    %c0_i32 = arith.constant 0 : i32
    %c0_i32_0 = arith.constant 0 : i32
    %c0_i32_1 = arith.constant 0 : i32
    return %arg0, %c0_i32, %c0_i32_0 : i32, i32, i32
  }
  func.func @transform_6(%arg0: i32) -> (i32, i32, i32) {
    %c0_i32 = arith.constant 0 : i32
    %c0_i32_0 = arith.constant 0 : i32
    %c0_i32_1 = arith.constant 0 : i32
    return %arg0, %c0_i32, %c0_i32_0 : i32, i32, i32
  }
  func.func @transform_7(%arg0: i32) -> (i32, i32, i32) {
    %c0_i32 = arith.constant 0 : i32
    %c0_i32_0 = arith.constant 0 : i32
    %c0_i32_1 = arith.constant 0 : i32
    return %arg0, %c0_i32, %c0_i32_0 : i32, i32, i32
  }
  func.func @transform_8(%arg0: i32) -> (i32, i32, i32) {
    %c0_i32 = arith.constant 0 : i32
    %c0_i32_0 = arith.constant 0 : i32
    %c0_i32_1 = arith.constant 0 : i32
    return %arg0, %c0_i32, %c0_i32_0 : i32, i32, i32
  }
  func.func @transform_9(%arg0: i32) -> (i32, i32, i32) {
    %c0_i32 = arith.constant 0 : i32
    %c0_i32_0 = arith.constant 0 : i32
    %c0_i32_1 = arith.constant 0 : i32
    return %arg0, %c0_i32, %c0_i32_0 : i32, i32, i32
  }
  func.func @transform_10(%arg0: i32) -> (i32, i32, i32) {
    %c0_i32 = arith.constant 0 : i32
    %c0_i32_0 = arith.constant 0 : i32
    %c0_i32_1 = arith.constant 0 : i32
    return %arg0, %c0_i32, %c0_i32_0 : i32, i32, i32
  }
  func.func @transform_11(%arg0: i32) -> (i32, i32, i32) {
    %c0_i32 = arith.constant 0 : i32
    %c0_i32_0 = arith.constant 0 : i32
    %c0_i32_1 = arith.constant 0 : i32
    return %arg0, %c0_i32, %c0_i32_0 : i32, i32, i32
  }
  func.func @transform_12(%arg0: i32) -> (i32, i32, i32) {
    %c0_i32 = arith.constant 0 : i32
    %c0_i32_0 = arith.constant 0 : i32
    %c0_i32_1 = arith.constant 0 : i32
    return %arg0, %c0_i32, %c0_i32_0 : i32, i32, i32
  }
  func.func @transform_13(%arg0: i32) -> (i32, i32, i32) {
    %c0_i32 = arith.constant 0 : i32
    %c0_i32_0 = arith.constant 0 : i32
    %c0_i32_1 = arith.constant 0 : i32
    return %arg0, %c0_i32, %c0_i32_0 : i32, i32, i32
  }
  func.func @transform_14(%arg0: i32) -> (i32, i32, i32) {
    %c0_i32 = arith.constant 0 : i32
    %c0_i32_0 = arith.constant 0 : i32
    %c0_i32_1 = arith.constant 0 : i32
    return %arg0, %c0_i32, %c0_i32_0 : i32, i32, i32
  }
  func.func @transform_15(%arg0: i32) -> (i32, i32, i32) {
    %c0_i32 = arith.constant 0 : i32
    %c0_i32_0 = arith.constant 0 : i32
    %c0_i32_1 = arith.constant 0 : i32
    return %arg0, %c0_i32, %c0_i32_0 : i32, i32, i32
  }
  func.func @transform_16(%arg0: i32) -> (i32, i32) {
    %c0_i32 = arith.constant 0 : i32
    %c0_i32_0 = arith.constant 0 : i32
    %c0_i32_1 = arith.constant 0 : i32
    return %c0_i32, %c0_i32_0 : i32, i32
  }
}

</mosaic_0001>

<llo_original>
// kernel: tpu_custom_call.1
$region0: #{tpu_custom_call.1}
  #allocation0 [shape = 'u32[]', space=smem, size = 0x4, offset = 0x4, fixed_abs, tag = 'smem constant byte address 0x4 - core index']
  #allocation1 [shape = 'u32[72,128]{1,0:T(1,128)}', space=vmem, size = 0x9000, scoped, tag = 'internal scratch']
  #allocation2 [shape = 'f32[16,256]{1,0:T(8,128)}', space=vmem, size = 0x4000, scoped, tag = 'scratch operand']
  %s0 = inlined_call_operand.hbm [shape: f32[16,16], index: 0, kind: input, shape index: {}]
  %s1 = inlined_call_operand.hbm [shape: f32[16,256], index: 1, kind: input, shape index: {}]
  %s2 = inlined_call_operand.hbm [shape: f32[16,256], index: 2, kind: input, shape index: {}]
  %s3 = inlined_call_operand.vmem [shape: f32[48,16], index: 3, kind: input, shape index: {}]
  %s4 = inlined_call_operand.hbm [shape: bf16[16,256], index: 4, kind: input, shape index: {}]
  %s5 = inlined_call_operand.hbm [shape: bf16[2,256,1152], index: 5, kind: input, shape index: {}]
  %s6 = inlined_call_operand.hbm [shape: bf16[2,384,256], index: 6, kind: input, shape index: {}]
  %s7 = inlined_call_operand.hbm [shape: f32[2,1,256], index: 7, kind: input, shape index: {}]
  %s8 = inlined_call_operand.hbm [shape: f32[2,1,256], index: 8, kind: input, shape index: {}]
  %s9 = inlined_call_operand.hbm [shape: f32[2,1,256], index: 9, kind: input, shape index: {}]
  %s10 = inlined_call_operand.hbm [shape: bf16[2,256,256], index: 10, kind: input, shape index: {}]
  %s11 = inlined_call_operand.hbm [shape: f32[2,1,256], index: 11, kind: input, shape index: {}]
  %s12 = inlined_call_operand.hbm [shape: bf16[2,256,256], index: 12, kind: input, shape index: {}]
  %s13 = inlined_call_operand.hbm [shape: f32[2,1,256], index: 13, kind: input, shape index: {}]
  %s14 = inlined_call_operand.hbm [shape: f32[2,1,256], index: 14, kind: input, shape index: {}]
  %s15 = inlined_call_operand.hbm [shape: f32[2,1,256], index: 15, kind: input, shape index: {}]
  %s16 = inlined_call_operand.hbm [shape: f32[16,256], index: 16, kind: output, shape index: {}]
  %s17 = sld [smem:[#allocation0]]
  $region165: #{tpu_custom_call.1} parent=0
    _
  %s19 = ssub.s32 1, %s17
  %s20 = scalar_select 0, %s19, %s17
  $region1: #{tpu_custom_call.1} parent=0
    #allocation3 [shape = 'u8[8192]{0}', space=vmem, size = 0x2000, scoped, tag = 'input window, operand 0, single buffered']
    #allocation4 [shape = 's32[2]{0}', space=sflag, size = 0x8, scoped, tag = 'scoped memory for tpu_custom_call.1']
    #allocation5 [shape = 's32[2]{0}', space=sflag, size = 0x8, scoped, tag = 'scoped memory for tpu_custom_call.1']
    #allocation6 [shape = 'u8[16384]{0}', space=vmem, size = 0x4000, scoped, tag = 'input window, operand 1, single buffered']
    #allocation7 [shape = 's32[1]{0}', space=sflag, size = 0x4, scoped, tag = 'scoped memory for tpu_custom_call.1']
    #allocation8 [shape = 'u8[16384]{0}', space=vmem, size = 0x4000, scoped, tag = 'input window, operand 2, single buffered']
    #allocation9 [shape = 'u8[8192]{0}', space=vmem, size = 0x2000, scoped, tag = 'input window, operand 4, single buffered']
    #allocation10 [shape = 's32[1]{0}', space=sflag, size = 0x4, scoped, tag = 'scoped memory for tpu_custom_call.1']
    #allocation11 [shape = 'u8[1179648]{0}', space=vmem, size = 0x120000, scoped, tag = 'input window, operand 5']
    #allocation12 [shape = 'u8[393216]{0}', space=vmem, size = 0x60000, scoped, tag = 'input window, operand 6']
    #allocation13 [shape = 'u8[2048]{0}', space=vmem, size = 0x800, scoped, tag = 'input window, operand 7']
    #allocation14 [shape = 'u8[2048]{0}', space=vmem, size = 0x800, scoped, tag = 'input window, operand 8']
    #allocation15 [shape = 'u8[2048]{0}', space=vmem, size = 0x800, scoped, tag = 'input window, operand 9']
    #allocation16 [shape = 'u8[262144]{0}', space=vmem, size = 0x40000, scoped, tag = 'input window, operand 10']
    #allocation17 [shape = 'u8[2048]{0}', space=vmem, size = 0x800, scoped, tag = 'input window, operand 11']
    #allocation18 [shape = 'u8[262144]{0}', space=vmem, size = 0x40000, scoped, tag = 'input window, operand 12']
    #allocation19 [shape = 'u8[2048]{0}', space=vmem, size = 0x800, scoped, tag = 'input window, operand 13']
    #allocation20 [shape = 'u8[2048]{0}', space=vmem, size = 0x800, scoped, tag = 'input window, operand 14']
    #allocation21 [shape = 'u8[2048]{0}', space=vmem, size = 0x800, scoped, tag = 'input window, operand 15']
    #allocation22 [shape = 'u8[16384]{0}', space=vmem, size = 0x4000, scoped, tag = 'output window, operand 0, single buffered']
    %21 = vsyncpa [#allocation4], 0
    %22 = vsyncpa [#allocation7], 0
    %23 = vsyncpa [#allocation10], 0
    %24 = vsyncpa [#allocation5], 0
    loop: start=0, step=1, limit=4
    $region2: #{tpu_custom_call.1} parent=1 // loop_pre_header
      _
    $region3: #{tpu_custom_call.1} parent=1 // loop_header
      %s26 = sphi 0, %s30
      %p27 = scmp.ge.s32.totalorder %s26, 4
      %s34 = sphi 0, %s34
      %s36 = sphi 0, %s34
      %s37 = sphi 0, %s36
      %s51 = sphi 0, %s37
      %s55 = sphi 0, %s55
      %s57 = sphi 0, %s55
      %s58 = sphi 0, %s57
      %s72 = sphi 0, %s58
      %s76 = sphi 0, %s76
      %s78 = sphi 0, %s76
      %s79 = sphi 0, %s78
      %s93 = sphi 0, %s79
      %s97 = sphi 0, %s97
      %s99 = sphi 0, %s97
      %s100 = sphi 0, %s99
      %s114 = sphi 0, %s100
      %s118 = sphi 0, %s118
      %s120 = sphi 0, %s118
      %s121 = sphi 0, %s120
      %s135 = sphi 0, %s121
      %s141 = sphi 0, %s143
      %s144 = sphi 0, %s141
      %s145 = sphi 0, %s144
      %s161 = sphi 0, %s145
      %s167 = sphi 0, %s169
      %s170 = sphi 0, %s167
      %s171 = sphi 0, %s170
      %s187 = sphi 0, %s171
      %s193 = sphi 0, %s195
      %s196 = sphi 0, %s193
      %s197 = sphi 0, %s196
      %s213 = sphi 0, %s197
      %s219 = sphi 0, %s221
      %s222 = sphi 0, %s219
      %s223 = sphi 0, %s222
      %s239 = sphi 0, %s223
      %s245 = sphi 0, %s247
      %s248 = sphi 0, %s245
      %s249 = sphi 0, %s248
      %s265 = sphi 0, %s249
      %s271 = sphi 0, %s273
      %s274 = sphi 0, %s271
      %s275 = sphi 0, %s274
      %s291 = sphi 0, %s275
      %s297 = sphi 0, %s299
      %s300 = sphi 0, %s297
      %s301 = sphi 0, %s300
      %s317 = sphi 0, %s301
      %s323 = sphi 0, %s325
      %s326 = sphi 0, %s323
      %s327 = sphi 0, %s326
      %s343 = sphi 0, %s327
      %s349 = sphi 0, %s351
      %s352 = sphi 0, %s349
      %s353 = sphi 0, %s352
      %s369 = sphi 0, %s353
      %s375 = sphi 0, %s377
      %s378 = sphi 0, %s375
      %s379 = sphi 0, %s378
      %s395 = sphi 0, %s379
      %s401 = sphi 0, %s403
      %s404 = sphi 0, %s401
      %s405 = sphi 0, %s404
      %s421 = sphi 0, %s405
      %s425 = sphi 0, %s425
      %s427 = sphi 0, %s425
      %s428 = sphi 0, %s427
      %s442 = sphi 0, %s428
    $region4: #{tpu_custom_call.1} parent=1 // loop_header_branch
      %29 = sbr.rel (%p27) target = $region8
    $region5: #{tpu_custom_call.1} parent=1 // loop_body
      %s31 = ssub.s32 %s26, 1
      %s32 = ssub.s32 %s26, 2
      %s33 = sadd.s32 %s26, 1
      %s35 = sadd.s32 %s34, 1
      %p38 = scmp.eq.s32.totalorder %s26, 1
      %p39 = scmp.ne.s32.totalorder %s34, %s36
      %p40 = scmp.eq.s32.totalorder %s26, 0
      %p41 = por %p39, %p40
      %p42 = scmp.ne.s32.totalorder %s34, %s36
      %p43 = scmp.eq.s32.totalorder %s31, 1
      %p44 = por %p42, %p43
      %p45 = scmp.ne.s32.totalorder %s36, %s37
      %p46 = scmp.eq.s32.totalorder %s31, 0
      %p47 = por %p45, %p46
      %p48 = scmp.ne.s32.totalorder %s36, %s37
      %p49 = scmp.eq.s32.totalorder %s32, 1
      %p50 = por %p48, %p49
      %p52 = scmp.ne.s32.totalorder %s37, %s51
      %p53 = scmp.eq.s32.totalorder %s32, 0
      %p54 = por %p52, %p53
      %s56 = sadd.s32 %s55, 1
      %p59 = scmp.eq.s32.totalorder %s26, 1
      %p60 = scmp.ne.s32.totalorder %s55, %s57
      %p61 = scmp.eq.s32.totalorder %s26, 0
      %p62 = por %p60, %p61
      %p63 = scmp.ne.s32.totalorder %s55, %s57
      %p64 = scmp.eq.s32.totalorder %s31, 1
      %p65 = por %p63, %p64
      %p66 = scmp.ne.s32.totalorder %s57, %s58
      %p67 = scmp.eq.s32.totalorder %s31, 0
      %p68 = por %p66, %p67
      %p69 = scmp.ne.s32.totalorder %s57, %s58
      %p70 = scmp.eq.s32.totalorder %s32, 1
      %p71 = por %p69, %p70
      %p73 = scmp.ne.s32.totalorder %s58, %s72
      %p74 = scmp.eq.s32.totalorder %s32, 0
      %p75 = por %p73, %p74
      %s77 = sadd.s32 %s76, 1
      %p80 = scmp.eq.s32.totalorder %s26, 1
      %p81 = scmp.ne.s32.totalorder %s76, %s78
      %p82 = scmp.eq.s32.totalorder %s26, 0
      %p83 = por %p81, %p82
      %p84 = scmp.ne.s32.totalorder %s76, %s78
      %p85 = scmp.eq.s32.totalorder %s31, 1
      %p86 = por %p84, %p85
      %p87 = scmp.ne.s32.totalorder %s78, %s79
      %p88 = scmp.eq.s32.totalorder %s31, 0
      %p89 = por %p87, %p88
      %p90 = scmp.ne.s32.totalorder %s78, %s79
      %p91 = scmp.eq.s32.totalorder %s32, 1
      %p92 = por %p90, %p91
      %p94 = scmp.ne.s32.totalorder %s79, %s93
      %p95 = scmp.eq.s32.totalorder %s32, 0
      %p96 = por %p94, %p95
      %s98 = sadd.s32 %s97, 1
      %p101 = scmp.eq.s32.totalorder %s26, 1
      %p102 = scmp.ne.s32.totalorder %s97, %s99
      %p103 = scmp.eq.s32.totalorder %s26, 0
      %p104 = por %p102, %p103
      %p105 = scmp.ne.s32.totalorder %s97, %s99
      %p106 = scmp.eq.s32.totalorder %s31, 1
      %p107 = por %p105, %p106
      %p108 = scmp.ne.s32.totalorder %s99, %s100
      %p109 = scmp.eq.s32.totalorder %s31, 0
      %p110 = por %p108, %p109
      %p111 = scmp.ne.s32.totalorder %s99, %s100
      %p112 = scmp.eq.s32.totalorder %s32, 1
      %p113 = por %p111, %p112
      %p115 = scmp.ne.s32.totalorder %s100, %s114
      %p116 = scmp.eq.s32.totalorder %s32, 0
      %p117 = por %p115, %p116
      %s119 = sadd.s32 %s118, 1
      %p122 = scmp.eq.s32.totalorder %s26, 1
      %p123 = scmp.ne.s32.totalorder %s118, %s120
      %p124 = scmp.eq.s32.totalorder %s26, 0
      %p125 = por %p123, %p124
      %p126 = scmp.ne.s32.totalorder %s118, %s120
      %p127 = scmp.eq.s32.totalorder %s31, 1
      %p128 = por %p126, %p127
      %p129 = scmp.ne.s32.totalorder %s120, %s121
      %p130 = scmp.eq.s32.totalorder %s31, 0
      %p131 = por %p129, %p130
      %p132 = scmp.ne.s32.totalorder %s120, %s121
      %p133 = scmp.eq.s32.totalorder %s32, 1
      %p134 = por %p132, %p133
      %p136 = scmp.ne.s32.totalorder %s121, %s135
      %p137 = scmp.eq.s32.totalorder %s32, 0
      %p138 = por %p136, %p137
      %s139 = ssub.s32 %s26, %s33
      %p140 = scmp.eq.s32.totalorder %s139, 0
      %s142 = sadd.s32 %s141, 1
      %s143 = scalar_select %p140, %s141, %s142
      %p146 = pneg %p140
      %p147 = scmp.eq.s32.totalorder %s26, 1
      %p148 = por %p146, %p147
      %p149 = scmp.ne.s32.totalorder %s141, %s144
      %p150 = scmp.eq.s32.totalorder %s26, 0
      %p151 = por %p149, %p150
      %p152 = scmp.ne.s32.totalorder %s141, %s144
      %p153 = scmp.eq.s32.totalorder %s31, 1
      %p154 = por %p152, %p153
      %p155 = scmp.ne.s32.totalorder %s144, %s145
      %p156 = scmp.eq.s32.totalorder %s31, 0
      %p157 = por %p155, %p156
      %p158 = scmp.ne.s32.totalorder %s144, %s145
      %p159 = scmp.eq.s32.totalorder %s32, 1
      %p160 = por %p158, %p159
      %p162 = scmp.ne.s32.totalorder %s145, %s161
      %p163 = scmp.eq.s32.totalorder %s32, 0
      %p164 = por %p162, %p163
      %s165 = ssub.s32 %s26, %s33
      %p166 = scmp.eq.s32.totalorder %s165, 0
      %s168 = sadd.s32 %s167, 1
      %s169 = scalar_select %p166, %s167, %s168
      %p172 = pneg %p166
      %p173 = scmp.eq.s32.totalorder %s26, 1
      %p174 = por %p172, %p173
      %p175 = scmp.ne.s32.totalorder %s167, %s170
      %p176 = scmp.eq.s32.totalorder %s26, 0
      %p177 = por %p175, %p176
      %p178 = scmp.ne.s32.totalorder %s167, %s170
      %p179 = scmp.eq.s32.totalorder %s31, 1
      %p180 = por %p178, %p179
      %p181 = scmp.ne.s32.totalorder %s170, %s171
      %p182 = scmp.eq.s32.totalorder %s31, 0
      %p183 = por %p181, %p182
      %p184 = scmp.ne.s32.totalorder %s170, %s171
      %p185 = scmp.eq.s32.totalorder %s32, 1
      %p186 = por %p184, %p185
      %p188 = scmp.ne.s32.totalorder %s171, %s187
      %p189 = scmp.eq.s32.totalorder %s32, 0
      %p190 = por %p188, %p189
      %s191 = ssub.s32 %s26, %s33
      %p192 = scmp.eq.s32.totalorder %s191, 0
      %s194 = sadd.s32 %s193, 1
      %s195 = scalar_select %p192, %s193, %s194
      %p198 = pneg %p192
      %p199 = scmp.eq.s32.totalorder %s26, 1
      %p200 = por %p198, %p199
      %p201 = scmp.ne.s32.totalorder %s193, %s196
      %p202 = scmp.eq.s32.totalorder %s26, 0
      %p203 = por %p201, %p202
      %p204 = scmp.ne.s32.totalorder %s193, %s196
      %p205 = scmp.eq.s32.totalorder %s31, 1
      %p206 = por %p204, %p205
      %p207 = scmp.ne.s32.totalorder %s196, %s197
      %p208 = scmp.eq.s32.totalorder %s31, 0
      %p209 = por %p207, %p208
      %p210 = scmp.ne.s32.totalorder %s196, %s197
      %p211 = scmp.eq.s32.totalorder %s32, 1
      %p212 = por %p210, %p211
      %p214 = scmp.ne.s32.totalorder %s197, %s213
      %p215 = scmp.eq.s32.totalorder %s32, 0
      %p216 = por %p214, %p215
      %s217 = ssub.s32 %s26, %s33
      %p218 = scmp.eq.s32.totalorder %s217, 0
      %s220 = sadd.s32 %s219, 1
      %s221 = scalar_select %p218, %s219, %s220
      %p224 = pneg %p218
      %p225 = scmp.eq.s32.totalorder %s26, 1
      %p226 = por %p224, %p225
      %p227 = scmp.ne.s32.totalorder %s219, %s222
      %p228 = scmp.eq.s32.totalorder %s26, 0
      %p229 = por %p227, %p228
      %p230 = scmp.ne.s32.totalorder %s219, %s222
      %p231 = scmp.eq.s32.totalorder %s31, 1
      %p232 = por %p230, %p231
      %p233 = scmp.ne.s32.totalorder %s222, %s223
      %p234 = scmp.eq.s32.totalorder %s31, 0
      %p235 = por %p233, %p234
      %p236 = scmp.ne.s32.totalorder %s222, %s223
      %p237 = scmp.eq.s32.totalorder %s32, 1
      %p238 = por %p236, %p237
      %p240 = scmp.ne.s32.totalorder %s223, %s239
      %p241 = scmp.eq.s32.totalorder %s32, 0
      %p242 = por %p240, %p241
      %s243 = ssub.s32 %s26, %s33
      %p244 = scmp.eq.s32.totalorder %s243, 0
      %s246 = sadd.s32 %s245, 1
      %s247 = scalar_select %p244, %s245, %s246
      %p250 = pneg %p244
      %p251 = scmp.eq.s32.totalorder %s26, 1
      %p252 = por %p250, %p251
      %p253 = scmp.ne.s32.totalorder %s245, %s248
      %p254 = scmp.eq.s32.totalorder %s26, 0
      %p255 = por %p253, %p254
      %p256 = scmp.ne.s32.totalorder %s245, %s248
      %p257 = scmp.eq.s32.totalorder %s31, 1
      %p258 = por %p256, %p257
      %p259 = scmp.ne.s32.totalorder %s248, %s249
      %p260 = scmp.eq.s32.totalorder %s31, 0
      %p261 = por %p259, %p260
      %p262 = scmp.ne.s32.totalorder %s248, %s249
      %p263 = scmp.eq.s32.totalorder %s32, 1
      %p264 = por %p262, %p263
      %p266 = scmp.ne.s32.totalorder %s249, %s265
      %p267 = scmp.eq.s32.totalorder %s32, 0
      %p268 = por %p266, %p267
      %s269 = ssub.s32 %s26, %s33
      %p270 = scmp.eq.s32.totalorder %s269, 0
      %s272 = sadd.s32 %s271, 1
      %s273 = scalar_select %p270, %s271, %s272
      %p276 = pneg %p270
      %p277 = scmp.eq.s32.totalorder %s26, 1
      %p278 = por %p276, %p277
      %p279 = scmp.ne.s32.totalorder %s271, %s274
      %p280 = scmp.eq.s32.totalorder %s26, 0
      %p281 = por %p279, %p280
      %p282 = scmp.ne.s32.totalorder %s271, %s274
      %p283 = scmp.eq.s32.totalorder %s31, 1
      %p284 = por %p282, %p283
      %p285 = scmp.ne.s32.totalorder %s274, %s275
      %p286 = scmp.eq.s32.totalorder %s31, 0
      %p287 = por %p285, %p286
      %p288 = scmp.ne.s32.totalorder %s274, %s275
      %p289 = scmp.eq.s32.totalorder %s32, 1
      %p290 = por %p288, %p289
      %p292 = scmp.ne.s32.totalorder %s275, %s291
      %p293 = scmp.eq.s32.totalorder %s32, 0
      %p294 = por %p292, %p293
      %s295 = ssub.s32 %s26, %s33
      %p296 = scmp.eq.s32.totalorder %s295, 0
      %s298 = sadd.s32 %s297, 1
      %s299 = scalar_select %p296, %s297, %s298
      %p302 = pneg %p296
      %p303 = scmp.eq.s32.totalorder %s26, 1
      %p304 = por %p302, %p303
      %p305 = scmp.ne.s32.totalorder %s297, %s300
      %p306 = scmp.eq.s32.totalorder %s26, 0
      %p307 = por %p305, %p306
      %p308 = scmp.ne.s32.totalorder %s297, %s300
      %p309 = scmp.eq.s32.totalorder %s31, 1
      %p310 = por %p308, %p309
      %p311 = scmp.ne.s32.totalorder %s300, %s301
      %p312 = scmp.eq.s32.totalorder %s31, 0
      %p313 = por %p311, %p312
      %p314 = scmp.ne.s32.totalorder %s300, %s301
      %p315 = scmp.eq.s32.totalorder %s32, 1
      %p316 = por %p314, %p315
      %p318 = scmp.ne.s32.totalorder %s301, %s317
      %p319 = scmp.eq.s32.totalorder %s32, 0
      %p320 = por %p318, %p319
      %s321 = ssub.s32 %s26, %s33
      %p322 = scmp.eq.s32.totalorder %s321, 0
      %s324 = sadd.s32 %s323, 1
      %s325 = scalar_select %p322, %s323, %s324
      %p328 = pneg %p322
      %p329 = scmp.eq.s32.totalorder %s26, 1
      %p330 = por %p328, %p329
      %p331 = scmp.ne.s32.totalorder %s323, %s326
      %p332 = scmp.eq.s32.totalorder %s26, 0
      %p333 = por %p331, %p332
      %p334 = scmp.ne.s32.totalorder %s323, %s326
      %p335 = scmp.eq.s32.totalorder %s31, 1
      %p336 = por %p334, %p335
      %p337 = scmp.ne.s32.totalorder %s326, %s327
      %p338 = scmp.eq.s32.totalorder %s31, 0
      %p339 = por %p337, %p338
      %p340 = scmp.ne.s32.totalorder %s326, %s327
      %p341 = scmp.eq.s32.totalorder %s32, 1
      %p342 = por %p340, %p341
      %p344 = scmp.ne.s32.totalorder %s327, %s343
      %p345 = scmp.eq.s32.totalorder %s32, 0
      %p346 = por %p344, %p345
      %s347 = ssub.s32 %s26, %s33
      %p348 = scmp.eq.s32.totalorder %s347, 0
      %s350 = sadd.s32 %s349, 1
      %s351 = scalar_select %p348, %s349, %s350
      %p354 = pneg %p348
      %p355 = scmp.eq.s32.totalorder %s26, 1
      %p356 = por %p354, %p355
      %p357 = scmp.ne.s32.totalorder %s349, %s352
      %p358 = scmp.eq.s32.totalorder %s26, 0
      %p359 = por %p357, %p358
      %p360 = scmp.ne.s32.totalorder %s349, %s352
      %p361 = scmp.eq.s32.totalorder %s31, 1
      %p362 = por %p360, %p361
      %p363 = scmp.ne.s32.totalorder %s352, %s353
      %p364 = scmp.eq.s32.totalorder %s31, 0
      %p365 = por %p363, %p364
      %p366 = scmp.ne.s32.totalorder %s352, %s353
      %p367 = scmp.eq.s32.totalorder %s32, 1
      %p368 = por %p366, %p367
      %p370 = scmp.ne.s32.totalorder %s353, %s369
      %p371 = scmp.eq.s32.totalorder %s32, 0
      %p372 = por %p370, %p371
      %s373 = ssub.s32 %s26, %s33
      %p374 = scmp.eq.s32.totalorder %s373, 0
      %s376 = sadd.s32 %s375, 1
      %s377 = scalar_select %p374, %s375, %s376
      %p380 = pneg %p374
      %p381 = scmp.eq.s32.totalorder %s26, 1
      %p382 = por %p380, %p381
      %p383 = scmp.ne.s32.totalorder %s375, %s378
      %p384 = scmp.eq.s32.totalorder %s26, 0
      %p385 = por %p383, %p384
      %p386 = scmp.ne.s32.totalorder %s375, %s378
      %p387 = scmp.eq.s32.totalorder %s31, 1
      %p388 = por %p386, %p387
      %p389 = scmp.ne.s32.totalorder %s378, %s379
      %p390 = scmp.eq.s32.totalorder %s31, 0
      %p391 = por %p389, %p390
      %p392 = scmp.ne.s32.totalorder %s378, %s379
      %p393 = scmp.eq.s32.totalorder %s32, 1
      %p394 = por %p392, %p393
      %p396 = scmp.ne.s32.totalorder %s379, %s395
      %p397 = scmp.eq.s32.totalorder %s32, 0
      %p398 = por %p396, %p397
      %s399 = ssub.s32 %s26, %s33
      %p400 = scmp.eq.s32.totalorder %s399, 0
      %s402 = sadd.s32 %s401, 1
      %s403 = scalar_select %p400, %s401, %s402
      %p406 = pneg %p400
      %p407 = scmp.eq.s32.totalorder %s26, 1
      %p408 = por %p406, %p407
      %p409 = scmp.ne.s32.totalorder %s401, %s404
      %p410 = scmp.eq.s32.totalorder %s26, 0
      %p411 = por %p409, %p410
      %p412 = scmp.ne.s32.totalorder %s401, %s404
      %p413 = scmp.eq.s32.totalorder %s31, 1
      %p414 = por %p412, %p413
      %p415 = scmp.ne.s32.totalorder %s404, %s405
      %p416 = scmp.eq.s32.totalorder %s31, 0
      %p417 = por %p415, %p416
      %p418 = scmp.ne.s32.totalorder %s404, %s405
      %p419 = scmp.eq.s32.totalorder %s32, 1
      %p420 = por %p418, %p419
      %p422 = scmp.ne.s32.totalorder %s405, %s421
      %p423 = scmp.eq.s32.totalorder %s32, 0
      %p424 = por %p422, %p423
      %s426 = sadd.s32 %s425, 1
      %p429 = scmp.eq.s32.totalorder %s26, 1
      %p430 = scmp.ne.s32.totalorder %s425, %s427
      %p431 = scmp.eq.s32.totalorder %s26, 0
      %p432 = por %p430, %p431
      %p433 = scmp.ne.s32.totalorder %s425, %s427
      %p434 = scmp.eq.s32.totalorder %s31, 1
      %p435 = por %p433, %p434
      %p436 = scmp.ne.s32.totalorder %s427, %s428
      %p437 = scmp.eq.s32.totalorder %s31, 0
      %p438 = por %p436, %p437
      %p439 = scmp.ne.s32.totalorder %s427, %s428
      %p440 = scmp.eq.s32.totalorder %s32, 1
      %p441 = por %p439, %p440
      %p443 = scmp.ne.s32.totalorder %s428, %s442
      %p444 = scmp.eq.s32.totalorder %s32, 0
      %p445 = por %p443, %p444
      %p446 = scmp.le.s32.totalorder 1, %s26
      %p447 = scmp.lt.s32.totalorder %s26, 3
      %p448 = pnand %p446, %p447
      %p449 = pneg %p448
      // Predicated region
      $region9: #{tpu_custom_call.1} parent=5 // pred_check
        _
      $region10: #{tpu_custom_call.1} parent=5 // pred_check_branch
        %451 = sbr.rel (%p448) target = $region12
      $region11: #{tpu_custom_call.1} parent=5 // pred_region
        %s452 = ssub.s32 %s26, 1
        // Predicated region
        $region13: #{tpu_custom_call.1} parent=11 // pred_check
          %p453 = pneg %p47
        $region14: #{tpu_custom_call.1} parent=11 // pred_check_branch
          %455 = sbr.rel (%p453) target = $region16
        $region15: #{tpu_custom_call.1} parent=11 // pred_region
          %457 = vsyncadd [#allocation4], 0
          %s458 = sshll.u32 %s0, 4
          %s459 = int_to_ptr.hbm [resolvable:$true] %s458
          %s460 = sshll.u32 [#allocation3], 4
          %s461 = int_to_ptr.vmem [resolvable:$true] %s460
          %466 = dma.hbm_to_vmem [thread:$0]  %s459, 256, %s461, [#allocation4], 128, 128, 8
        $region16: #{tpu_custom_call.1} parent=11 // pred_fallthru
          _
        // Predicated region
        $region17: #{tpu_custom_call.1} parent=11 // pred_check
          %p467 = pneg %p68
        $region18: #{tpu_custom_call.1} parent=11 // pred_check_branch
          %469 = sbr.rel (%p467) target = $region20
        $region19: #{tpu_custom_call.1} parent=11 // pred_region
          %471 = vsyncadd [#allocation7], 0
          %s472 = sshll.u32 %s1, 4
          %s473 = int_to_ptr.hbm [resolvable:$true] %s472
          %s474 = sshll.u32 [#allocation6], 4
          %s475 = int_to_ptr.vmem [resolvable:$true] %s474
          %480 = dma.hbm_to_vmem [thread:$0]  %s473, 512, %s475, [#allocation7], 256, 256, 16
        $region20: #{tpu_custom_call.1} parent=11 // pred_fallthru
          _
        // Predicated region
        $region21: #{tpu_custom_call.1} parent=11 // pred_check
          %p481 = pneg %p89
        $region22: #{tpu_custom_call.1} parent=11 // pred_check_branch
          %483 = sbr.rel (%p481) target = $region24
        $region23: #{tpu_custom_call.1} parent=11 // pred_region
          %485 = vsyncadd [#allocation7], 0
          %s486 = sshll.u32 %s2, 4
          %s487 = int_to_ptr.hbm [resolvable:$true] %s486
          %s488 = sshll.u32 [#allocation8], 4
          %s489 = int_to_ptr.vmem [resolvable:$true] %s488
          %494 = dma.hbm_to_vmem [thread:$0]  %s487, 512, %s489, [#allocation7], 256, 256, 16
        $region24: #{tpu_custom_call.1} parent=11 // pred_fallthru
          _
        // Predicated region
        $region25: #{tpu_custom_call.1} parent=11 // pred_check
          %p495 = pneg %p110
        $region26: #{tpu_custom_call.1} parent=11 // pred_check_branch
          %497 = sbr.rel (%p495) target = $region28
        $region27: #{tpu_custom_call.1} parent=11 // pred_region
          _
        $region28: #{tpu_custom_call.1} parent=11 // pred_fallthru
          _
        // Predicated region
        $region29: #{tpu_custom_call.1} parent=11 // pred_check
          %p498 = pneg %p131
        $region30: #{tpu_custom_call.1} parent=11 // pred_check_branch
          %500 = sbr.rel (%p498) target = $region32
        $region31: #{tpu_custom_call.1} parent=11 // pred_region
          %502 = vsyncadd [#allocation10], 0
          %s503 = sshll.u32 %s4, 4
          %s504 = int_to_ptr.hbm [resolvable:$true] %s503
          %s505 = sshll.u32 [#allocation9], 4
          %s506 = int_to_ptr.vmem [resolvable:$true] %s505
          %511 = dma.hbm_to_vmem [thread:$0]  %s504, 256, %s506, [#allocation10], 128, 128, 8
        $region32: #{tpu_custom_call.1} parent=11 // pred_fallthru
          _
      $region12: #{tpu_custom_call.1} parent=5 // pred_fallthru
        _
      %p512 = scmp.lt.s32.totalorder %s26, 2
      // Predicated region
      $region33: #{tpu_custom_call.1} parent=5 // pred_check
        %p513 = pneg %p512
      $region34: #{tpu_custom_call.1} parent=5 // pred_check_branch
        %515 = sbr.rel (%p513) target = $region36
      $region35: #{tpu_custom_call.1} parent=5 // pred_region
        // Predicated region
        $region37: #{tpu_custom_call.1} parent=35 // pred_check
          %p516 = pneg %p151
        $region38: #{tpu_custom_call.1} parent=35 // pred_check_branch
          %518 = sbr.rel (%p516) target = $region40
        $region39: #{tpu_custom_call.1} parent=35 // pred_region
          %s519 = sand.u32 %s26, 1
          %s520 = scalar_lea.sflag [#allocation4], %s519
          %s521 = sand.u32 %s141, 1
          %s522 = smul.addr %s521, 1152
          %s523 = scalar_lea.vmem [#allocation11], %s522
          %525 = vsyncadd %s520, 0
          %s526 = smul.addr %s26, 288
          %s527 = smul.addr %s526, 4
          %s528 = scalar_lea.hbm %s5, %s527
          %s529 = sshll.u32 %s528, 4
          %s530 = int_to_ptr.hbm [resolvable:$true] %s529
          %s531 = sshll.u32 %s523, 4
          %s532 = int_to_ptr.vmem [resolvable:$true] %s531
          %537 = dma.hbm_to_vmem [thread:$0]  %s530, 18432, %s532, %s520, 576, 576, 36
        $region40: #{tpu_custom_call.1} parent=35 // pred_fallthru
          _
        // Predicated region
        $region41: #{tpu_custom_call.1} parent=35 // pred_check
          %p538 = pneg %p177
        $region42: #{tpu_custom_call.1} parent=35 // pred_check_branch
          %540 = sbr.rel (%p538) target = $region44
        $region43: #{tpu_custom_call.1} parent=35 // pred_region
          %s541 = sand.u32 %s26, 1
          %s542 = scalar_lea.sflag [#allocation4], %s541
          %s543 = sand.u32 %s167, 1
          %s544 = smul.addr %s543, 384
          %s545 = scalar_lea.vmem [#allocation12], %s544
          %547 = vsyncadd %s542, 0
          %s548 = smul.addr %s26, 96
          %s549 = smul.addr %s548, 4
          %s550 = scalar_lea.hbm %s6, %s549
          %s551 = sshll.u32 %s550, 4
          %s552 = int_to_ptr.hbm [resolvable:$true] %s551
          %s553 = sshll.u32 %s545, 4
          %s554 = int_to_ptr.vmem [resolvable:$true] %s553
          %559 = dma.hbm_to_vmem [thread:$0]  %s552, 6144, %s554, %s542, 128, 128, 8
        $region44: #{tpu_custom_call.1} parent=35 // pred_fallthru
          _
        // Predicated region
        $region45: #{tpu_custom_call.1} parent=35 // pred_check
          %p560 = pneg %p203
        $region46: #{tpu_custom_call.1} parent=35 // pred_check_branch
          %562 = sbr.rel (%p560) target = $region48
        $region47: #{tpu_custom_call.1} parent=35 // pred_region
          %s563 = sand.u32 %s26, 1
          %s564 = scalar_lea.sflag [#allocation4], %s563
          %s565 = sand.u32 %s193, 1
          %s566 = smul.addr %s565, 2
          %s567 = scalar_lea.vmem [#allocation13], %s566
          %569 = vsyncadd %s564, 0
          %s570 = smul.addr %s26, 2
          %s571 = scalar_lea.hbm %s7, %s570
          %s573 = sshll.u32 %s571, 4
          %s574 = int_to_ptr.hbm [resolvable:$true] %s573
          %s575 = sshll.u32 %s567, 4
          %s576 = int_to_ptr.vmem [resolvable:$true] %s575
          %578 = dma.hbm_to_vmem [thread:$0]  %s574, 32, %s576, %s564
        $region48: #{tpu_custom_call.1} parent=35 // pred_fallthru
          _
        // Predicated region
        $region49: #{tpu_custom_call.1} parent=35 // pred_check
          %p579 = pneg %p229
        $region50: #{tpu_custom_call.1} parent=35 // pred_check_branch
          %581 = sbr.rel (%p579) target = $region52
        $region51: #{tpu_custom_call.1} parent=35 // pred_region
          %s582 = sand.u32 %s26, 1
          %s583 = scalar_lea.sflag [#allocation4], %s582
          %s584 = sand.u32 %s219, 1
          %s585 = smul.addr %s584, 2
          %s586 = scalar_lea.vmem [#allocation14], %s585
          %588 = vsyncadd %s583, 0
          %s589 = smul.addr %s26, 2
          %s590 = scalar_lea.hbm %s8, %s589
          %s592 = sshll.u32 %s590, 4
          %s593 = int_to_ptr.hbm [resolvable:$true] %s592
          %s594 = sshll.u32 %s586, 4
          %s595 = int_to_ptr.vmem [resolvable:$true] %s594
          %597 = dma.hbm_to_vmem [thread:$0]  %s593, 32, %s595, %s583
        $region52: #{tpu_custom_call.1} parent=35 // pred_fallthru
          _
        // Predicated region
        $region53: #{tpu_custom_call.1} parent=35 // pred_check
          %p598 = pneg %p255
        $region54: #{tpu_custom_call.1} parent=35 // pred_check_branch
          %600 = sbr.rel (%p598) target = $region56
        $region55: #{tpu_custom_call.1} parent=35 // pred_region
          %s601 = sand.u32 %s26, 1
          %s602 = scalar_lea.sflag [#allocation4], %s601
          %s603 = sand.u32 %s245, 1
          %s604 = smul.addr %s603, 2
          %s605 = scalar_lea.vmem [#allocation15], %s604
          %607 = vsyncadd %s602, 0
          %s608 = smul.addr %s26, 2
          %s609 = scalar_lea.hbm %s9, %s608
          %s611 = sshll.u32 %s609, 4
          %s612 = int_to_ptr.hbm [resolvable:$true] %s611
          %s613 = sshll.u32 %s605, 4
          %s614 = int_to_ptr.vmem [resolvable:$true] %s613
          %616 = dma.hbm_to_vmem [thread:$0]  %s612, 32, %s614, %s602
        $region56: #{tpu_custom_call.1} parent=35 // pred_fallthru
          _
        // Predicated region
        $region57: #{tpu_custom_call.1} parent=35 // pred_check
          %p617 = pneg %p281
        $region58: #{tpu_custom_call.1} parent=35 // pred_check_branch
          %619 = sbr.rel (%p617) target = $region60
        $region59: #{tpu_custom_call.1} parent=35 // pred_region
          %s620 = sand.u32 %s26, 1
          %s621 = scalar_lea.sflag [#allocation4], %s620
          %s622 = sand.u32 %s271, 1
          %s623 = smul.addr %s622, 256
          %s624 = scalar_lea.vmem [#allocation16], %s623
          %626 = vsyncadd %s621, 0
          %s627 = smul.addr %s26, 64
          %s628 = smul.addr %s627, 4
          %s629 = scalar_lea.hbm %s10, %s628
          %s630 = sshll.u32 %s629, 4
          %s631 = int_to_ptr.hbm [resolvable:$true] %s630
          %s632 = sshll.u32 %s624, 4
          %s633 = int_to_ptr.vmem [resolvable:$true] %s632
          %638 = dma.hbm_to_vmem [thread:$0]  %s631, 4096, %s633, %s621, 128, 128, 8
        $region60: #{tpu_custom_call.1} parent=35 // pred_fallthru
          _
        // Predicated region
        $region61: #{tpu_custom_call.1} parent=35 // pred_check
          %p639 = pneg %p307
        $region62: #{tpu_custom_call.1} parent=35 // pred_check_branch
          %641 = sbr.rel (%p639) target = $region64
        $region63: #{tpu_custom_call.1} parent=35 // pred_region
          %s642 = sand.u32 %s26, 1
          %s643 = scalar_lea.sflag [#allocation4], %s642
          %s644 = sand.u32 %s297, 1
          %s645 = smul.addr %s644, 2
          %s646 = scalar_lea.vmem [#allocation17], %s645
          %648 = vsyncadd %s643, 0
          %s649 = smul.addr %s26, 2
          %s650 = scalar_lea.hbm %s11, %s649
          %s652 = sshll.u32 %s650, 4
          %s653 = int_to_ptr.hbm [resolvable:$true] %s652
          %s654 = sshll.u32 %s646, 4
          %s655 = int_to_ptr.vmem [resolvable:$true] %s654
          %657 = dma.hbm_to_vmem [thread:$0]  %s653, 32, %s655, %s643
        $region64: #{tpu_custom_call.1} parent=35 // pred_fallthru
          _
        // Predicated region
        $region65: #{tpu_custom_call.1} parent=35 // pred_check
          %p658 = pneg %p333
        $region66: #{tpu_custom_call.1} parent=35 // pred_check_branch
          %660 = sbr.rel (%p658) target = $region68
        $region67: #{tpu_custom_call.1} parent=35 // pred_region
          %s661 = sand.u32 %s26, 1
          %s662 = scalar_lea.sflag [#allocation4], %s661
          %s663 = sand.u32 %s323, 1
          %s664 = smul.addr %s663, 256
          %s665 = scalar_lea.vmem [#allocation18], %s664
          %667 = vsyncadd %s662, 0
          %s668 = smul.addr %s26, 64
          %s669 = smul.addr %s668, 4
          %s670 = scalar_lea.hbm %s12, %s669
          %s671 = sshll.u32 %s670, 4
          %s672 = int_to_ptr.hbm [resolvable:$true] %s671
          %s673 = sshll.u32 %s665, 4
          %s674 = int_to_ptr.vmem [resolvable:$true] %s673
          %679 = dma.hbm_to_vmem [thread:$0]  %s672, 4096, %s674, %s662, 128, 128, 8
        $region68: #{tpu_custom_call.1} parent=35 // pred_fallthru
          _
        // Predicated region
        $region69: #{tpu_custom_call.1} parent=35 // pred_check
          %p680 = pneg %p359
        $region70: #{tpu_custom_call.1} parent=35 // pred_check_branch
          %682 = sbr.rel (%p680) target = $region72
        $region71: #{tpu_custom_call.1} parent=35 // pred_region
          %s683 = sand.u32 %s26, 1
          %s684 = scalar_lea.sflag [#allocation4], %s683
          %s685 = sand.u32 %s349, 1
          %s686 = smul.addr %s685, 2
          %s687 = scalar_lea.vmem [#allocation19], %s686
          %689 = vsyncadd %s684, 0
          %s690 = smul.addr %s26, 2
          %s691 = scalar_lea.hbm %s13, %s690
          %s693 = sshll.u32 %s691, 4
          %s694 = int_to_ptr.hbm [resolvable:$true] %s693
          %s695 = sshll.u32 %s687, 4
          %s696 = int_to_ptr.vmem [resolvable:$true] %s695
          %698 = dma.hbm_to_vmem [thread:$0]  %s694, 32, %s696, %s684
        $region72: #{tpu_custom_call.1} parent=35 // pred_fallthru
          _
        // Predicated region
        $region73: #{tpu_custom_call.1} parent=35 // pred_check
          %p699 = pneg %p385
        $region74: #{tpu_custom_call.1} parent=35 // pred_check_branch
          %701 = sbr.rel (%p699) target = $region76
        $region75: #{tpu_custom_call.1} parent=35 // pred_region
          %s702 = sand.u32 %s26, 1
          %s703 = scalar_lea.sflag [#allocation4], %s702
          %s704 = sand.u32 %s375, 1
          %s705 = smul.addr %s704, 2
          %s706 = scalar_lea.vmem [#allocation20], %s705
          %708 = vsyncadd %s703, 0
          %s709 = smul.addr %s26, 2
          %s710 = scalar_lea.hbm %s14, %s709
          %s712 = sshll.u32 %s710, 4
          %s713 = int_to_ptr.hbm [resolvable:$true] %s712
          %s714 = sshll.u32 %s706, 4
          %s715 = int_to_ptr.vmem [resolvable:$true] %s714
          %717 = dma.hbm_to_vmem [thread:$0]  %s713, 32, %s715, %s703
        $region76: #{tpu_custom_call.1} parent=35 // pred_fallthru
          _
        // Predicated region
        $region77: #{tpu_custom_call.1} parent=35 // pred_check
          %p718 = pneg %p411
        $region78: #{tpu_custom_call.1} parent=35 // pred_check_branch
          %720 = sbr.rel (%p718) target = $region80
        $region79: #{tpu_custom_call.1} parent=35 // pred_region
          %s721 = sand.u32 %s26, 1
          %s722 = scalar_lea.sflag [#allocation4], %s721
          %s723 = sand.u32 %s401, 1
          %s724 = smul.addr %s723, 2
          %s725 = scalar_lea.vmem [#allocation21], %s724
          %727 = vsyncadd %s722, 0
          %s728 = smul.addr %s26, 2
          %s729 = scalar_lea.hbm %s15, %s728
          %s731 = sshll.u32 %s729, 4
          %s732 = int_to_ptr.hbm [resolvable:$true] %s731
          %s733 = sshll.u32 %s725, 4
          %s734 = int_to_ptr.vmem [resolvable:$true] %s733
          %736 = dma.hbm_to_vmem [thread:$0]  %s732, 32, %s734, %s722
        $region80: #{tpu_custom_call.1} parent=35 // pred_fallthru
          _
      $region36: #{tpu_custom_call.1} parent=5 // pred_fallthru
        _
      %p737 = scmp.le.s32.totalorder 1, %s26
      %p738 = scmp.lt.s32.totalorder %s26, 3
      %p739 = pnand %p737, %p738
      %p740 = pneg %p739
      // Predicated region
      $region81: #{tpu_custom_call.1} parent=5 // pred_check
        _
      $region82: #{tpu_custom_call.1} parent=5 // pred_check_branch
        %742 = sbr.rel (%p739) target = $region84
      $region83: #{tpu_custom_call.1} parent=5 // pred_region
        %s743 = ssub.s32 %s26, 1
        // Predicated region
        $region85: #{tpu_custom_call.1} parent=83 // pred_check
          %p744 = pneg %p47
        $region86: #{tpu_custom_call.1} parent=83 // pred_check_branch
          %746 = sbr.rel (%p744) target = $region88
        $region87: #{tpu_custom_call.1} parent=83 // pred_region
          %748 = dma.done [#allocation4], 256
        $region88: #{tpu_custom_call.1} parent=83 // pred_fallthru
          _
        // Predicated region
        $region89: #{tpu_custom_call.1} parent=83 // pred_check
          %p749 = pneg %p68
        $region90: #{tpu_custom_call.1} parent=83 // pred_check_branch
          %751 = sbr.rel (%p749) target = $region92
        $region91: #{tpu_custom_call.1} parent=83 // pred_region
          %753 = dma.done [#allocation7], 512
        $region92: #{tpu_custom_call.1} parent=83 // pred_fallthru
          _
        // Predicated region
        $region93: #{tpu_custom_call.1} parent=83 // pred_check
          %p754 = pneg %p89
        $region94: #{tpu_custom_call.1} parent=83 // pred_check_branch
          %756 = sbr.rel (%p754) target = $region96
        $region95: #{tpu_custom_call.1} parent=83 // pred_region
          %758 = dma.done [#allocation7], 512
        $region96: #{tpu_custom_call.1} parent=83 // pred_fallthru
          _
        // Predicated region
        $region97: #{tpu_custom_call.1} parent=83 // pred_check
          %p759 = pneg %p131
        $region98: #{tpu_custom_call.1} parent=83 // pred_check_branch
          %761 = sbr.rel (%p759) target = $region100
        $region99: #{tpu_custom_call.1} parent=83 // pred_region
          %763 = dma.done [#allocation10], 256
        $region100: #{tpu_custom_call.1} parent=83 // pred_fallthru
          _
        %s764 = sand.u32 %s31, 1
        %s765 = scalar_lea.sflag [#allocation4], %s764
        %s766 = sand.u32 %s144, 1
        %s767 = smul.addr %s766, 1152
        %s768 = scalar_lea.vmem [#allocation11], %s767
        // Predicated region
        $region101: #{tpu_custom_call.1} parent=83 // pred_check
          %p769 = pneg %p157
        $region102: #{tpu_custom_call.1} parent=83 // pred_check_branch
          %771 = sbr.rel (%p769) target = $region104
        $region103: #{tpu_custom_call.1} parent=83 // pred_region
          %773 = dma.done %s765, 18432
        $region104: #{tpu_custom_call.1} parent=83 // pred_fallthru
          _
        %s774 = sand.u32 %s31, 1
        %s775 = scalar_lea.sflag [#allocation4], %s774
        %s776 = sand.u32 %s170, 1
        %s777 = smul.addr %s776, 384
        %s778 = scalar_lea.vmem [#allocation12], %s777
        // Predicated region
        $region105: #{tpu_custom_call.1} parent=83 // pred_check
          %p779 = pneg %p183
        $region106: #{tpu_custom_call.1} parent=83 // pred_check_branch
          %781 = sbr.rel (%p779) target = $region108
        $region107: #{tpu_custom_call.1} parent=83 // pred_region
          %783 = dma.done %s775, 6144
        $region108: #{tpu_custom_call.1} parent=83 // pred_fallthru
          _
        %s784 = sand.u32 %s31, 1
        %s785 = scalar_lea.sflag [#allocation4], %s784
        %s786 = sand.u32 %s196, 1
        %s787 = smul.addr %s786, 2
        %s788 = scalar_lea.vmem [#allocation13], %s787
        // Predicated region
        $region109: #{tpu_custom_call.1} parent=83 // pred_check
          %p789 = pneg %p209
        $region110: #{tpu_custom_call.1} parent=83 // pred_check_branch
          %791 = sbr.rel (%p789) target = $region112
        $region111: #{tpu_custom_call.1} parent=83 // pred_region
          %793 = dma.done %s785, 32
        $region112: #{tpu_custom_call.1} parent=83 // pred_fallthru
          _
        %s794 = sand.u32 %s31, 1
        %s795 = scalar_lea.sflag [#allocation4], %s794
        %s796 = sand.u32 %s222, 1
        %s797 = smul.addr %s796, 2
        %s798 = scalar_lea.vmem [#allocation14], %s797
        // Predicated region
        $region113: #{tpu_custom_call.1} parent=83 // pred_check
          %p799 = pneg %p235
        $region114: #{tpu_custom_call.1} parent=83 // pred_check_branch
          %801 = sbr.rel (%p799) target = $region116
        $region115: #{tpu_custom_call.1} parent=83 // pred_region
          %803 = dma.done %s795, 32
        $region116: #{tpu_custom_call.1} parent=83 // pred_fallthru
          _
        %s804 = sand.u32 %s31, 1
        %s805 = scalar_lea.sflag [#allocation4], %s804
        %s806 = sand.u32 %s248, 1
        %s807 = smul.addr %s806, 2
        %s808 = scalar_lea.vmem [#allocation15], %s807
        // Predicated region
        $region117: #{tpu_custom_call.1} parent=83 // pred_check
          %p809 = pneg %p261
        $region118: #{tpu_custom_call.1} parent=83 // pred_check_branch
          %811 = sbr.rel (%p809) target = $region120
        $region119: #{tpu_custom_call.1} parent=83 // pred_region
          %813 = dma.done %s805, 32
        $region120: #{tpu_custom_call.1} parent=83 // pred_fallthru
          _
        %s814 = sand.u32 %s31, 1
        %s815 = scalar_lea.sflag [#allocation4], %s814
        %s816 = sand.u32 %s274, 1
        %s817 = smul.addr %s816, 256
        %s818 = scalar_lea.vmem [#allocation16], %s817
        // Predicated region
        $region121: #{tpu_custom_call.1} parent=83 // pred_check
          %p819 = pneg %p287
        $region122: #{tpu_custom_call.1} parent=83 // pred_check_branch
          %821 = sbr.rel (%p819) target = $region124
        $region123: #{tpu_custom_call.1} parent=83 // pred_region
          %823 = dma.done %s815, 4096
        $region124: #{tpu_custom_call.1} parent=83 // pred_fallthru
          _
        %s824 = sand.u32 %s31, 1
        %s825 = scalar_lea.sflag [#allocation4], %s824
        %s826 = sand.u32 %s300, 1
        %s827 = smul.addr %s826, 2
        %s828 = scalar_lea.vmem [#allocation17], %s827
        // Predicated region
        $region125: #{tpu_custom_call.1} parent=83 // pred_check
          %p829 = pneg %p313
        $region126: #{tpu_custom_call.1} parent=83 // pred_check_branch
          %831 = sbr.rel (%p829) target = $region128
        $region127: #{tpu_custom_call.1} parent=83 // pred_region
          %833 = dma.done %s825, 32
        $region128: #{tpu_custom_call.1} parent=83 // pred_fallthru
          _
        %s834 = sand.u32 %s31, 1
        %s835 = scalar_lea.sflag [#allocation4], %s834
        %s836 = sand.u32 %s326, 1
        %s837 = smul.addr %s836, 256
        %s838 = scalar_lea.vmem [#allocation18], %s837
        // Predicated region
        $region129: #{tpu_custom_call.1} parent=83 // pred_check
          %p839 = pneg %p339
        $region130: #{tpu_custom_call.1} parent=83 // pred_check_branch
          %841 = sbr.rel (%p839) target = $region132
        $region131: #{tpu_custom_call.1} parent=83 // pred_region
          %843 = dma.done %s835, 4096
        $region132: #{tpu_custom_call.1} parent=83 // pred_fallthru
          _
        %s844 = sand.u32 %s31, 1
        %s845 = scalar_lea.sflag [#allocation4], %s844
        %s846 = sand.u32 %s352, 1
        %s847 = smul.addr %s846, 2
        %s848 = scalar_lea.vmem [#allocation19], %s847
        // Predicated region
        $region133: #{tpu_custom_call.1} parent=83 // pred_check
          %p849 = pneg %p365
        $region134: #{tpu_custom_call.1} parent=83 // pred_check_branch
          %851 = sbr.rel (%p849) target = $region136
        $region135: #{tpu_custom_call.1} parent=83 // pred_region
          %853 = dma.done %s845, 32
        $region136: #{tpu_custom_call.1} parent=83 // pred_fallthru
          _
        %s854 = sand.u32 %s31, 1
        %s855 = scalar_lea.sflag [#allocation4], %s854
        %s856 = sand.u32 %s378, 1
        %s857 = smul.addr %s856, 2
        %s858 = scalar_lea.vmem [#allocation20], %s857
        // Predicated region
        $region137: #{tpu_custom_call.1} parent=83 // pred_check
          %p859 = pneg %p391
        $region138: #{tpu_custom_call.1} parent=83 // pred_check_branch
          %861 = sbr.rel (%p859) target = $region140
        $region139: #{tpu_custom_call.1} parent=83 // pred_region
          %863 = dma.done %s855, 32
        $region140: #{tpu_custom_call.1} parent=83 // pred_fallthru
          _
        %s864 = sand.u32 %s31, 1
        %s865 = scalar_lea.sflag [#allocation4], %s864
        %s866 = sand.u32 %s404, 1
        %s867 = smul.addr %s866, 2
        %s868 = scalar_lea.vmem [#allocation21], %s867
        // Predicated region
        $region141: #{tpu_custom_call.1} parent=83 // pred_check
          %p869 = pneg %p417
        $region142: #{tpu_custom_call.1} parent=83 // pred_check_branch
          %871 = sbr.rel (%p869) target = $region144
        $region143: #{tpu_custom_call.1} parent=83 // pred_region
          %873 = dma.done %s865, 32
        $region144: #{tpu_custom_call.1} parent=83 // pred_fallthru
          _
        %p874 = pneg %p47
        %p875 = pneg %p44
        %p876 = pneg %p68
        %p877 = pneg %p65
        %p878 = pneg %p89
        %p879 = pneg %p86
        %p880 = pneg %p110
        %p881 = pneg %p107
        %p882 = pneg %p131
        %p883 = pneg %p128
        %s884 = sand.u32 %s31, 1
        %s885 = scalar_lea.sflag [#allocation4], %s884
        %s886 = sand.u32 %s144, 1
        %s887 = smul.addr %s886, 1152
        %s888 = scalar_lea.vmem [#allocation11], %s887
        %p889 = pneg %p157
        %p890 = pneg %p154
        %s891 = sand.u32 %s31, 1
        %s892 = scalar_lea.sflag [#allocation4], %s891
        %s893 = sand.u32 %s170, 1
        %s894 = smul.addr %s893, 384
        %s895 = scalar_lea.vmem [#allocation12], %s894
        %p896 = pneg %p183
        %p897 = pneg %p180
        %s898 = sand.u32 %s31, 1
        %s899 = scalar_lea.sflag [#allocation4], %s898
        %s900 = sand.u32 %s196, 1
        %s901 = smul.addr %s900, 2
        %s902 = scalar_lea.vmem [#allocation13], %s901
        %p903 = pneg %p209
        %p904 = pneg %p206
        %s905 = sand.u32 %s31, 1
        %s906 = scalar_lea.sflag [#allocation4], %s905
        %s907 = sand.u32 %s222, 1
        %s908 = smul.addr %s907, 2
        %s909 = scalar_lea.vmem [#allocation14], %s908
        %p910 = pneg %p235
        %p911 = pneg %p232
        %s912 = sand.u32 %s31, 1
        %s913 = scalar_lea.sflag [#allocation4], %s912
        %s914 = sand.u32 %s248, 1
        %s915 = smul.addr %s914, 2
        %s916 = scalar_lea.vmem [#allocation15], %s915
        %p917 = pneg %p261
        %p918 = pneg %p258
        %s919 = sand.u32 %s31, 1
        %s920 = scalar_lea.sflag [#allocation4], %s919
        %s921 = sand.u32 %s274, 1
        %s922 = smul.addr %s921, 256
        %s923 = scalar_lea.vmem [#allocation16], %s922
        %p924 = pneg %p287
        %p925 = pneg %p284
        %s926 = sand.u32 %s31, 1
        %s927 = scalar_lea.sflag [#allocation4], %s926
        %s928 = sand.u32 %s300, 1
        %s929 = smul.addr %s928, 2
        %s930 = scalar_lea.vmem [#allocation17], %s929
        %p931 = pneg %p313
        %p932 = pneg %p310
        %s933 = sand.u32 %s31, 1
        %s934 = scalar_lea.sflag [#allocation4], %s933
        %s935 = sand.u32 %s326, 1
        %s936 = smul.addr %s935, 256
        %s937 = scalar_lea.vmem [#allocation18], %s936
        %p938 = pneg %p339
        %p939 = pneg %p336
        %s940 = sand.u32 %s31, 1
        %s941 = scalar_lea.sflag [#allocation4], %s940
        %s942 = sand.u32 %s352, 1
        %s943 = smul.addr %s942, 2
        %s944 = scalar_lea.vmem [#allocation19], %s943
        %p945 = pneg %p365
        %p946 = pneg %p362
        %s947 = sand.u32 %s31, 1
        %s948 = scalar_lea.sflag [#allocation4], %s947
        %s949 = sand.u32 %s378, 1
        %s950 = smul.addr %s949, 2
        %s951 = scalar_lea.vmem [#allocation20], %s950
        %p952 = pneg %p391
        %p953 = pneg %p388
        %s954 = sand.u32 %s31, 1
        %s955 = scalar_lea.sflag [#allocation4], %s954
        %s956 = sand.u32 %s404, 1
        %s957 = smul.addr %s956, 2
        %s958 = scalar_lea.vmem [#allocation21], %s957
        %p959 = pneg %p417
        %p960 = pneg %p414
        %p961 = pneg %p438
        %p962 = pneg %p435
        %p964 = scmp.eq.s32.totalorder %s31, 0
        // Predicated region
        $region145: #{tpu_custom_call.1} parent=83 // pred_check
          %p965 = pneg %p964
        $region146: #{tpu_custom_call.1} parent=83 // pred_check_branch
          %967 = sbr.rel (%p965) target = $region148
        $region147: #{tpu_custom_call.1} parent=83 // pred_region
          %v968 = vld [vmem:[#allocation3] sm:$0xff]
          %v969 = vld [vmem:[#allocation3 + $0x8] sm:$0xff]
          %v970 = vpack.c.bf16 %v969, %v968
          %v971 = vld [vmem:[#allocation9] sm:$0xff]
          %v972 = vld [vmem:[#allocation9 + $0x8] sm:$0xff]
          %v973 = vld [vmem:[#allocation6] sm:$0xff]
          %v974 = vld [vmem:[#allocation6 + $0x8] sm:$0xff]
          %v975 = vld [vmem:[#allocation6 + $0x10] sm:$0xff]
          %v976 = vld [vmem:[#allocation6 + $0x18] sm:$0xff]
          %v979 = vunpack.c.l.b16 %v971
          %v980 = vunpack.c.h.b16 %v971
          %v981 = vunpack.c.l.b16 %v972
          %v982 = vunpack.c.h.b16 %v972
          %v983 = vpack.c.b16 %v981, %v979
          %v984 = vpack.c.b16 %v982, %v980
          %vm987 = vcmask 130048
          %v989 = vsel %vm987, %v970, 0
          %991 = vmatpush.bf16.msra.mxu0 0
          %992 = vmatpush.bf16.msra.mxu0 0
          %993 = vmatpush.bf16.msra.mxu0 0
          %994 = vmatpush.bf16.msra.mxu0 0
          %995 = vmatpush.bf16.msra.mxu0 0
          %996 = vmatpush.bf16.msra.mxu0 0
          %997 = vmatpush.bf16.msra.mxu0 0
          %998 = vmatpush.bf16.msra.mxu0 %v983
          %999 = vmatmul.bf16.gmra.mxu0 %v989
          %v1000 = vpop.f32.mrf.mxu0
          %v1001 = vadd.f32 %v973, %v1000
          %v1002 = vpop.f32.mrf.mxu0
          %v1003 = vadd.f32 %v975, %v1002
          %1004 = vdwg.mxu0
          %1005 = vmatpush.bf16.msra.mxu0 0
          %1006 = vmatpush.bf16.msra.mxu0 0
          %1007 = vmatpush.bf16.msra.mxu0 0
          %1008 = vmatpush.bf16.msra.mxu0 0
          %1009 = vmatpush.bf16.msra.mxu0 0
          %1010 = vmatpush.bf16.msra.mxu0 0
          %1011 = vmatpush.bf16.msra.mxu0 0
          %1012 = vmatpush.bf16.msra.mxu0 %v984
          %1013 = vmatmul.bf16.gmra.mxu0 %v989
          %v1014 = vpop.f32.mrf.mxu0
          %v1015 = vadd.f32 %v974, %v1014
          %v1016 = vpop.f32.mrf.mxu0
          %v1017 = vadd.f32 %v976, %v1016
          %1018 = vdwg.mxu0
          %1019 = vst [vmem:[#allocation2] sm:$0xff] %v1001
          %1020 = vst [vmem:[#allocation2 + $0x8] sm:$0xff] %v1015
          %1021 = vst [vmem:[#allocation2 + $0x10] sm:$0xff] %v1003
          %1022 = vst [vmem:[#allocation2 + $0x18] sm:$0xff] %v1017
        $region148: #{tpu_custom_call.1} parent=83 // pred_fallthru
          _
        %v1023 = vld [vmem:[#allocation2] sm:$0xff]
        %v1024 = vld [vmem:[#allocation2 + $0x8] sm:$0xff]
        %v1025 = vld [vmem:[#allocation2 + $0x10] sm:$0xff]
        %v1026 = vld [vmem:[#allocation2 + $0x18] sm:$0xff]
        %v1027 = vpack.c.bf16 %v1025, %v1023
        %v1028 = vpack.c.bf16 %v1026, %v1024
        %v1029 = vld [vmem:[%s768] sm:$0xff]
        %v1030 = vld [vmem:[%s768 + $0x8] sm:$0xff]
        %v1031 = vld [vmem:[%s768 + $0x10] sm:$0xff]
        %v1032 = vld [vmem:[%s768 + $0x18] sm:$0xff]
        %v1033 = vld [vmem:[%s768 + $0x20] sm:$0xf]
        %v1034 = vld [vmem:[%s768 + $0x24] sm:$0xff]
        %v1035 = vld [vmem:[%s768 + $0x2c] sm:$0xff]
        %v1036 = vld [vmem:[%s768 + $0x34] sm:$0xff]
        %v1037 = vld [vmem:[%s768 + $0x3c] sm:$0xff]
        %v1038 = vld [vmem:[%s768 + $0x44] sm:$0xf]
        %v1039 = vld [vmem:[%s768 + $0x48] sm:$0xff]
        %v1040 = vld [vmem:[%s768 + $0x50] sm:$0xff]
        %v1041 = vld [vmem:[%s768 + $0x58] sm:$0xff]
        %v1042 = vld [vmem:[%s768 + $0x60] sm:$0xff]
        %v1043 = vld [vmem:[%s768 + $0x68] sm:$0xf]
        %v1044 = vld [vmem:[%s768 + $0x6c] sm:$0xff]
        %v1045 = vld [vmem:[%s768 + $0x74] sm:$0xff]
        %v1046 = vld [vmem:[%s768 + $0x7c] sm:$0xff]
        %v1047 = vld [vmem:[%s768 + $0x84] sm:$0xff]
        %v1048 = vld [vmem:[%s768 + $0x8c] sm:$0xf]
        %v1049 = vld [vmem:[%s768 + $0x90] sm:$0xff]
        %v1050 = vld [vmem:[%s768 + $0x98] sm:$0xff]
        %v1051 = vld [vmem:[%s768 + $0xa0] sm:$0xff]
        %v1052 = vld [vmem:[%s768 + $0xa8] sm:$0xff]
        %v1053 = vld [vmem:[%s768 + $0xb0] sm:$0xf]
        %v1054 = vld [vmem:[%s768 + $0xb4] sm:$0xff]
        %v1055 = vld [vmem:[%s768 + $0xbc] sm:$0xff]
        %v1056 = vld [vmem:[%s768 + $0xc4] sm:$0xff]
        %v1057 = vld [vmem:[%s768 + $0xcc] sm:$0xff]
        %v1058 = vld [vmem:[%s768 + $0xd4] sm:$0xf]
        %v1059 = vld [vmem:[%s768 + $0xd8] sm:$0xff]
        %v1060 = vld [vmem:[%s768 + $0xe0] sm:$0xff]
        %v1061 = vld [vmem:[%s768 + $0xe8] sm:$0xff]
        %v1062 = vld [vmem:[%s768 + $0xf0] sm:$0xff]
        %v1063 = vld [vmem:[%s768 + $0xf8] sm:$0xf]
        %v1064 = vld [vmem:[%s768 + $0xfc] sm:$0xff]
        %v1065 = vld [vmem:[%s768 + $0x104] sm:$0xff]
        %v1066 = vld [vmem:[%s768 + $0x10c] sm:$0xff]
        %v1067 = vld [vmem:[%s768 + $0x114] sm:$0xff]
        %v1068 = vld [vmem:[%s768 + $0x11c] sm:$0xf]
        %v1069 = vld [vmem:[%s768 + $0x120] sm:$0xff]
        %v1070 = vld [vmem:[%s768 + $0x128] sm:$0xff]
        %v1071 = vld [vmem:[%s768 + $0x130] sm:$0xff]
        %v1072 = vld [vmem:[%s768 + $0x138] sm:$0xff]
        %v1073 = vld [vmem:[%s768 + $0x140] sm:$0xf]
        %v1074 = vld [vmem:[%s768 + $0x144] sm:$0xff]
        %v1075 = vld [vmem:[%s768 + $0x14c] sm:$0xff]
        %v1076 = vld [vmem:[%s768 + $0x154] sm:$0xff]
        %v1077 = vld [vmem:[%s768 + $0x15c] sm:$0xff]
        %v1078 = vld [vmem:[%s768 + $0x164] sm:$0xf]
        %v1079 = vld [vmem:[%s768 + $0x168] sm:$0xff]
        %v1080 = vld [vmem:[%s768 + $0x170] sm:$0xff]
        %v1081 = vld [vmem:[%s768 + $0x178] sm:$0xff]
        %v1082 = vld [vmem:[%s768 + $0x180] sm:$0xff]
        %v1083 = vld [vmem:[%s768 + $0x188] sm:$0xf]
        %v1084 = vld [vmem:[%s768 + $0x18c] sm:$0xff]
        %v1085 = vld [vmem:[%s768 + $0x194] sm:$0xff]
        %v1086 = vld [vmem:[%s768 + $0x19c] sm:$0xff]
        %v1087 = vld [vmem:[%s768 + $0x1a4] sm:$0xff]
        %v1088 = vld [vmem:[%s768 + $0x1ac] sm:$0xf]
        %v1089 = vld [vmem:[%s768 + $0x1b0] sm:$0xff]
        %v1090 = vld [vmem:[%s768 + $0x1b8] sm:$0xff]
        %v1091 = vld [vmem:[%s768 + $0x1c0] sm:$0xff]
        %v1092 = vld [vmem:[%s768 + $0x1c8] sm:$0xff]
        %v1093 = vld [vmem:[%s768 + $0x1d0] sm:$0xf]
        %v1094 = vld [vmem:[%s768 + $0x1d4] sm:$0xff]
        %v1095 = vld [vmem:[%s768 + $0x1dc] sm:$0xff]
        %v1096 = vld [vmem:[%s768 + $0x1e4] sm:$0xff]
        %v1097 = vld [vmem:[%s768 + $0x1ec] sm:$0xff]
        %v1098 = vld [vmem:[%s768 + $0x1f4] sm:$0xf]
        %v1099 = vld [vmem:[%s768 + $0x1f8] sm:$0xff]
        %v1100 = vld [vmem:[%s768 + $0x200] sm:$0xff]
        %v1101 = vld [vmem:[%s768 + $0x208] sm:$0xff]
        %v1102 = vld [vmem:[%s768 + $0x210] sm:$0xff]
        %v1103 = vld [vmem:[%s768 + $0x218] sm:$0xf]
        %v1104 = vld [vmem:[%s768 + $0x21c] sm:$0xff]
        %v1105 = vld [vmem:[%s768 + $0x224] sm:$0xff]
        %v1106 = vld [vmem:[%s768 + $0x22c] sm:$0xff]
        %v1107 = vld [vmem:[%s768 + $0x234] sm:$0xff]
        %v1108 = vld [vmem:[%s768 + $0x23c] sm:$0xf]
        %v1109 = vld [vmem:[%s768 + $0x240] sm:$0xff]
        %v1110 = vld [vmem:[%s768 + $0x248] sm:$0xff]
        %v1111 = vld [vmem:[%s768 + $0x250] sm:$0xff]
        %v1112 = vld [vmem:[%s768 + $0x258] sm:$0xff]
        %v1113 = vld [vmem:[%s768 + $0x260] sm:$0xf]
        %v1114 = vld [vmem:[%s768 + $0x264] sm:$0xff]
        %v1115 = vld [vmem:[%s768 + $0x26c] sm:$0xff]
        %v1116 = vld [vmem:[%s768 + $0x274] sm:$0xff]
        %v1117 = vld [vmem:[%s768 + $0x27c] sm:$0xff]
        %v1118 = vld [vmem:[%s768 + $0x284] sm:$0xf]
        %v1119 = vld [vmem:[%s768 + $0x288] sm:$0xff]
        %v1120 = vld [vmem:[%s768 + $0x290] sm:$0xff]
        %v1121 = vld [vmem:[%s768 + $0x298] sm:$0xff]
        %v1122 = vld [vmem:[%s768 + $0x2a0] sm:$0xff]
        %v1123 = vld [vmem:[%s768 + $0x2a8] sm:$0xf]
        %v1124 = vld [vmem:[%s768 + $0x2ac] sm:$0xff]
        %v1125 = vld [vmem:[%s768 + $0x2b4] sm:$0xff]
        %v1126 = vld [vmem:[%s768 + $0x2bc] sm:$0xff]
        %v1127 = vld [vmem:[%s768 + $0x2c4] sm:$0xff]
        %v1128 = vld [vmem:[%s768 + $0x2cc] sm:$0xf]
        %v1129 = vld [vmem:[%s768 + $0x2d0] sm:$0xff]
        %v1130 = vld [vmem:[%s768 + $0x2d8] sm:$0xff]
        %v1131 = vld [vmem:[%s768 + $0x2e0] sm:$0xff]
        %v1132 = vld [vmem:[%s768 + $0x2e8] sm:$0xff]
        %v1133 = vld [vmem:[%s768 + $0x2f0] sm:$0xf]
        %v1134 = vld [vmem:[%s768 + $0x2f4] sm:$0xff]
        %v1135 = vld [vmem:[%s768 + $0x2fc] sm:$0xff]
        %v1136 = vld [vmem:[%s768 + $0x304] sm:$0xff]
        %v1137 = vld [vmem:[%s768 + $0x30c] sm:$0xff]
        %v1138 = vld [vmem:[%s768 + $0x314] sm:$0xf]
        %v1139 = vld [vmem:[%s768 + $0x318] sm:$0xff]
        %v1140 = vld [vmem:[%s768 + $0x320] sm:$0xff]
        %v1141 = vld [vmem:[%s768 + $0x328] sm:$0xff]
        %v1142 = vld [vmem:[%s768 + $0x330] sm:$0xff]
        %v1143 = vld [vmem:[%s768 + $0x338] sm:$0xf]
        %v1144 = vld [vmem:[%s768 + $0x33c] sm:$0xff]
        %v1145 = vld [vmem:[%s768 + $0x344] sm:$0xff]
        %v1146 = vld [vmem:[%s768 + $0x34c] sm:$0xff]
        %v1147 = vld [vmem:[%s768 + $0x354] sm:$0xff]
        %v1148 = vld [vmem:[%s768 + $0x35c] sm:$0xf]
        %v1149 = vld [vmem:[%s768 + $0x360] sm:$0xff]
        %v1150 = vld [vmem:[%s768 + $0x368] sm:$0xff]
        %v1151 = vld [vmem:[%s768 + $0x370] sm:$0xff]
        %v1152 = vld [vmem:[%s768 + $0x378] sm:$0xff]
        %v1153 = vld [vmem:[%s768 + $0x380] sm:$0xf]
        %v1154 = vld [vmem:[%s768 + $0x384] sm:$0xff]
        %v1155 = vld [vmem:[%s768 + $0x38c] sm:$0xff]
        %v1156 = vld [vmem:[%s768 + $0x394] sm:$0xff]
        %v1157 = vld [vmem:[%s768 + $0x39c] sm:$0xff]
        %v1158 = vld [vmem:[%s768 + $0x3a4] sm:$0xf]
        %v1159 = vld [vmem:[%s768 + $0x3a8] sm:$0xff]
        %v1160 = vld [vmem:[%s768 + $0x3b0] sm:$0xff]
        %v1161 = vld [vmem:[%s768 + $0x3b8] sm:$0xff]
        %v1162 = vld [vmem:[%s768 + $0x3c0] sm:$0xff]
        %v1163 = vld [vmem:[%s768 + $0x3c8] sm:$0xf]
        %v1164 = vld [vmem:[%s768 + $0x3cc] sm:$0xff]
        %v1165 = vld [vmem:[%s768 + $0x3d4] sm:$0xff]
        %v1166 = vld [vmem:[%s768 + $0x3dc] sm:$0xff]
        %v1167 = vld [vmem:[%s768 + $0x3e4] sm:$0xff]
        %v1168 = vld [vmem:[%s768 + $0x3ec] sm:$0xf]
        %v1169 = vld [vmem:[%s768 + $0x3f0] sm:$0xff]
        %v1170 = vld [vmem:[%s768 + $0x3f8] sm:$0xff]
        %v1171 = vld [vmem:[%s768 + $0x400] sm:$0xff]
        %v1172 = vld [vmem:[%s768 + $0x408] sm:$0xff]
        %v1173 = vld [vmem:[%s768 + $0x410] sm:$0xf]
        %v1174 = vld [vmem:[%s768 + $0x414] sm:$0xff]
        %v1175 = vld [vmem:[%s768 + $0x41c] sm:$0xff]
        %v1176 = vld [vmem:[%s768 + $0x424] sm:$0xff]
        %v1177 = vld [vmem:[%s768 + $0x42c] sm:$0xff]
        %v1178 = vld [vmem:[%s768 + $0x434] sm:$0xf]
        %v1179 = vld [vmem:[%s768 + $0x438] sm:$0xff]
        %v1180 = vld [vmem:[%s768 + $0x440] sm:$0xff]
        %v1181 = vld [vmem:[%s768 + $0x448] sm:$0xff]
        %v1182 = vld [vmem:[%s768 + $0x450] sm:$0xff]
        %v1183 = vld [vmem:[%s768 + $0x458] sm:$0xf]
        %v1184 = vld [vmem:[%s768 + $0x45c] sm:$0xff]
        %v1185 = vld [vmem:[%s768 + $0x464] sm:$0xff]
        %v1186 = vld [vmem:[%s768 + $0x46c] sm:$0xff]
        %v1187 = vld [vmem:[%s768 + $0x474] sm:$0xff]
        %v1188 = vld [vmem:[%s768 + $0x47c] sm:$0xf]
        %v1349 = vunpack.c.l.b16 %v1029
        %v1350 = vunpack.c.h.b16 %v1029
        %v1351 = vunpack.c.l.b16 %v1030
        %v1352 = vunpack.c.h.b16 %v1030
        %v1353 = vunpack.c.l.b16 %v1031
        %v1354 = vunpack.c.h.b16 %v1031
        %v1355 = vunpack.c.l.b16 %v1032
        %v1356 = vunpack.c.h.b16 %v1032
        %v1357 = vunpack.c.l.b16 %v1033
        %v1358 = vunpack.c.l.b16 %v1034
        %v1359 = vunpack.c.h.b16 %v1034
        %v1360 = vunpack.c.l.b16 %v1035
        %v1361 = vunpack.c.h.b16 %v1035
        %v1362 = vunpack.c.l.b16 %v1036
        %v1363 = vunpack.c.h.b16 %v1036
        %v1364 = vunpack.c.l.b16 %v1037
        %v1365 = vunpack.c.h.b16 %v1037
        %v1366 = vunpack.c.l.b16 %v1038
        %v1367 = vunpack.c.l.b16 %v1039
        %v1368 = vunpack.c.h.b16 %v1039
        %v1369 = vunpack.c.l.b16 %v1040
        %v1370 = vunpack.c.h.b16 %v1040
        %v1371 = vunpack.c.l.b16 %v1041
        %v1372 = vunpack.c.h.b16 %v1041
        %v1373 = vunpack.c.l.b16 %v1042
        %v1374 = vunpack.c.h.b16 %v1042
        %v1375 = vunpack.c.l.b16 %v1043
        %v1376 = vunpack.c.l.b16 %v1044
        %v1377 = vunpack.c.h.b16 %v1044
        %v1378 = vunpack.c.l.b16 %v1045
        %v1379 = vunpack.c.h.b16 %v1045
        %v1380 = vunpack.c.l.b16 %v1046
        %v1381 = vunpack.c.h.b16 %v1046
        %v1382 = vunpack.c.l.b16 %v1047
        %v1383 = vunpack.c.h.b16 %v1047
        %v1384 = vunpack.c.l.b16 %v1048
        %v1385 = vunpack.c.l.b16 %v1049
        %v1386 = vunpack.c.h.b16 %v1049
        %v1387 = vunpack.c.l.b16 %v1050
        %v1388 = vunpack.c.h.b16 %v1050
        %v1389 = vunpack.c.l.b16 %v1051
        %v1390 = vunpack.c.h.b16 %v1051
        %v1391 = vunpack.c.l.b16 %v1052
        %v1392 = vunpack.c.h.b16 %v1052
        %v1393 = vunpack.c.l.b16 %v1053
        %v1394 = vunpack.c.l.b16 %v1054
        %v1395 = vunpack.c.h.b16 %v1054
        %v1396 = vunpack.c.l.b16 %v1055
        %v1397 = vunpack.c.h.b16 %v1055
        %v1398 = vunpack.c.l.b16 %v1056
        %v1399 = vunpack.c.h.b16 %v1056
        %v1400 = vunpack.c.l.b16 %v1057
        %v1401 = vunpack.c.h.b16 %v1057
        %v1402 = vunpack.c.l.b16 %v1058
        %v1403 = vunpack.c.l.b16 %v1059
        %v1404 = vunpack.c.h.b16 %v1059
        %v1405 = vunpack.c.l.b16 %v1060
        %v1406 = vunpack.c.h.b16 %v1060
        %v1407 = vunpack.c.l.b16 %v1061
        %v1408 = vunpack.c.h.b16 %v1061
        %v1409 = vunpack.c.l.b16 %v1062
        %v1410 = vunpack.c.h.b16 %v1062
        %v1411 = vunpack.c.l.b16 %v1063
        %v1412 = vunpack.c.l.b16 %v1064
        %v1413 = vunpack.c.h.b16 %v1064
        %v1414 = vunpack.c.l.b16 %v1065
        %v1415 = vunpack.c.h.b16 %v1065
        %v1416 = vunpack.c.l.b16 %v1066
        %v1417 = vunpack.c.h.b16 %v1066
        %v1418 = vunpack.c.l.b16 %v1067
        %v1419 = vunpack.c.h.b16 %v1067
        %v1420 = vunpack.c.l.b16 %v1068
        %v1421 = vunpack.c.l.b16 %v1069
        %v1422 = vunpack.c.h.b16 %v1069
        %v1423 = vunpack.c.l.b16 %v1070
        %v1424 = vunpack.c.h.b16 %v1070
        %v1425 = vunpack.c.l.b16 %v1071
        %v1426 = vunpack.c.h.b16 %v1071
        %v1427 = vunpack.c.l.b16 %v1072
        %v1428 = vunpack.c.h.b16 %v1072
        %v1429 = vunpack.c.l.b16 %v1073
        %v1430 = vunpack.c.l.b16 %v1074
        %v1431 = vunpack.c.h.b16 %v1074
        %v1432 = vunpack.c.l.b16 %v1075
        %v1433 = vunpack.c.h.b16 %v1075
        %v1434 = vunpack.c.l.b16 %v1076
        %v1435 = vunpack.c.h.b16 %v1076
        %v1436 = vunpack.c.l.b16 %v1077
        %v1437 = vunpack.c.h.b16 %v1077
        %v1438 = vunpack.c.l.b16 %v1078
        %v1439 = vunpack.c.l.b16 %v1079
        %v1440 = vunpack.c.h.b16 %v1079
        %v1441 = vunpack.c.l.b16 %v1080
        %v1442 = vunpack.c.h.b16 %v1080
        %v1443 = vunpack.c.l.b16 %v1081
        %v1444 = vunpack.c.h.b16 %v1081
        %v1445 = vunpack.c.l.b16 %v1082
        %v1446 = vunpack.c.h.b16 %v1082
        %v1447 = vunpack.c.l.b16 %v1083
        %v1448 = vunpack.c.l.b16 %v1084
        %v1449 = vunpack.c.h.b16 %v1084
        %v1450 = vunpack.c.l.b16 %v1085
        %v1451 = vunpack.c.h.b16 %v1085
        %v1452 = vunpack.c.l.b16 %v1086
        %v1453 = vunpack.c.h.b16 %v1086
        %v1454 = vunpack.c.l.b16 %v1087
        %v1455 = vunpack.c.h.b16 %v1087
        %v1456 = vunpack.c.l.b16 %v1088
        %v1457 = vunpack.c.l.b16 %v1089
        %v1458 = vunpack.c.h.b16 %v1089
        %v1459 = vunpack.c.l.b16 %v1090
        %v1460 = vunpack.c.h.b16 %v1090
        %v1461 = vunpack.c.l.b16 %v1091
        %v1462 = vunpack.c.h.b16 %v1091
        %v1463 = vunpack.c.l.b16 %v1092
        %v1464 = vunpack.c.h.b16 %v1092
        %v1465 = vunpack.c.l.b16 %v1093
        %v1466 = vunpack.c.l.b16 %v1094
        %v1467 = vunpack.c.h.b16 %v1094
        %v1468 = vunpack.c.l.b16 %v1095
        %v1469 = vunpack.c.h.b16 %v1095
        %v1470 = vunpack.c.l.b16 %v1096
        %v1471 = vunpack.c.h.b16 %v1096
        %v1472 = vunpack.c.l.b16 %v1097
        %v1473 = vunpack.c.h.b16 %v1097
        %v1474 = vunpack.c.l.b16 %v1098
        %v1475 = vunpack.c.l.b16 %v1099
        %v1476 = vunpack.c.h.b16 %v1099
        %v1477 = vunpack.c.l.b16 %v1100
        %v1478 = vunpack.c.h.b16 %v1100
        %v1479 = vunpack.c.l.b16 %v1101
        %v1480 = vunpack.c.h.b16 %v1101
        %v1481 = vunpack.c.l.b16 %v1102
        %v1482 = vunpack.c.h.b16 %v1102
        %v1483 = vunpack.c.l.b16 %v1103
        %v1484 = vunpack.c.l.b16 %v1104
        %v1485 = vunpack.c.h.b16 %v1104
        %v1486 = vunpack.c.l.b16 %v1105
        %v1487 = vunpack.c.h.b16 %v1105
        %v1488 = vunpack.c.l.b16 %v1106
        %v1489 = vunpack.c.h.b16 %v1106
        %v1490 = vunpack.c.l.b16 %v1107
        %v1491 = vunpack.c.h.b16 %v1107
        %v1492 = vunpack.c.l.b16 %v1108
        %v1493 = vunpack.c.l.b16 %v1109
        %v1494 = vunpack.c.h.b16 %v1109
        %v1495 = vunpack.c.l.b16 %v1110
        %v1496 = vunpack.c.h.b16 %v1110
        %v1497 = vunpack.c.l.b16 %v1111
        %v1498 = vunpack.c.h.b16 %v1111
        %v1499 = vunpack.c.l.b16 %v1112
        %v1500 = vunpack.c.h.b16 %v1112
        %v1501 = vunpack.c.l.b16 %v1113
        %v1502 = vunpack.c.l.b16 %v1114
        %v1503 = vunpack.c.h.b16 %v1114
        %v1504 = vunpack.c.l.b16 %v1115
        %v1505 = vunpack.c.h.b16 %v1115
        %v1506 = vunpack.c.l.b16 %v1116
        %v1507 = vunpack.c.h.b16 %v1116
        %v1508 = vunpack.c.l.b16 %v1117
        %v1509 = vunpack.c.h.b16 %v1117
        %v1510 = vunpack.c.l.b16 %v1118
        %v1511 = vunpack.c.l.b16 %v1119
        %v1512 = vunpack.c.h.b16 %v1119
        %v1513 = vunpack.c.l.b16 %v1120
        %v1514 = vunpack.c.h.b16 %v1120
        %v1515 = vunpack.c.l.b16 %v1121
        %v1516 = vunpack.c.h.b16 %v1121
        %v1517 = vunpack.c.l.b16 %v1122
        %v1518 = vunpack.c.h.b16 %v1122
        %v1519 = vunpack.c.l.b16 %v1123
        %v1520 = vunpack.c.l.b16 %v1124
        %v1521 = vunpack.c.h.b16 %v1124
        %v1522 = vunpack.c.l.b16 %v1125
        %v1523 = vunpack.c.h.b16 %v1125
        %v1524 = vunpack.c.l.b16 %v1126
        %v1525 = vunpack.c.h.b16 %v1126
        %v1526 = vunpack.c.l.b16 %v1127
        %v1527 = vunpack.c.h.b16 %v1127
        %v1528 = vunpack.c.l.b16 %v1128
        %v1529 = vunpack.c.l.b16 %v1129
        %v1530 = vunpack.c.h.b16 %v1129
        %v1531 = vunpack.c.l.b16 %v1130
        %v1532 = vunpack.c.h.b16 %v1130
        %v1533 = vunpack.c.l.b16 %v1131
        %v1534 = vunpack.c.h.b16 %v1131
        %v1535 = vunpack.c.l.b16 %v1132
        %v1536 = vunpack.c.h.b16 %v1132
        %v1537 = vunpack.c.l.b16 %v1133
        %v1538 = vunpack.c.l.b16 %v1134
        %v1539 = vunpack.c.h.b16 %v1134
        %v1540 = vunpack.c.l.b16 %v1135
        %v1541 = vunpack.c.h.b16 %v1135
        %v1542 = vunpack.c.l.b16 %v1136
        %v1543 = vunpack.c.h.b16 %v1136
        %v1544 = vunpack.c.l.b16 %v1137
        %v1545 = vunpack.c.h.b16 %v1137
        %v1546 = vunpack.c.l.b16 %v1138
        %v1547 = vunpack.c.l.b16 %v1139
        %v1548 = vunpack.c.h.b16 %v1139
        %v1549 = vunpack.c.l.b16 %v1140
        %v1550 = vunpack.c.h.b16 %v1140
        %v1551 = vunpack.c.l.b16 %v1141
        %v1552 = vunpack.c.h.b16 %v1141
        %v1553 = vunpack.c.l.b16 %v1142
        %v1554 = vunpack.c.h.b16 %v1142
        %v1555 = vunpack.c.l.b16 %v1143
        %v1556 = vunpack.c.l.b16 %v1144
        %v1557 = vunpack.c.h.b16 %v1144
        %v1558 = vunpack.c.l.b16 %v1145
        %v1559 = vunpack.c.h.b16 %v1145
        %v1560 = vunpack.c.l.b16 %v1146
        %v1561 = vunpack.c.h.b16 %v1146
        %v1562 = vunpack.c.l.b16 %v1147
        %v1563 = vunpack.c.h.b16 %v1147
        %v1564 = vunpack.c.l.b16 %v1148
        %v1565 = vunpack.c.l.b16 %v1149
        %v1566 = vunpack.c.h.b16 %v1149
        %v1567 = vunpack.c.l.b16 %v1150
        %v1568 = vunpack.c.h.b16 %v1150
        %v1569 = vunpack.c.l.b16 %v1151
        %v1570 = vunpack.c.h.b16 %v1151
        %v1571 = vunpack.c.l.b16 %v1152
        %v1572 = vunpack.c.h.b16 %v1152
        %v1573 = vunpack.c.l.b16 %v1153
        %v1574 = vunpack.c.l.b16 %v1154
        %v1575 = vunpack.c.h.b16 %v1154
        %v1576 = vunpack.c.l.b16 %v1155
        %v1577 = vunpack.c.h.b16 %v1155
        %v1578 = vunpack.c.l.b16 %v1156
        %v1579 = vunpack.c.h.b16 %v1156
        %v1580 = vunpack.c.l.b16 %v1157
        %v1581 = vunpack.c.h.b16 %v1157
        %v1582 = vunpack.c.l.b16 %v1158
        %v1583 = vunpack.c.l.b16 %v1159
        %v1584 = vunpack.c.h.b16 %v1159
        %v1585 = vunpack.c.l.b16 %v1160
        %v1586 = vunpack.c.h.b16 %v1160
        %v1587 = vunpack.c.l.b16 %v1161
        %v1588 = vunpack.c.h.b16 %v1161
        %v1589 = vunpack.c.l.b16 %v1162
        %v1590 = vunpack.c.h.b16 %v1162
        %v1591 = vunpack.c.l.b16 %v1163
        %v1592 = vunpack.c.l.b16 %v1164
        %v1593 = vunpack.c.h.b16 %v1164
        %v1594 = vunpack.c.l.b16 %v1165
        %v1595 = vunpack.c.h.b16 %v1165
        %v1596 = vunpack.c.l.b16 %v1166
        %v1597 = vunpack.c.h.b16 %v1166
        %v1598 = vunpack.c.l.b16 %v1167
        %v1599 = vunpack.c.h.b16 %v1167
        %v1600 = vunpack.c.l.b16 %v1168
        %v1601 = vunpack.c.l.b16 %v1169
        %v1602 = vunpack.c.h.b16 %v1169
        %v1603 = vunpack.c.l.b16 %v1170
        %v1604 = vunpack.c.h.b16 %v1170
        %v1605 = vunpack.c.l.b16 %v1171
        %v1606 = vunpack.c.h.b16 %v1171
        %v1607 = vunpack.c.l.b16 %v1172
        %v1608 = vunpack.c.h.b16 %v1172
        %v1609 = vunpack.c.l.b16 %v1173
        %v1610 = vunpack.c.l.b16 %v1174
        %v1611 = vunpack.c.h.b16 %v1174
        %v1612 = vunpack.c.l.b16 %v1175
        %v1613 = vunpack.c.h.b16 %v1175
        %v1614 = vunpack.c.l.b16 %v1176
        %v1615 = vunpack.c.h.b16 %v1176
        %v1616 = vunpack.c.l.b16 %v1177
        %v1617 = vunpack.c.h.b16 %v1177
        %v1618 = vunpack.c.l.b16 %v1178
        %v1619 = vunpack.c.l.b16 %v1179
        %v1620 = vunpack.c.h.b16 %v1179
        %v1621 = vunpack.c.l.b16 %v1180
        %v1622 = vunpack.c.h.b16 %v1180
        %v1623 = vunpack.c.l.b16 %v1181
        %v1624 = vunpack.c.h.b16 %v1181
        %v1625 = vunpack.c.l.b16 %v1182
        %v1626 = vunpack.c.h.b16 %v1182
        %v1627 = vunpack.c.l.b16 %v1183
        %v1628 = vunpack.c.l.b16 %v1184
        %v1629 = vunpack.c.h.b16 %v1184
        %v1630 = vunpack.c.l.b16 %v1185
        %v1631 = vunpack.c.h.b16 %v1185
        %v1632 = vunpack.c.l.b16 %v1186
        %v1633 = vunpack.c.h.b16 %v1186
        %v1634 = vunpack.c.l.b16 %v1187
        %v1635 = vunpack.c.h.b16 %v1187
        %v1636 = vunpack.c.l.b16 %v1188
        %v1637 = vpack.c.b16 %v1358, %v1349
        %v1638 = vpack.c.b16 %v1359, %v1350
        %v1639 = vpack.c.b16 %v1360, %v1351
        %v1640 = vpack.c.b16 %v1361, %v1352
        %v1641 = vpack.c.b16 %v1362, %v1353
        %v1642 = vpack.c.b16 %v1363, %v1354
        %v1643 = vpack.c.b16 %v1364, %v1355
        %v1644 = vpack.c.b16 %v1365, %v1356
        %v1645 = vpack.c.b16 %v1366, %v1357
        %v1646 = vpack.c.b16 %v1376, %v1367
        %v1647 = vpack.c.b16 %v1377, %v1368
        %v1648 = vpack.c.b16 %v1378, %v1369
        %v1649 = vpack.c.b16 %v1379, %v1370
        %v1650 = vpack.c.b16 %v1380, %v1371
        %v1651 = vpack.c.b16 %v1381, %v1372
        %v1652 = vpack.c.b16 %v1382, %v1373
        %v1653 = vpack.c.b16 %v1383, %v1374
        %v1654 = vpack.c.b16 %v1384, %v1375
        %v1655 = vpack.c.b16 %v1394, %v1385
        %v1656 = vpack.c.b16 %v1395, %v1386
        %v1657 = vpack.c.b16 %v1396, %v1387
        %v1658 = vpack.c.b16 %v1397, %v1388
        %v1659 = vpack.c.b16 %v1398, %v1389
        %v1660 = vpack.c.b16 %v1399, %v1390
        %v1661 = vpack.c.b16 %v1400, %v1391
        %v1662 = vpack.c.b16 %v1401, %v1392
        %v1663 = vpack.c.b16 %v1402, %v1393
        %v1664 = vpack.c.b16 %v1412, %v1403
        %v1665 = vpack.c.b16 %v1413, %v1404
        %v1666 = vpack.c.b16 %v1414, %v1405
        %v1667 = vpack.c.b16 %v1415, %v1406
        %v1668 = vpack.c.b16 %v1416, %v1407
        %v1669 = vpack.c.b16 %v1417, %v1408
        %v1670 = vpack.c.b16 %v1418, %v1409
        %v1671 = vpack.c.b16 %v1419, %v1410
        %v1672 = vpack.c.b16 %v1420, %v1411
        %v1673 = vpack.c.b16 %v1430, %v1421
        %v1674 = vpack.c.b16 %v1431, %v1422
        %v1675 = vpack.c.b16 %v1432, %v1423
        %v1676 = vpack.c.b16 %v1433, %v1424
        %v1677 = vpack.c.b16 %v1434, %v1425
        %v1678 = vpack.c.b16 %v1435, %v1426
        %v1679 = vpack.c.b16 %v1436, %v1427
        %v1680 = vpack.c.b16 %v1437, %v1428
        %v1681 = vpack.c.b16 %v1438, %v1429
        %v1682 = vpack.c.b16 %v1448, %v1439
        %v1683 = vpack.c.b16 %v1449, %v1440
        %v1684 = vpack.c.b16 %v1450, %v1441
        %v1685 = vpack.c.b16 %v1451, %v1442
        %v1686 = vpack.c.b16 %v1452, %v1443
        %v1687 = vpack.c.b16 %v1453, %v1444
        %v1688 = vpack.c.b16 %v1454, %v1445
        %v1689 = vpack.c.b16 %v1455, %v1446
        %v1690 = vpack.c.b16 %v1456, %v1447
        %v1691 = vpack.c.b16 %v1466, %v1457
        %v1692 = vpack.c.b16 %v1467, %v1458
        %v1693 = vpack.c.b16 %v1468, %v1459
        %v1694 = vpack.c.b16 %v1469, %v1460
        %v1695 = vpack.c.b16 %v1470, %v1461
        %v1696 = vpack.c.b16 %v1471, %v1462
        %v1697 = vpack.c.b16 %v1472, %v1463
        %v1698 = vpack.c.b16 %v1473, %v1464
        %v1699 = vpack.c.b16 %v1474, %v1465
        %v1700 = vpack.c.b16 %v1484, %v1475
        %v1701 = vpack.c.b16 %v1485, %v1476
        %v1702 = vpack.c.b16 %v1486, %v1477
        %v1703 = vpack.c.b16 %v1487, %v1478
        %v1704 = vpack.c.b16 %v1488, %v1479
        %v1705 = vpack.c.b16 %v1489, %v1480
        %v1706 = vpack.c.b16 %v1490, %v1481
        %v1707 = vpack.c.b16 %v1491, %v1482
        %v1708 = vpack.c.b16 %v1492, %v1483
        %v1709 = vpack.c.b16 %v1502, %v1493
        %v1710 = vpack.c.b16 %v1503, %v1494
        %v1711 = vpack.c.b16 %v1504, %v1495
        %v1712 = vpack.c.b16 %v1505, %v1496
        %v1713 = vpack.c.b16 %v1506, %v1497
        %v1714 = vpack.c.b16 %v1507, %v1498
        %v1715 = vpack.c.b16 %v1508, %v1499
        %v1716 = vpack.c.b16 %v1509, %v1500
        %v1717 = vpack.c.b16 %v1510, %v1501
        %v1718 = vpack.c.b16 %v1520, %v1511
        %v1719 = vpack.c.b16 %v1521, %v1512
        %v1720 = vpack.c.b16 %v1522, %v1513
        %v1721 = vpack.c.b16 %v1523, %v1514
        %v1722 = vpack.c.b16 %v1524, %v1515
        %v1723 = vpack.c.b16 %v1525, %v1516
        %v1724 = vpack.c.b16 %v1526, %v1517
        %v1725 = vpack.c.b16 %v1527, %v1518
        %v1726 = vpack.c.b16 %v1528, %v1519
        %v1727 = vpack.c.b16 %v1538, %v1529
        %v1728 = vpack.c.b16 %v1539, %v1530
        %v1729 = vpack.c.b16 %v1540, %v1531
        %v1730 = vpack.c.b16 %v1541, %v1532
        %v1731 = vpack.c.b16 %v1542, %v1533
        %v1732 = vpack.c.b16 %v1543, %v1534
        %v1733 = vpack.c.b16 %v1544, %v1535
        %v1734 = vpack.c.b16 %v1545, %v1536
        %v1735 = vpack.c.b16 %v1546, %v1537
        %v1736 = vpack.c.b16 %v1556, %v1547
        %v1737 = vpack.c.b16 %v1557, %v1548
        %v1738 = vpack.c.b16 %v1558, %v1549
        %v1739 = vpack.c.b16 %v1559, %v1550
        %v1740 = vpack.c.b16 %v1560, %v1551
        %v1741 = vpack.c.b16 %v1561, %v1552
        %v1742 = vpack.c.b16 %v1562, %v1553
        %v1743 = vpack.c.b16 %v1563, %v1554
        %v1744 = vpack.c.b16 %v1564, %v1555
        %v1745 = vpack.c.b16 %v1574, %v1565
        %v1746 = vpack.c.b16 %v1575, %v1566
        %v1747 = vpack.c.b16 %v1576, %v1567
        %v1748 = vpack.c.b16 %v1577, %v1568
        %v1749 = vpack.c.b16 %v1578, %v1569
        %v1750 = vpack.c.b16 %v1579, %v1570
        %v1751 = vpack.c.b16 %v1580, %v1571
        %v1752 = vpack.c.b16 %v1581, %v1572
        %v1753 = vpack.c.b16 %v1582, %v1573
        %v1754 = vpack.c.b16 %v1592, %v1583
        %v1755 = vpack.c.b16 %v1593, %v1584
        %v1756 = vpack.c.b16 %v1594, %v1585
        %v1757 = vpack.c.b16 %v1595, %v1586
        %v1758 = vpack.c.b16 %v1596, %v1587
        %v1759 = vpack.c.b16 %v1597, %v1588
        %v1760 = vpack.c.b16 %v1598, %v1589
        %v1761 = vpack.c.b16 %v1599, %v1590
        %v1762 = vpack.c.b16 %v1600, %v1591
        %v1763 = vpack.c.b16 %v1610, %v1601
        %v1764 = vpack.c.b16 %v1611, %v1602
        %v1765 = vpack.c.b16 %v1612, %v1603
        %v1766 = vpack.c.b16 %v1613, %v1604
        %v1767 = vpack.c.b16 %v1614, %v1605
        %v1768 = vpack.c.b16 %v1615, %v1606
        %v1769 = vpack.c.b16 %v1616, %v1607
        %v1770 = vpack.c.b16 %v1617, %v1608
        %v1771 = vpack.c.b16 %v1618, %v1609
        %v1772 = vpack.c.b16 %v1628, %v1619
        %v1773 = vpack.c.b16 %v1629, %v1620
        %v1774 = vpack.c.b16 %v1630, %v1621
        %v1775 = vpack.c.b16 %v1631, %v1622
        %v1776 = vpack.c.b16 %v1632, %v1623
        %v1777 = vpack.c.b16 %v1633, %v1624
        %v1778 = vpack.c.b16 %v1634, %v1625
        %v1779 = vpack.c.b16 %v1635, %v1626
        %v1780 = vpack.c.b16 %v1636, %v1627
        %1925 = vmatpush.bf16.msra.mxu0 %v1700
        %1926 = vmatpush.bf16.msra.mxu0 %v1691
        %1927 = vmatpush.bf16.msra.mxu0 %v1682
        %1928 = vmatpush.bf16.msra.mxu0 %v1673
        %1929 = vmatpush.bf16.msra.mxu0 %v1664
        %1930 = vmatpush.bf16.msra.mxu0 %v1655
        %1931 = vmatpush.bf16.msra.mxu0 %v1646
        %1932 = vmatpush.bf16.msra.mxu0 %v1637
        %1933 = vmatmul.bf16.gmra.mxu0 %v1027
        %v1934 = vpop.f32.mrf.mxu0
        %v1935 = vadd.f32 0.0, %v1934
        %v1936 = vpop.f32.mrf.mxu0
        %v1937 = vadd.f32 0.0, %v1936
        %1938 = vdwg.mxu0
        %1939 = vmatpush.bf16.msra.mxu0 %v1772
        %1940 = vmatpush.bf16.msra.mxu0 %v1763
        %1941 = vmatpush.bf16.msra.mxu0 %v1754
        %1942 = vmatpush.bf16.msra.mxu0 %v1745
        %1943 = vmatpush.bf16.msra.mxu0 %v1736
        %1944 = vmatpush.bf16.msra.mxu0 %v1727
        %1945 = vmatpush.bf16.msra.mxu0 %v1718
        %1946 = vmatpush.bf16.msra.mxu0 %v1709
        %1947 = vmatmul.bf16.gmra.mxu0 %v1028
        %v1948 = vpop.f32.mrf.mxu0
        %v1949 = vadd.f32 %v1935, %v1948
        %v1950 = vpop.f32.mrf.mxu0
        %v1951 = vadd.f32 %v1937, %v1950
        %1952 = vdwg.mxu0
        %1953 = vmatpush.bf16.msra.mxu0 %v1701
        %1954 = vmatpush.bf16.msra.mxu0 %v1692
        %1955 = vmatpush.bf16.msra.mxu0 %v1683
        %1956 = vmatpush.bf16.msra.mxu0 %v1674
        %1957 = vmatpush.bf16.msra.mxu0 %v1665
        %1958 = vmatpush.bf16.msra.mxu0 %v1656
        %1959 = vmatpush.bf16.msra.mxu0 %v1647
        %1960 = vmatpush.bf16.msra.mxu0 %v1638
        %1961 = vmatmul.bf16.gmra.mxu0 %v1027
        %v1962 = vpop.f32.mrf.mxu0
        %v1963 = vadd.f32 0.0, %v1962
        %v1964 = vpop.f32.mrf.mxu0
        %v1965 = vadd.f32 0.0, %v1964
        %1966 = vdwg.mxu0
        %1967 = vmatpush.bf16.msra.mxu0 %v1773
        %1968 = vmatpush.bf16.msra.mxu0 %v1764
        %1969 = vmatpush.bf16.msra.mxu0 %v1755
        %1970 = vmatpush.bf16.msra.mxu0 %v1746
        %1971 = vmatpush.bf16.msra.mxu0 %v1737
        %1972 = vmatpush.bf16.msra.mxu0 %v1728
        %1973 = vmatpush.bf16.msra.mxu0 %v1719
        %1974 = vmatpush.bf16.msra.mxu0 %v1710
        %1975 = vmatmul.bf16.gmra.mxu0 %v1028
        %v1976 = vpop.f32.mrf.mxu0
        %v1977 = vadd.f32 %v1963, %v1976
        %v1978 = vpop.f32.mrf.mxu0
        %v1979 = vadd.f32 %v1965, %v1978
        %1980 = vdwg.mxu0
        %1981 = vmatpush.bf16.msra.mxu0 %v1702
        %1982 = vmatpush.bf16.msra.mxu0 %v1693
        %1983 = vmatpush.bf16.msra.mxu0 %v1684
        %1984 = vmatpush.bf16.msra.mxu0 %v1675
        %1985 = vmatpush.bf16.msra.mxu0 %v1666
        %1986 = vmatpush.bf16.msra.mxu0 %v1657
        %1987 = vmatpush.bf16.msra.mxu0 %v1648
        %1988 = vmatpush.bf16.msra.mxu0 %v1639
        %1989 = vmatmul.bf16.gmra.mxu0 %v1027
        %v1990 = vpop.f32.mrf.mxu0
        %v1991 = vadd.f32 0.0, %v1990
        %v1992 = vpop.f32.mrf.mxu0
        %v1993 = vadd.f32 0.0, %v1992
        %1994 = vdwg.mxu0
        %1995 = vmatpush.bf16.msra.mxu0 %v1774
        %1996 = vmatpush.bf16.msra.mxu0 %v1765
        %1997 = vmatpush.bf16.msra.mxu0 %v1756
        %1998 = vmatpush.bf16.msra.mxu0 %v1747
        %1999 = vmatpush.bf16.msra.mxu0 %v1738
        %2000 = vmatpush.bf16.msra.mxu0 %v1729
        %2001 = vmatpush.bf16.msra.mxu0 %v1720
        %2002 = vmatpush.bf16.msra.mxu0 %v1711
        %2003 = vmatmul.bf16.gmra.mxu0 %v1028
        %v2004 = vpop.f32.mrf.mxu0
        %v2005 = vadd.f32 %v1991, %v2004
        %v2006 = vpop.f32.mrf.mxu0
        %v2007 = vadd.f32 %v1993, %v2006
        %2008 = vdwg.mxu0
        %2009 = vmatpush.bf16.msra.mxu0 %v1703
        %2010 = vmatpush.bf16.msra.mxu0 %v1694
        %2011 = vmatpush.bf16.msra.mxu0 %v1685
        %2012 = vmatpush.bf16.msra.mxu0 %v1676
        %2013 = vmatpush.bf16.msra.mxu0 %v1667
        %2014 = vmatpush.bf16.msra.mxu0 %v1658
        %2015 = vmatpush.bf16.msra.mxu0 %v1649
        %2016 = vmatpush.bf16.msra.mxu0 %v1640
        %2017 = vmatmul.bf16.gmra.mxu0 %v1027
        %v2018 = vpop.f32.mrf.mxu0
        %v2019 = vadd.f32 0.0, %v2018
        %v2020 = vpop.f32.mrf.mxu0
        %v2021 = vadd.f32 0.0, %v2020
        %2022 = vdwg.mxu0
        %2023 = vmatpush.bf16.msra.mxu0 %v1775
        %2024 = vmatpush.bf16.msra.mxu0 %v1766
        %2025 = vmatpush.bf16.msra.mxu0 %v1757
        %2026 = vmatpush.bf16.msra.mxu0 %v1748
        %2027 = vmatpush.bf16.msra.mxu0 %v1739
        %2028 = vmatpush.bf16.msra.mxu0 %v1730
        %2029 = vmatpush.bf16.msra.mxu0 %v1721
        %2030 = vmatpush.bf16.msra.mxu0 %v1712
        %2031 = vmatmul.bf16.gmra.mxu0 %v1028
        %v2032 = vpop.f32.mrf.mxu0
        %v2033 = vadd.f32 %v2019, %v2032
        %v2034 = vpop.f32.mrf.mxu0
        %v2035 = vadd.f32 %v2021, %v2034
        %2036 = vdwg.mxu0
        %2037 = vmatpush.bf16.msra.mxu0 %v1704
        %2038 = vmatpush.bf16.msra.mxu0 %v1695
        %2039 = vmatpush.bf16.msra.mxu0 %v1686
        %2040 = vmatpush.bf16.msra.mxu0 %v1677
        %2041 = vmatpush.bf16.msra.mxu0 %v1668
        %2042 = vmatpush.bf16.msra.mxu0 %v1659
        %2043 = vmatpush.bf16.msra.mxu0 %v1650
        %2044 = vmatpush.bf16.msra.mxu0 %v1641
        %2045 = vmatmul.bf16.gmra.mxu0 %v1027
        %v2046 = vpop.f32.mrf.mxu0
        %v2047 = vadd.f32 0.0, %v2046
        %v2048 = vpop.f32.mrf.mxu0
        %v2049 = vadd.f32 0.0, %v2048
        %2050 = vdwg.mxu0
        %2051 = vmatpush.bf16.msra.mxu0 %v1776
        %2052 = vmatpush.bf16.msra.mxu0 %v1767
        %2053 = vmatpush.bf16.msra.mxu0 %v1758
        %2054 = vmatpush.bf16.msra.mxu0 %v1749
        %2055 = vmatpush.bf16.msra.mxu0 %v1740
        %2056 = vmatpush.bf16.msra.mxu0 %v1731
        %2057 = vmatpush.bf16.msra.mxu0 %v1722
        %2058 = vmatpush.bf16.msra.mxu0 %v1713
        %2059 = vmatmul.bf16.gmra.mxu0 %v1028
        %v2060 = vpop.f32.mrf.mxu0
        %v2061 = vadd.f32 %v2047, %v2060
        %v2062 = vpop.f32.mrf.mxu0
        %v2063 = vadd.f32 %v2049, %v2062
        %2064 = vdwg.mxu0
        %2065 = vmatpush.bf16.msra.mxu0 %v1705
        %2066 = vmatpush.bf16.msra.mxu0 %v1696
        %2067 = vmatpush.bf16.msra.mxu0 %v1687
        %2068 = vmatpush.bf16.msra.mxu0 %v1678
        %2069 = vmatpush.bf16.msra.mxu0 %v1669
        %2070 = vmatpush.bf16.msra.mxu0 %v1660
        %2071 = vmatpush.bf16.msra.mxu0 %v1651
        %2072 = vmatpush.bf16.msra.mxu0 %v1642
        %2073 = vmatmul.bf16.gmra.mxu0 %v1027
        %v2074 = vpop.f32.mrf.mxu0
        %v2075 = vadd.f32 0.0, %v2074
        %v2076 = vpop.f32.mrf.mxu0
        %v2077 = vadd.f32 0.0, %v2076
        %2078 = vdwg.mxu0
        %2079 = vmatpush.bf16.msra.mxu0 %v1777
        %2080 = vmatpush.bf16.msra.mxu0 %v1768
        %2081 = vmatpush.bf16.msra.mxu0 %v1759
        %2082 = vmatpush.bf16.msra.mxu0 %v1750
        %2083 = vmatpush.bf16.msra.mxu0 %v1741
        %2084 = vmatpush.bf16.msra.mxu0 %v1732
        %2085 = vmatpush.bf16.msra.mxu0 %v1723
        %2086 = vmatpush.bf16.msra.mxu0 %v1714
        %2087 = vmatmul.bf16.gmra.mxu0 %v1028
        %v2088 = vpop.f32.mrf.mxu0
        %v2089 = vadd.f32 %v2075, %v2088
        %v2090 = vpop.f32.mrf.mxu0
        %v2091 = vadd.f32 %v2077, %v2090
        %2092 = vdwg.mxu0
        %2093 = vmatpush.bf16.msra.mxu0 %v1706
        %2094 = vmatpush.bf16.msra.mxu0 %v1697
        %2095 = vmatpush.bf16.msra.mxu0 %v1688
        %2096 = vmatpush.bf16.msra.mxu0 %v1679
        %2097 = vmatpush.bf16.msra.mxu0 %v1670
        %2098 = vmatpush.bf16.msra.mxu0 %v1661
        %2099 = vmatpush.bf16.msra.mxu0 %v1652
        %2100 = vmatpush.bf16.msra.mxu0 %v1643
        %2101 = vmatmul.bf16.gmra.mxu0 %v1027
        %v2102 = vpop.f32.mrf.mxu0
        %v2103 = vadd.f32 0.0, %v2102
        %v2104 = vpop.f32.mrf.mxu0
        %v2105 = vadd.f32 0.0, %v2104
        %2106 = vdwg.mxu0
        %2107 = vmatpush.bf16.msra.mxu0 %v1778
        %2108 = vmatpush.bf16.msra.mxu0 %v1769
        %2109 = vmatpush.bf16.msra.mxu0 %v1760
        %2110 = vmatpush.bf16.msra.mxu0 %v1751
        %2111 = vmatpush.bf16.msra.mxu0 %v1742
        %2112 = vmatpush.bf16.msra.mxu0 %v1733
        %2113 = vmatpush.bf16.msra.mxu0 %v1724
        %2114 = vmatpush.bf16.msra.mxu0 %v1715
        %2115 = vmatmul.bf16.gmra.mxu0 %v1028
        %v2116 = vpop.f32.mrf.mxu0
        %v2117 = vadd.f32 %v2103, %v2116
        %v2118 = vpop.f32.mrf.mxu0
        %v2119 = vadd.f32 %v2105, %v2118
        %2120 = vdwg.mxu0
        %2121 = vmatpush.bf16.msra.mxu0 %v1707
        %2122 = vmatpush.bf16.msra.mxu0 %v1698
        %2123 = vmatpush.bf16.msra.mxu0 %v1689
        %2124 = vmatpush.bf16.msra.mxu0 %v1680
        %2125 = vmatpush.bf16.msra.mxu0 %v1671
        %2126 = vmatpush.bf16.msra.mxu0 %v1662
        %2127 = vmatpush.bf16.msra.mxu0 %v1653
        %2128 = vmatpush.bf16.msra.mxu0 %v1644
        %2129 = vmatmul.bf16.gmra.mxu0 %v1027
        %v2130 = vpop.f32.mrf.mxu0
        %v2131 = vadd.f32 0.0, %v2130
        %v2132 = vpop.f32.mrf.mxu0
        %v2133 = vadd.f32 0.0, %v2132
        %2134 = vdwg.mxu0
        %2135 = vmatpush.bf16.msra.mxu0 %v1779
        %2136 = vmatpush.bf16.msra.mxu0 %v1770
        %2137 = vmatpush.bf16.msra.mxu0 %v1761
        %2138 = vmatpush.bf16.msra.mxu0 %v1752
        %2139 = vmatpush.bf16.msra.mxu0 %v1743
        %2140 = vmatpush.bf16.msra.mxu0 %v1734
        %2141 = vmatpush.bf16.msra.mxu0 %v1725
        %2142 = vmatpush.bf16.msra.mxu0 %v1716
        %2143 = vmatmul.bf16.gmra.mxu0 %v1028
        %v2144 = vpop.f32.mrf.mxu0
        %v2145 = vadd.f32 %v2131, %v2144
        %v2146 = vpop.f32.mrf.mxu0
        %v2147 = vadd.f32 %v2133, %v2146
        %2148 = vdwg.mxu0
        %2149 = vmatpush.bf16.msra.mxu0 %v1708
        %2150 = vmatpush.bf16.msra.mxu0 %v1699
        %2151 = vmatpush.bf16.msra.mxu0 %v1690
        %2152 = vmatpush.bf16.msra.mxu0 %v1681
        %2153 = vmatpush.bf16.msra.mxu0 %v1672
        %2154 = vmatpush.bf16.msra.mxu0 %v1663
        %2155 = vmatpush.bf16.msra.mxu0 %v1654
        %2156 = vmatpush.bf16.msra.mxu0 %v1645
        %2157 = vmatmul.bf16.gmra.mxu0 %v1027
        %v2158 = vpop.f32.mrf.mxu0
        %v2159 = vadd.f32 0.0, %v2158
        %v2160 = vpop.f32.mrf.mxu0
        %v2161 = vadd.f32 0.0, %v2160
        %2162 = vdwg.mxu0
        %2163 = vmatpush.bf16.msra.mxu0 %v1780
        %2164 = vmatpush.bf16.msra.mxu0 %v1771
        %2165 = vmatpush.bf16.msra.mxu0 %v1762
        %2166 = vmatpush.bf16.msra.mxu0 %v1753
        %2167 = vmatpush.bf16.msra.mxu0 %v1744
        %2168 = vmatpush.bf16.msra.mxu0 %v1735
        %2169 = vmatpush.bf16.msra.mxu0 %v1726
        %2170 = vmatpush.bf16.msra.mxu0 %v1717
        %2171 = vmatmul.bf16.gmra.mxu0 %v1028
        %v2172 = vpop.f32.mrf.mxu0
        %v2173 = vadd.f32 %v2159, %v2172
        %v2174 = vpop.f32.mrf.mxu0
        %v2175 = vadd.f32 %v2161, %v2174
        %2176 = vdwg.mxu0
        %2177 = vmatpush.xpose.msra.mxu0 0.0
        %2178 = vmatpush.xpose.msra.mxu0 0.0
        %2179 = vmatpush.xpose.msra.mxu0 0.0
        %2180 = vmatpush.xpose.msra.mxu0 0.0
        %2181 = vmatpush.xpose.msra.mxu0 0.0
        %2182 = vmatpush.xpose.msra.mxu0 0.0
        %2183 = vmatpush.xpose.msra.mxu0 0.0
        %2184 = vmatpush.xpose.msra.mxu0 0.0
        %2185 = vmatpush.xpose.msra.mxu0 0.0
        %2186 = vmatpush.xpose.msra.mxu0 0.0
        %2187 = vmatpush.xpose.msra.mxu0 0.0
        %2188 = vmatpush.xpose.msra.mxu0 0.0
        %2189 = vmatpush.xpose.msra.mxu0 0.0
        %2190 = vmatpush.xpose.msra.mxu0 0.0
        %2191 = vmatpush.xpose.msra.mxu0 %v2035
        %2192 = vmatpush.xpose.msra.mxu0 %v2033
        %2193 = vmatmul.f32.gmra.mxu0 %v1949
        %v2194 = vpop.f32.mrf.mxu0
        %v2195 = vadd.f32 0.0, %v2194
        %2196 = vmatmul.f32.gmra.mxu0 %v1951
        %v2197 = vpop.f32.mrf.mxu0
        %v2198 = vadd.f32 0.0, %v2197
        %2199 = vdwg.mxu0
        %2200 = vmatpush.xpose.msra.mxu0 0.0
        %2201 = vmatpush.xpose.msra.mxu0 0.0
        %2202 = vmatpush.xpose.msra.mxu0 0.0
        %2203 = vmatpush.xpose.msra.mxu0 0.0
        %2204 = vmatpush.xpose.msra.mxu0 0.0
        %2205 = vmatpush.xpose.msra.mxu0 0.0
        %2206 = vmatpush.xpose.msra.mxu0 0.0
        %2207 = vmatpush.xpose.msra.mxu0 0.0
        %2208 = vmatpush.xpose.msra.mxu0 0.0
        %2209 = vmatpush.xpose.msra.mxu0 0.0
        %2210 = vmatpush.xpose.msra.mxu0 0.0
        %2211 = vmatpush.xpose.msra.mxu0 0.0
        %2212 = vmatpush.xpose.msra.mxu0 0.0
        %2213 = vmatpush.xpose.msra.mxu0 0.0
        %2214 = vmatpush.xpose.msra.mxu0 %v2063
        %2215 = vmatpush.xpose.msra.mxu0 %v2061
        %2216 = vmatmul.f32.gmra.mxu0 %v1977
        %v2217 = vpop.f32.mrf.mxu0
        %v2218 = vadd.f32 0.0, %v2217
        %2219 = vmatmul.f32.gmra.mxu0 %v1979
        %v2220 = vpop.f32.mrf.mxu0
        %v2221 = vadd.f32 0.0, %v2220
        %2222 = vdwg.mxu0
        %2223 = vmatpush.xpose.msra.mxu0 0.0
        %2224 = vmatpush.xpose.msra.mxu0 0.0
        %2225 = vmatpush.xpose.msra.mxu0 0.0
        %2226 = vmatpush.xpose.msra.mxu0 0.0
        %2227 = vmatpush.xpose.msra.mxu0 0.0
        %2228 = vmatpush.xpose.msra.mxu0 0.0
        %2229 = vmatpush.xpose.msra.mxu0 0.0
        %2230 = vmatpush.xpose.msra.mxu0 0.0
        %2231 = vmatpush.xpose.msra.mxu0 0.0
        %2232 = vmatpush.xpose.msra.mxu0 0.0
        %2233 = vmatpush.xpose.msra.mxu0 0.0
        %2234 = vmatpush.xpose.msra.mxu0 0.0
        %2235 = vmatpush.xpose.msra.mxu0 0.0
        %2236 = vmatpush.xpose.msra.mxu0 0.0
        %2237 = vmatpush.xpose.msra.mxu0 %v2091
        %2238 = vmatpush.xpose.msra.mxu0 %v2089
        %2239 = vmatmul.f32.gmra.mxu0 %v2005
        %v2240 = vpop.f32.mrf.mxu0
        %v2241 = vadd.f32 0.0, %v2240
        %2242 = vmatmul.f32.gmra.mxu0 %v2007
        %v2243 = vpop.f32.mrf.mxu0
        %v2244 = vadd.f32 0.0, %v2243
        %2245 = vdwg.mxu0
        %v2246 = vld [vmem:[%s3] sm:$0xff]
        %v2247 = vld [vmem:[%s3 + $0x8] sm:$0xff]
        %v2248 = vld [vmem:[%s3 + $0x10] sm:$0xff]
        %v2249 = vld [vmem:[%s3 + $0x18] sm:$0xff]
        %v2250 = vld [vmem:[%s3 + $0x20] sm:$0xff]
        %v2251 = vld [vmem:[%s3 + $0x28] sm:$0xff]
        %v2252 = vadd.f32 %v2195, %v2246
        %v2253 = vadd.f32 %v2198, %v2247
        %v2254 = vadd.f32 %v2218, %v2248
        %v2255 = vadd.f32 %v2221, %v2249
        %v2256 = vadd.f32 %v2241, %v2250
        %v2257 = vadd.f32 %v2244, %v2251
        %vm2258 = vcmask 130048
        %v2259 = vsel %vm2258, %v2252, -inf
        %2260 = vmax.xlane.f32.xlu0 %v2259
        %v2261 = vpop.xlane.xlu0 %2260
        %v2262 = vsel %vm2258, %v2253, -inf
        %2263 = vmax.xlane.f32.xlu0 %v2262
        %v2264 = vpop.xlane.xlu0 %2263
        %v2265 = vsel %vm2258, %v2254, -inf
        %2266 = vmax.xlane.f32.xlu0 %v2265
        %v2267 = vpop.xlane.xlu0 %2266
        %v2268 = vsel %vm2258, %v2255, -inf
        %2269 = vmax.xlane.f32.xlu0 %v2268
        %v2270 = vpop.xlane.xlu0 %2269
        %v2271 = vsel %vm2258, %v2256, -inf
        %2272 = vmax.xlane.f32.xlu0 %v2271
        %v2273 = vpop.xlane.xlu0 %2272
        %v2274 = vsel %vm2258, %v2257, -inf
        %2275 = vmax.xlane.f32.xlu0 %v2274
        %v2276 = vpop.xlane.xlu0 %2275
        %v2277 = vsub.f32 %v2252, %v2261
        %v2278 = vsub.f32 %v2253, %v2264
        %v2279 = vsub.f32 %v2254, %v2267
        %v2280 = vsub.f32 %v2255, %v2270
        %v2281 = vsub.f32 %v2256, %v2273
        %v2282 = vsub.f32 %v2257, %v2276
        %v2283 = vmul.f32 %v2277, 1.442695
        %v2284 = vpow.pop %v2283
        %v2285 = vmul.f32 %v2278, 1.442695
        %v2286 = vpow.pop %v2285
        %v2287 = vmul.f32 %v2279, 1.442695
        %v2288 = vpow.pop %v2287
        %v2289 = vmul.f32 %v2280, 1.442695
        %v2290 = vpow.pop %v2289
        %v2291 = vmul.f32 %v2281, 1.442695
        %v2292 = vpow.pop %v2291
        %v2293 = vmul.f32 %v2282, 1.442695
        %v2294 = vpow.pop %v2293
        %v2295 = vsel %vm2258, %v2284, 0.0
        %2296 = vadd.xlane.f32.xlu0 %v2295
        %v2297 = vpop.xlane.xlu0 %2296
        %v2298 = vsel %vm2258, %v2286, 0.0
        %2299 = vadd.xlane.f32.xlu0 %v2298
        %v2300 = vpop.xlane.xlu0 %2299
        %v2301 = vsel %vm2258, %v2288, 0.0
        %2302 = vadd.xlane.f32.xlu0 %v2301
        %v2303 = vpop.xlane.xlu0 %2302
        %v2304 = vsel %vm2258, %v2290, 0.0
        %2305 = vadd.xlane.f32.xlu0 %v2304
        %v2306 = vpop.xlane.xlu0 %2305
        %v2307 = vsel %vm2258, %v2292, 0.0
        %2308 = vadd.xlane.f32.xlu0 %v2307
        %v2309 = vpop.xlane.xlu0 %2308
        %v2310 = vsel %vm2258, %v2294, 0.0
        %2311 = vadd.xlane.f32.xlu0 %v2310
        %v2312 = vpop.xlane.xlu0 %2311
        %v2313 = vrcp.pop %v2297
        %v2314 = vrcp.pop %v2300
        %v2315 = vrcp.pop %v2303
        %v2316 = vrcp.pop %v2306
        %v2317 = vrcp.pop %v2309
        %v2318 = vrcp.pop %v2312
        %v2319 = vmul.f32 %v2284, %v2313
        %v2320 = vmul.f32 %v2286, %v2314
        %v2321 = vmul.f32 %v2288, %v2315
        %v2322 = vmul.f32 %v2290, %v2316
        %v2323 = vmul.f32 %v2292, %v2317
        %v2324 = vmul.f32 %v2294, %v2318
        %v2326 = vsel %vm2258, %v2319, 0
        %v2329 = vsel %vm2258, %v2320, 0
        %2331 = vmatpush.msra.mxu0 0.0
        %2332 = vmatpush.msra.mxu0 0.0
        %2333 = vmatpush.msra.mxu0 0.0
        %2334 = vmatpush.msra.mxu0 0.0
        %2335 = vmatpush.msra.mxu0 0.0
        %2336 = vmatpush.msra.mxu0 0.0
        %2337 = vmatpush.msra.mxu0 0.0
        %2338 = vmatpush.msra.mxu0 0.0
        %2339 = vmatpush.msra.mxu0 0.0
        %2340 = vmatpush.msra.mxu0 0.0
        %2341 = vmatpush.msra.mxu0 0.0
        %2342 = vmatpush.msra.mxu0 0.0
        %2343 = vmatpush.msra.mxu0 0.0
        %2344 = vmatpush.msra.mxu0 0.0
        %2345 = vmatpush.msra.mxu0 %v2119
        %2346 = vmatpush.msra.mxu0 %v2117
        %2347 = vmatmul.f32.gmra.mxu0 %v2326
        %v2348 = vpop.f32.mrf.mxu0
        %v2349 = vadd.f32 0.0, %v2348
        %2350 = vmatmul.f32.gmra.mxu0 %v2329
        %v2351 = vpop.f32.mrf.mxu0
        %v2352 = vadd.f32 0.0, %v2351
        %2353 = vdwg.mxu0
        %v2355 = vsel %vm2258, %v2321, 0
        %v2358 = vsel %vm2258, %v2322, 0
        %2360 = vmatpush.msra.mxu0 0.0
        %2361 = vmatpush.msra.mxu0 0.0
        %2362 = vmatpush.msra.mxu0 0.0
        %2363 = vmatpush.msra.mxu0 0.0
        %2364 = vmatpush.msra.mxu0 0.0
        %2365 = vmatpush.msra.mxu0 0.0
        %2366 = vmatpush.msra.mxu0 0.0
        %2367 = vmatpush.msra.mxu0 0.0
        %2368 = vmatpush.msra.mxu0 0.0
        %2369 = vmatpush.msra.mxu0 0.0
        %2370 = vmatpush.msra.mxu0 0.0
        %2371 = vmatpush.msra.mxu0 0.0
        %2372 = vmatpush.msra.mxu0 0.0
        %2373 = vmatpush.msra.mxu0 0.0
        %2374 = vmatpush.msra.mxu0 %v2147
        %2375 = vmatpush.msra.mxu0 %v2145
        %2376 = vmatmul.f32.gmra.mxu0 %v2355
        %v2377 = vpop.f32.mrf.mxu0
        %v2378 = vadd.f32 0.0, %v2377
        %2379 = vmatmul.f32.gmra.mxu0 %v2358
        %v2380 = vpop.f32.mrf.mxu0
        %v2381 = vadd.f32 0.0, %v2380
        %2382 = vdwg.mxu0
        %v2384 = vsel %vm2258, %v2323, 0
        %v2387 = vsel %vm2258, %v2324, 0
        %2389 = vmatpush.msra.mxu0 0.0
        %2390 = vmatpush.msra.mxu0 0.0
        %2391 = vmatpush.msra.mxu0 0.0
        %2392 = vmatpush.msra.mxu0 0.0
        %2393 = vmatpush.msra.mxu0 0.0
        %2394 = vmatpush.msra.mxu0 0.0
        %2395 = vmatpush.msra.mxu0 0.0
        %2396 = vmatpush.msra.mxu0 0.0
        %2397 = vmatpush.msra.mxu0 0.0
        %2398 = vmatpush.msra.mxu0 0.0
        %2399 = vmatpush.msra.mxu0 0.0
        %2400 = vmatpush.msra.mxu0 0.0
        %2401 = vmatpush.msra.mxu0 0.0
        %2402 = vmatpush.msra.mxu0 0.0
        %2403 = vmatpush.msra.mxu0 %v2175
        %2404 = vmatpush.msra.mxu0 %v2173
        %2405 = vmatmul.f32.gmra.mxu0 %v2384
        %v2406 = vpop.f32.mrf.mxu0
        %v2407 = vadd.f32 0.0, %v2406
        %2408 = vmatmul.f32.gmra.mxu0 %v2387
        %v2409 = vpop.f32.mrf.mxu0
        %v2410 = vadd.f32 0.0, %v2409
        %2411 = vdwg.mxu0
        %v2412 = vpack.c.bf16 %v2352, %v2349
        %v2413 = vpack.c.bf16 %v2381, %v2378
        %v2414 = vpack.c.bf16 %v2410, %v2407
        %v2415 = vld [vmem:[%s778] sm:$0xff]
        %v2416 = vld [vmem:[%s778 + $0x8] sm:$0xff]
        %v2417 = vld [vmem:[%s778 + $0x10] sm:$0xff]
        %v2418 = vld [vmem:[%s778 + $0x18] sm:$0xff]
        %v2419 = vld [vmem:[%s778 + $0x20] sm:$0xff]
        %v2420 = vld [vmem:[%s778 + $0x28] sm:$0xff]
        %v2421 = vld [vmem:[%s778 + $0x30] sm:$0xff]
        %v2422 = vld [vmem:[%s778 + $0x38] sm:$0xff]
        %v2423 = vld [vmem:[%s778 + $0x40] sm:$0xff]
        %v2424 = vld [vmem:[%s778 + $0x48] sm:$0xff]
        %v2425 = vld [vmem:[%s778 + $0x50] sm:$0xff]
        %v2426 = vld [vmem:[%s778 + $0x58] sm:$0xff]
        %v2427 = vld [vmem:[%s778 + $0x60] sm:$0xff]
        %v2428 = vld [vmem:[%s778 + $0x68] sm:$0xff]
        %v2429 = vld [vmem:[%s778 + $0x70] sm:$0xff]
        %v2430 = vld [vmem:[%s778 + $0x78] sm:$0xff]
        %v2431 = vld [vmem:[%s778 + $0x80] sm:$0xff]
        %v2432 = vld [vmem:[%s778 + $0x88] sm:$0xff]
        %v2433 = vld [vmem:[%s778 + $0x90] sm:$0xff]
        %v2434 = vld [vmem:[%s778 + $0x98] sm:$0xff]
        %v2435 = vld [vmem:[%s778 + $0xa0] sm:$0xff]
        %v2436 = vld [vmem:[%s778 + $0xa8] sm:$0xff]
        %v2437 = vld [vmem:[%s778 + $0xb0] sm:$0xff]
        %v2438 = vld [vmem:[%s778 + $0xb8] sm:$0xff]
        %v2439 = vld [vmem:[%s778 + $0xc0] sm:$0xff]
        %v2440 = vld [vmem:[%s778 + $0xc8] sm:$0xff]
        %v2441 = vld [vmem:[%s778 + $0xd0] sm:$0xff]
        %v2442 = vld [vmem:[%s778 + $0xd8] sm:$0xff]
        %v2443 = vld [vmem:[%s778 + $0xe0] sm:$0xff]
        %v2444 = vld [vmem:[%s778 + $0xe8] sm:$0xff]
        %v2445 = vld [vmem:[%s778 + $0xf0] sm:$0xff]
        %v2446 = vld [vmem:[%s778 + $0xf8] sm:$0xff]
        %v2447 = vld [vmem:[%s778 + $0x100] sm:$0xff]
        %v2448 = vld [vmem:[%s778 + $0x108] sm:$0xff]
        %v2449 = vld [vmem:[%s778 + $0x110] sm:$0xff]
        %v2450 = vld [vmem:[%s778 + $0x118] sm:$0xff]
        %v2451 = vld [vmem:[%s778 + $0x120] sm:$0xff]
        %v2452 = vld [vmem:[%s778 + $0x128] sm:$0xff]
        %v2453 = vld [vmem:[%s778 + $0x130] sm:$0xff]
        %v2454 = vld [vmem:[%s778 + $0x138] sm:$0xff]
        %v2455 = vld [vmem:[%s778 + $0x140] sm:$0xff]
        %v2456 = vld [vmem:[%s778 + $0x148] sm:$0xff]
        %v2457 = vld [vmem:[%s778 + $0x150] sm:$0xff]
        %v2458 = vld [vmem:[%s778 + $0x158] sm:$0xff]
        %v2459 = vld [vmem:[%s778 + $0x160] sm:$0xff]
        %v2460 = vld [vmem:[%s778 + $0x168] sm:$0xff]
        %v2461 = vld [vmem:[%s778 + $0x170] sm:$0xff]
        %v2462 = vld [vmem:[%s778 + $0x178] sm:$0xff]
        %v2463 = vld [vmem:[%s788] sm:$0x3]
        %v2465 = vperm.slane %v2463, 0
        %v2466 = vperm.slane %v2463, 1
        %v2517 = vunpack.c.l.b16 %v2415
        %v2518 = vunpack.c.h.b16 %v2415
        %v2519 = vunpack.c.l.b16 %v2416
        %v2520 = vunpack.c.h.b16 %v2416
        %v2521 = vunpack.c.l.b16 %v2417
        %v2522 = vunpack.c.h.b16 %v2417
        %v2523 = vunpack.c.l.b16 %v2418
        %v2524 = vunpack.c.h.b16 %v2418
        %v2525 = vunpack.c.l.b16 %v2419
        %v2526 = vunpack.c.h.b16 %v2419
        %v2527 = vunpack.c.l.b16 %v2420
        %v2528 = vunpack.c.h.b16 %v2420
        %v2529 = vunpack.c.l.b16 %v2421
        %v2530 = vunpack.c.h.b16 %v2421
        %v2531 = vunpack.c.l.b16 %v2422
        %v2532 = vunpack.c.h.b16 %v2422
        %v2533 = vunpack.c.l.b16 %v2423
        %v2534 = vunpack.c.h.b16 %v2423
        %v2535 = vunpack.c.l.b16 %v2424
        %v2536 = vunpack.c.h.b16 %v2424
        %v2537 = vunpack.c.l.b16 %v2425
        %v2538 = vunpack.c.h.b16 %v2425
        %v2539 = vunpack.c.l.b16 %v2426
        %v2540 = vunpack.c.h.b16 %v2426
        %v2541 = vunpack.c.l.b16 %v2427
        %v2542 = vunpack.c.h.b16 %v2427
        %v2543 = vunpack.c.l.b16 %v2428
        %v2544 = vunpack.c.h.b16 %v2428
        %v2545 = vunpack.c.l.b16 %v2429
        %v2546 = vunpack.c.h.b16 %v2429
        %v2547 = vunpack.c.l.b16 %v2430
        %v2548 = vunpack.c.h.b16 %v2430
        %v2549 = vunpack.c.l.b16 %v2431
        %v2550 = vunpack.c.h.b16 %v2431
        %v2551 = vunpack.c.l.b16 %v2432
        %v2552 = vunpack.c.h.b16 %v2432
        %v2553 = vunpack.c.l.b16 %v2433
        %v2554 = vunpack.c.h.b16 %v2433
        %v2555 = vunpack.c.l.b16 %v2434
        %v2556 = vunpack.c.h.b16 %v2434
        %v2557 = vunpack.c.l.b16 %v2435
        %v2558 = vunpack.c.h.b16 %v2435
        %v2559 = vunpack.c.l.b16 %v2436
        %v2560 = vunpack.c.h.b16 %v2436
        %v2561 = vunpack.c.l.b16 %v2437
        %v2562 = vunpack.c.h.b16 %v2437
        %v2563 = vunpack.c.l.b16 %v2438
        %v2564 = vunpack.c.h.b16 %v2438
        %v2565 = vunpack.c.l.b16 %v2439
        %v2566 = vunpack.c.h.b16 %v2439
        %v2567 = vunpack.c.l.b16 %v2440
        %v2568 = vunpack.c.h.b16 %v2440
        %v2569 = vunpack.c.l.b16 %v2441
        %v2570 = vunpack.c.h.b16 %v2441
        %v2571 = vunpack.c.l.b16 %v2442
        %v2572 = vunpack.c.h.b16 %v2442
        %v2573 = vunpack.c.l.b16 %v2443
        %v2574 = vunpack.c.h.b16 %v2443
        %v2575 = vunpack.c.l.b16 %v2444
        %v2576 = vunpack.c.h.b16 %v2444
        %v2577 = vunpack.c.l.b16 %v2445
        %v2578 = vunpack.c.h.b16 %v2445
        %v2579 = vunpack.c.l.b16 %v2446
        %v2580 = vunpack.c.h.b16 %v2446
        %v2581 = vunpack.c.l.b16 %v2447
        %v2582 = vunpack.c.h.b16 %v2447
        %v2583 = vunpack.c.l.b16 %v2448
        %v2584 = vunpack.c.h.b16 %v2448
        %v2585 = vunpack.c.l.b16 %v2449
        %v2586 = vunpack.c.h.b16 %v2449
        %v2587 = vunpack.c.l.b16 %v2450
        %v2588 = vunpack.c.h.b16 %v2450
        %v2589 = vunpack.c.l.b16 %v2451
        %v2590 = vunpack.c.h.b16 %v2451
        %v2591 = vunpack.c.l.b16 %v2452
        %v2592 = vunpack.c.h.b16 %v2452
        %v2593 = vunpack.c.l.b16 %v2453
        %v2594 = vunpack.c.h.b16 %v2453
        %v2595 = vunpack.c.l.b16 %v2454
        %v2596 = vunpack.c.h.b16 %v2454
        %v2597 = vunpack.c.l.b16 %v2455
        %v2598 = vunpack.c.h.b16 %v2455
        %v2599 = vunpack.c.l.b16 %v2456
        %v2600 = vunpack.c.h.b16 %v2456
        %v2601 = vunpack.c.l.b16 %v2457
        %v2602 = vunpack.c.h.b16 %v2457
        %v2603 = vunpack.c.l.b16 %v2458
        %v2604 = vunpack.c.h.b16 %v2458
        %v2605 = vunpack.c.l.b16 %v2459
        %v2606 = vunpack.c.h.b16 %v2459
        %v2607 = vunpack.c.l.b16 %v2460
        %v2608 = vunpack.c.h.b16 %v2460
        %v2609 = vunpack.c.l.b16 %v2461
        %v2610 = vunpack.c.h.b16 %v2461
        %v2611 = vunpack.c.l.b16 %v2462
        %v2612 = vunpack.c.h.b16 %v2462
        %v2613 = vpack.c.b16 %v2519, %v2517
        %v2614 = vpack.c.b16 %v2520, %v2518
        %v2615 = vpack.c.b16 %v2523, %v2521
        %v2616 = vpack.c.b16 %v2524, %v2522
        %v2617 = vpack.c.b16 %v2527, %v2525
        %v2618 = vpack.c.b16 %v2528, %v2526
        %v2619 = vpack.c.b16 %v2531, %v2529
        %v2620 = vpack.c.b16 %v2532, %v2530
        %v2621 = vpack.c.b16 %v2535, %v2533
        %v2622 = vpack.c.b16 %v2536, %v2534
        %v2623 = vpack.c.b16 %v2539, %v2537
        %v2624 = vpack.c.b16 %v2540, %v2538
        %v2625 = vpack.c.b16 %v2543, %v2541
        %v2626 = vpack.c.b16 %v2544, %v2542
        %v2627 = vpack.c.b16 %v2547, %v2545
        %v2628 = vpack.c.b16 %v2548, %v2546
        %v2629 = vpack.c.b16 %v2551, %v2549
        %v2630 = vpack.c.b16 %v2552, %v2550
        %v2631 = vpack.c.b16 %v2555, %v2553
        %v2632 = vpack.c.b16 %v2556, %v2554
        %v2633 = vpack.c.b16 %v2559, %v2557
        %v2634 = vpack.c.b16 %v2560, %v2558
        %v2635 = vpack.c.b16 %v2563, %v2561
        %v2636 = vpack.c.b16 %v2564, %v2562
        %v2637 = vpack.c.b16 %v2567, %v2565
        %v2638 = vpack.c.b16 %v2568, %v2566
        %v2639 = vpack.c.b16 %v2571, %v2569
        %v2640 = vpack.c.b16 %v2572, %v2570
        %v2641 = vpack.c.b16 %v2575, %v2573
        %v2642 = vpack.c.b16 %v2576, %v2574
        %v2643 = vpack.c.b16 %v2579, %v2577
        %v2644 = vpack.c.b16 %v2580, %v2578
        %v2645 = vpack.c.b16 %v2583, %v2581
        %v2646 = vpack.c.b16 %v2584, %v2582
        %v2647 = vpack.c.b16 %v2587, %v2585
        %v2648 = vpack.c.b16 %v2588, %v2586
        %v2649 = vpack.c.b16 %v2591, %v2589
        %v2650 = vpack.c.b16 %v2592, %v2590
        %v2651 = vpack.c.b16 %v2595, %v2593
        %v2652 = vpack.c.b16 %v2596, %v2594
        %v2653 = vpack.c.b16 %v2599, %v2597
        %v2654 = vpack.c.b16 %v2600, %v2598
        %v2655 = vpack.c.b16 %v2603, %v2601
        %v2656 = vpack.c.b16 %v2604, %v2602
        %v2657 = vpack.c.b16 %v2607, %v2605
        %v2658 = vpack.c.b16 %v2608, %v2606
        %v2659 = vpack.c.b16 %v2611, %v2609
        %v2660 = vpack.c.b16 %v2612, %v2610
        %2709 = vmatpush.bf16.msra.mxu0 %v2627
        %2710 = vmatpush.bf16.msra.mxu0 %v2625
        %2711 = vmatpush.bf16.msra.mxu0 %v2623
        %2712 = vmatpush.bf16.msra.mxu0 %v2621
        %2713 = vmatpush.bf16.msra.mxu0 %v2619
        %2714 = vmatpush.bf16.msra.mxu0 %v2617
        %2715 = vmatpush.bf16.msra.mxu0 %v2615
        %2716 = vmatpush.bf16.msra.mxu0 %v2613
        %2717 = vmatmul.bf16.gmra.mxu0 %v2412
        %v2718 = vpop.f32.mrf.mxu0
        %v2719 = vadd.f32 %v2465, %v2718
        %v2720 = vpop.f32.mrf.mxu0
        %v2721 = vadd.f32 %v2465, %v2720
        %2722 = vdwg.mxu0
        %2723 = vmatpush.bf16.msra.mxu0 %v2643
        %2724 = vmatpush.bf16.msra.mxu0 %v2641
        %2725 = vmatpush.bf16.msra.mxu0 %v2639
        %2726 = vmatpush.bf16.msra.mxu0 %v2637
        %2727 = vmatpush.bf16.msra.mxu0 %v2635
        %2728 = vmatpush.bf16.msra.mxu0 %v2633
        %2729 = vmatpush.bf16.msra.mxu0 %v2631
        %2730 = vmatpush.bf16.msra.mxu0 %v2629
        %2731 = vmatmul.bf16.gmra.mxu0 %v2413
        %v2732 = vpop.f32.mrf.mxu0
        %v2733 = vadd.f32 %v2719, %v2732
        %v2734 = vpop.f32.mrf.mxu0
        %v2735 = vadd.f32 %v2721, %v2734
        %2736 = vdwg.mxu0
        %2737 = vmatpush.bf16.msra.mxu0 %v2659
        %2738 = vmatpush.bf16.msra.mxu0 %v2657
        %2739 = vmatpush.bf16.msra.mxu0 %v2655
        %2740 = vmatpush.bf16.msra.mxu0 %v2653
        %2741 = vmatpush.bf16.msra.mxu0 %v2651
        %2742 = vmatpush.bf16.msra.mxu0 %v2649
        %2743 = vmatpush.bf16.msra.mxu0 %v2647
        %2744 = vmatpush.bf16.msra.mxu0 %v2645
        %2745 = vmatmul.bf16.gmra.mxu0 %v2414
        %v2746 = vpop.f32.mrf.mxu0
        %v2747 = vadd.f32 %v2733, %v2746
        %v2748 = vpop.f32.mrf.mxu0
        %v2749 = vadd.f32 %v2735, %v2748
        %2750 = vdwg.mxu0
        %2751 = vmatpush.bf16.msra.mxu0 %v2628
        %2752 = vmatpush.bf16.msra.mxu0 %v2626
        %2753 = vmatpush.bf16.msra.mxu0 %v2624
        %2754 = vmatpush.bf16.msra.mxu0 %v2622
        %2755 = vmatpush.bf16.msra.mxu0 %v2620
        %2756 = vmatpush.bf16.msra.mxu0 %v2618
        %2757 = vmatpush.bf16.msra.mxu0 %v2616
        %2758 = vmatpush.bf16.msra.mxu0 %v2614
        %2759 = vmatmul.bf16.gmra.mxu0 %v2412
        %v2760 = vpop.f32.mrf.mxu0
        %v2761 = vadd.f32 %v2466, %v2760
        %v2762 = vpop.f32.mrf.mxu0
        %v2763 = vadd.f32 %v2466, %v2762
        %2764 = vdwg.mxu0
        %2765 = vmatpush.bf16.msra.mxu0 %v2644
        %2766 = vmatpush.bf16.msra.mxu0 %v2642
        %2767 = vmatpush.bf16.msra.mxu0 %v2640
        %2768 = vmatpush.bf16.msra.mxu0 %v2638
        %2769 = vmatpush.bf16.msra.mxu0 %v2636
        %2770 = vmatpush.bf16.msra.mxu0 %v2634
        %2771 = vmatpush.bf16.msra.mxu0 %v2632
        %2772 = vmatpush.bf16.msra.mxu0 %v2630
        %2773 = vmatmul.bf16.gmra.mxu0 %v2413
        %v2774 = vpop.f32.mrf.mxu0
        %v2775 = vadd.f32 %v2761, %v2774
        %v2776 = vpop.f32.mrf.mxu0
        %v2777 = vadd.f32 %v2763, %v2776
        %2778 = vdwg.mxu0
        %2779 = vmatpush.bf16.msra.mxu0 %v2660
        %2780 = vmatpush.bf16.msra.mxu0 %v2658
        %2781 = vmatpush.bf16.msra.mxu0 %v2656
        %2782 = vmatpush.bf16.msra.mxu0 %v2654
        %2783 = vmatpush.bf16.msra.mxu0 %v2652
        %2784 = vmatpush.bf16.msra.mxu0 %v2650
        %2785 = vmatpush.bf16.msra.mxu0 %v2648
        %2786 = vmatpush.bf16.msra.mxu0 %v2646
        %2787 = vmatmul.bf16.gmra.mxu0 %v2414
        %v2788 = vpop.f32.mrf.mxu0
        %v2789 = vadd.f32 %v2775, %v2788
        %v2790 = vpop.f32.mrf.mxu0
        %v2791 = vadd.f32 %v2777, %v2790
        %2792 = vdwg.mxu0
        %v2793 = vadd.f32 %v2747, %v1023
        %v2794 = vadd.f32 %v2789, %v1024
        %v2795 = vadd.f32 %v2749, %v1025
        %v2796 = vadd.f32 %v2791, %v1026
        %v2797 = vld [vmem:[%s798] sm:$0x3]
        %v2798 = vld [vmem:[%s808] sm:$0x3]
        %v2799 = vadd.f32 %v2793, %v2794
        %2800 = vadd.xlane.f32.xlu0 %v2799
        %v2801 = vpop.xlane.xlu0 %2800
        %v2802 = vadd.f32 %v2795, %v2796
        %2803 = vadd.xlane.f32.xlu0 %v2802
        %v2804 = vpop.xlane.xlu0 %2803
        %v2805 = vrcp.pop 256.0
        %v2806 = vmul.f32 256.0, %v2805
        %v2807 = vsub.f32 1.0, %v2806
        %v2808 = vmul.f32 %v2805, %v2807
        %v2809 = vadd.f32 %v2805, %v2808
        %vm2810 = vweird.f32 %v2805
        %v2811 = vsel %vm2810, %v2805, %v2809
        %v2812 = vmul.f32 %v2801, %v2811
        %v2813 = vmul.f32 %v2804, %v2811
        %v2814 = vsub.f32 %v2793, %v2812
        %v2815 = vsub.f32 %v2794, %v2812
        %v2816 = vsub.f32 %v2795, %v2813
        %v2817 = vsub.f32 %v2796, %v2813
        %v2818 = vmul.f32 %v2814, %v2814
        %v2819 = vmul.f32 %v2815, %v2815
        %v2820 = vmul.f32 %v2816, %v2816
        %v2821 = vmul.f32 %v2817, %v2817
        %v2822 = vadd.f32 %v2818, %v2819
        %2823 = vadd.xlane.f32.xlu0 %v2822
        %v2824 = vpop.xlane.xlu0 %2823
        %v2825 = vadd.f32 %v2820, %v2821
        %2826 = vadd.xlane.f32.xlu0 %v2825
        %v2827 = vpop.xlane.xlu0 %2826
        %v2828 = vmul.f32 %v2824, 0.003921569
        %v2829 = vmul.f32 %v2827, 0.003921569
        %v2830 = vrsqrt.pop %v2828
        %v2831 = vmul.f32 %v2830, %v2828
        %v2832 = vmul.f32 %v2831, %v2830
        %v2833 = vmul.f32 0.5, %v2832
        %v2834 = vsub.f32 1.5, %v2833
        %v2835 = vmul.f32 %v2830, %v2834
        %v2836 = vmul.f32 %v2828, %v2835
        %vm2837 = vcmp.eq.f32.partialorder %v2828, inf
        %v2838 = vsel %vm2837, %v2828, %v2836
        %vm2839 = vcmp.eq.f32.partialorder %v2828, 0.0
        %v2840 = vand.u32 %v2828, 2147483648
        %v2841 = vsel %vm2839, %v2840, %v2838
        %v2842 = vrsqrt.pop %v2829
        %v2843 = vmul.f32 %v2842, %v2829
        %v2844 = vmul.f32 %v2843, %v2842
        %v2845 = vmul.f32 0.5, %v2844
        %v2846 = vsub.f32 1.5, %v2845
        %v2847 = vmul.f32 %v2842, %v2846
        %v2848 = vmul.f32 %v2829, %v2847
        %vm2849 = vcmp.eq.f32.partialorder %v2829, inf
        %v2850 = vsel %vm2849, %v2829, %v2848
        %vm2851 = vcmp.eq.f32.partialorder %v2829, 0.0
        %v2852 = vand.u32 %v2829, 2147483648
        %v2853 = vsel %vm2851, %v2852, %v2850
        %v2854 = vadd.f32 %v2841, 0.001
        %v2855 = vadd.f32 %v2853, 0.001
        %v2856 = vrcp.pop %v2854
        %v2857 = vmul.f32 %v2854, %v2856
        %v2858 = vsub.f32 1.0, %v2857
        %v2859 = vmul.f32 %v2856, %v2858
        %v2860 = vadd.f32 %v2856, %v2859
        %vm2861 = vweird.f32 %v2854
        %vm2862 = vweird.f32 %v2856
        %vm2863 = vmor %vm2861, %vm2862
        %v2864 = vsel %vm2863, %v2856, %v2860
        %v2865 = vand.u32 2147483647, %v2854
        %vm2866 = vcmp.eq.f32.partialorder %v2865, 8.507059e+37
        %v2867 = vand.u32 %v2854, 2147483648
        %v2868 = vor.u32 1.1754944e-38, %v2867
        %v2869 = vsel %vm2866, %v2868, %v2864
        %v2870 = vmul.f32 1.0, %v2869
        %v2871 = vrcp.pop %v2855
        %v2872 = vmul.f32 %v2855, %v2871
        %v2873 = vsub.f32 1.0, %v2872
        %v2874 = vmul.f32 %v2871, %v2873
        %v2875 = vadd.f32 %v2871, %v2874
        %vm2876 = vweird.f32 %v2855
        %vm2877 = vweird.f32 %v2871
        %vm2878 = vmor %vm2876, %vm2877
        %v2879 = vsel %vm2878, %v2871, %v2875
        %v2880 = vand.u32 2147483647, %v2855
        %vm2881 = vcmp.eq.f32.partialorder %v2880, 8.507059e+37
        %v2882 = vand.u32 %v2855, 2147483648
        %v2883 = vor.u32 1.1754944e-38, %v2882
        %v2884 = vsel %vm2881, %v2883, %v2879
        %v2885 = vmul.f32 1.0, %v2884
        %v2886 = vmul.f32 %v2814, %v2870
        %v2887 = vmul.f32 %v2815, %v2870
        %v2888 = vmul.f32 %v2816, %v2885
        %v2889 = vmul.f32 %v2817, %v2885
        %v2891 = vperm.slane %v2797, 0
        %v2892 = vperm.slane %v2797, 1
        %v2895 = vmul.f32 %v2886, %v2891
        %v2896 = vmul.f32 %v2887, %v2892
        %v2897 = vmul.f32 %v2888, %v2891
        %v2898 = vmul.f32 %v2889, %v2892
        %v2900 = vperm.slane %v2798, 0
        %v2901 = vperm.slane %v2798, 1
        %v2904 = vadd.f32 %v2895, %v2900
        %v2905 = vadd.f32 %v2896, %v2901
        %v2906 = vadd.f32 %v2897, %v2900
        %v2907 = vadd.f32 %v2898, %v2901
        %v2908 = vpack.c.bf16 %v2906, %v2904
        %v2909 = vpack.c.bf16 %v2907, %v2905
        %v2910 = vld [vmem:[%s818] sm:$0xff]
        %v2911 = vld [vmem:[%s818 + $0x8] sm:$0xff]
        %v2912 = vld [vmem:[%s818 + $0x10] sm:$0xff]
        %v2913 = vld [vmem:[%s818 + $0x18] sm:$0xff]
        %v2914 = vld [vmem:[%s818 + $0x20] sm:$0xff]
        %v2915 = vld [vmem:[%s818 + $0x28] sm:$0xff]
        %v2916 = vld [vmem:[%s818 + $0x30] sm:$0xff]
        %v2917 = vld [vmem:[%s818 + $0x38] sm:$0xff]
        %v2918 = vld [vmem:[%s818 + $0x40] sm:$0xff]
        %v2919 = vld [vmem:[%s818 + $0x48] sm:$0xff]
        %v2920 = vld [vmem:[%s818 + $0x50] sm:$0xff]
        %v2921 = vld [vmem:[%s818 + $0x58] sm:$0xff]
        %v2922 = vld [vmem:[%s818 + $0x60] sm:$0xff]
        %v2923 = vld [vmem:[%s818 + $0x68] sm:$0xff]
        %v2924 = vld [vmem:[%s818 + $0x70] sm:$0xff]
        %v2925 = vld [vmem:[%s818 + $0x78] sm:$0xff]
        %v2926 = vld [vmem:[%s818 + $0x80] sm:$0xff]
        %v2927 = vld [vmem:[%s818 + $0x88] sm:$0xff]
        %v2928 = vld [vmem:[%s818 + $0x90] sm:$0xff]
        %v2929 = vld [vmem:[%s818 + $0x98] sm:$0xff]
        %v2930 = vld [vmem:[%s818 + $0xa0] sm:$0xff]
        %v2931 = vld [vmem:[%s818 + $0xa8] sm:$0xff]
        %v2932 = vld [vmem:[%s818 + $0xb0] sm:$0xff]
        %v2933 = vld [vmem:[%s818 + $0xb8] sm:$0xff]
        %v2934 = vld [vmem:[%s818 + $0xc0] sm:$0xff]
        %v2935 = vld [vmem:[%s818 + $0xc8] sm:$0xff]
        %v2936 = vld [vmem:[%s818 + $0xd0] sm:$0xff]
        %v2937 = vld [vmem:[%s818 + $0xd8] sm:$0xff]
        %v2938 = vld [vmem:[%s818 + $0xe0] sm:$0xff]
        %v2939 = vld [vmem:[%s818 + $0xe8] sm:$0xff]
        %v2940 = vld [vmem:[%s818 + $0xf0] sm:$0xff]
        %v2941 = vld [vmem:[%s818 + $0xf8] sm:$0xff]
        %v2942 = vld [vmem:[%s828] sm:$0x3]
        %v2944 = vperm.slane %v2942, 0
        %v2945 = vperm.slane %v2942, 1
        %v2980 = vunpack.c.l.b16 %v2910
        %v2981 = vunpack.c.h.b16 %v2910
        %v2982 = vunpack.c.l.b16 %v2911
        %v2983 = vunpack.c.h.b16 %v2911
        %v2984 = vunpack.c.l.b16 %v2912
        %v2985 = vunpack.c.h.b16 %v2912
        %v2986 = vunpack.c.l.b16 %v2913
        %v2987 = vunpack.c.h.b16 %v2913
        %v2988 = vunpack.c.l.b16 %v2914
        %v2989 = vunpack.c.h.b16 %v2914
        %v2990 = vunpack.c.l.b16 %v2915
        %v2991 = vunpack.c.h.b16 %v2915
        %v2992 = vunpack.c.l.b16 %v2916
        %v2993 = vunpack.c.h.b16 %v2916
        %v2994 = vunpack.c.l.b16 %v2917
        %v2995 = vunpack.c.h.b16 %v2917
        %v2996 = vunpack.c.l.b16 %v2918
        %v2997 = vunpack.c.h.b16 %v2918
        %v2998 = vunpack.c.l.b16 %v2919
        %v2999 = vunpack.c.h.b16 %v2919
        %v3000 = vunpack.c.l.b16 %v2920
        %v3001 = vunpack.c.h.b16 %v2920
        %v3002 = vunpack.c.l.b16 %v2921
        %v3003 = vunpack.c.h.b16 %v2921
        %v3004 = vunpack.c.l.b16 %v2922
        %v3005 = vunpack.c.h.b16 %v2922
        %v3006 = vunpack.c.l.b16 %v2923
        %v3007 = vunpack.c.h.b16 %v2923
        %v3008 = vunpack.c.l.b16 %v2924
        %v3009 = vunpack.c.h.b16 %v2924
        %v3010 = vunpack.c.l.b16 %v2925
        %v3011 = vunpack.c.h.b16 %v2925
        %v3012 = vunpack.c.l.b16 %v2926
        %v3013 = vunpack.c.h.b16 %v2926
        %v3014 = vunpack.c.l.b16 %v2927
        %v3015 = vunpack.c.h.b16 %v2927
        %v3016 = vunpack.c.l.b16 %v2928
        %v3017 = vunpack.c.h.b16 %v2928
        %v3018 = vunpack.c.l.b16 %v2929
        %v3019 = vunpack.c.h.b16 %v2929
        %v3020 = vunpack.c.l.b16 %v2930
        %v3021 = vunpack.c.h.b16 %v2930
        %v3022 = vunpack.c.l.b16 %v2931
        %v3023 = vunpack.c.h.b16 %v2931
        %v3024 = vunpack.c.l.b16 %v2932
        %v3025 = vunpack.c.h.b16 %v2932
        %v3026 = vunpack.c.l.b16 %v2933
        %v3027 = vunpack.c.h.b16 %v2933
        %v3028 = vunpack.c.l.b16 %v2934
        %v3029 = vunpack.c.h.b16 %v2934
        %v3030 = vunpack.c.l.b16 %v2935
        %v3031 = vunpack.c.h.b16 %v2935
        %v3032 = vunpack.c.l.b16 %v2936
        %v3033 = vunpack.c.h.b16 %v2936
        %v3034 = vunpack.c.l.b16 %v2937
        %v3035 = vunpack.c.h.b16 %v2937
        %v3036 = vunpack.c.l.b16 %v2938
        %v3037 = vunpack.c.h.b16 %v2938
        %v3038 = vunpack.c.l.b16 %v2939
        %v3039 = vunpack.c.h.b16 %v2939
        %v3040 = vunpack.c.l.b16 %v2940
        %v3041 = vunpack.c.h.b16 %v2940
        %v3042 = vunpack.c.l.b16 %v2941
        %v3043 = vunpack.c.h.b16 %v2941
        %v3044 = vpack.c.b16 %v2982, %v2980
        %v3045 = vpack.c.b16 %v2983, %v2981
        %v3046 = vpack.c.b16 %v2986, %v2984
        %v3047 = vpack.c.b16 %v2987, %v2985
        %v3048 = vpack.c.b16 %v2990, %v2988
        %v3049 = vpack.c.b16 %v2991, %v2989
        %v3050 = vpack.c.b16 %v2994, %v2992
        %v3051 = vpack.c.b16 %v2995, %v2993
        %v3052 = vpack.c.b16 %v2998, %v2996
        %v3053 = vpack.c.b16 %v2999, %v2997
        %v3054 = vpack.c.b16 %v3002, %v3000
        %v3055 = vpack.c.b16 %v3003, %v3001
        %v3056 = vpack.c.b16 %v3006, %v3004
        %v3057 = vpack.c.b16 %v3007, %v3005
        %v3058 = vpack.c.b16 %v3010, %v3008
        %v3059 = vpack.c.b16 %v3011, %v3009
        %v3060 = vpack.c.b16 %v3014, %v3012
        %v3061 = vpack.c.b16 %v3015, %v3013
        %v3062 = vpack.c.b16 %v3018, %v3016
        %v3063 = vpack.c.b16 %v3019, %v3017
        %v3064 = vpack.c.b16 %v3022, %v3020
        %v3065 = vpack.c.b16 %v3023, %v3021
        %v3066 = vpack.c.b16 %v3026, %v3024
        %v3067 = vpack.c.b16 %v3027, %v3025
        %v3068 = vpack.c.b16 %v3030, %v3028
        %v3069 = vpack.c.b16 %v3031, %v3029
        %v3070 = vpack.c.b16 %v3034, %v3032
        %v3071 = vpack.c.b16 %v3035, %v3033
        %v3072 = vpack.c.b16 %v3038, %v3036
        %v3073 = vpack.c.b16 %v3039, %v3037
        %v3074 = vpack.c.b16 %v3042, %v3040
        %v3075 = vpack.c.b16 %v3043, %v3041
        %3108 = vmatpush.bf16.msra.mxu0 %v3058
        %3109 = vmatpush.bf16.msra.mxu0 %v3056
        %3110 = vmatpush.bf16.msra.mxu0 %v3054
        %3111 = vmatpush.bf16.msra.mxu0 %v3052
        %3112 = vmatpush.bf16.msra.mxu0 %v3050
        %3113 = vmatpush.bf16.msra.mxu0 %v3048
        %3114 = vmatpush.bf16.msra.mxu0 %v3046
        %3115 = vmatpush.bf16.msra.mxu0 %v3044
        %3116 = vmatmul.bf16.gmra.mxu0 %v2908
        %v3117 = vpop.f32.mrf.mxu0
        %v3118 = vadd.f32 %v2944, %v3117
        %v3119 = vpop.f32.mrf.mxu0
        %v3120 = vadd.f32 %v2944, %v3119
        %3121 = vdwg.mxu0
        %3122 = vmatpush.bf16.msra.mxu0 %v3074
        %3123 = vmatpush.bf16.msra.mxu0 %v3072
        %3124 = vmatpush.bf16.msra.mxu0 %v3070
        %3125 = vmatpush.bf16.msra.mxu0 %v3068
        %3126 = vmatpush.bf16.msra.mxu0 %v3066
        %3127 = vmatpush.bf16.msra.mxu0 %v3064
        %3128 = vmatpush.bf16.msra.mxu0 %v3062
        %3129 = vmatpush.bf16.msra.mxu0 %v3060
        %3130 = vmatmul.bf16.gmra.mxu0 %v2909
        %v3131 = vpop.f32.mrf.mxu0
        %v3132 = vadd.f32 %v3118, %v3131
        %v3133 = vpop.f32.mrf.mxu0
        %v3134 = vadd.f32 %v3120, %v3133
        %3135 = vdwg.mxu0
        %3136 = vmatpush.bf16.msra.mxu0 %v3059
        %3137 = vmatpush.bf16.msra.mxu0 %v3057
        %3138 = vmatpush.bf16.msra.mxu0 %v3055
        %3139 = vmatpush.bf16.msra.mxu0 %v3053
        %3140 = vmatpush.bf16.msra.mxu0 %v3051
        %3141 = vmatpush.bf16.msra.mxu0 %v3049
        %3142 = vmatpush.bf16.msra.mxu0 %v3047
        %3143 = vmatpush.bf16.msra.mxu0 %v3045
        %3144 = vmatmul.bf16.gmra.mxu0 %v2908
        %v3145 = vpop.f32.mrf.mxu0
        %v3146 = vadd.f32 %v2945, %v3145
        %v3147 = vpop.f32.mrf.mxu0
        %v3148 = vadd.f32 %v2945, %v3147
        %3149 = vdwg.mxu0
        %3150 = vmatpush.bf16.msra.mxu0 %v3075
        %3151 = vmatpush.bf16.msra.mxu0 %v3073
        %3152 = vmatpush.bf16.msra.mxu0 %v3071
        %3153 = vmatpush.bf16.msra.mxu0 %v3069
        %3154 = vmatpush.bf16.msra.mxu0 %v3067
        %3155 = vmatpush.bf16.msra.mxu0 %v3065
        %3156 = vmatpush.bf16.msra.mxu0 %v3063
        %3157 = vmatpush.bf16.msra.mxu0 %v3061
        %3158 = vmatmul.bf16.gmra.mxu0 %v2909
        %v3159 = vpop.f32.mrf.mxu0
        %v3160 = vadd.f32 %v3146, %v3159
        %v3161 = vpop.f32.mrf.mxu0
        %v3162 = vadd.f32 %v3148, %v3161
        %3163 = vdwg.mxu0
        %v3164 = vmax.f32 %v3132, 0.0
        %v3165 = vmax.f32 %v3160, 0.0
        %v3166 = vmax.f32 %v3134, 0.0
        %v3167 = vmax.f32 %v3162, 0.0
        %v3168 = vpack.c.bf16 %v3166, %v3164
        %v3169 = vpack.c.bf16 %v3167, %v3165
        %v3170 = vld [vmem:[%s838] sm:$0xff]
        %v3171 = vld [vmem:[%s838 + $0x8] sm:$0xff]
        %v3172 = vld [vmem:[%s838 + $0x10] sm:$0xff]
        %v3173 = vld [vmem:[%s838 + $0x18] sm:$0xff]
        %v3174 = vld [vmem:[%s838 + $0x20] sm:$0xff]
        %v3175 = vld [vmem:[%s838 + $0x28] sm:$0xff]
        %v3176 = vld [vmem:[%s838 + $0x30] sm:$0xff]
        %v3177 = vld [vmem:[%s838 + $0x38] sm:$0xff]
        %v3178 = vld [vmem:[%s838 + $0x40] sm:$0xff]
        %v3179 = vld [vmem:[%s838 + $0x48] sm:$0xff]
        %v3180 = vld [vmem:[%s838 + $0x50] sm:$0xff]
        %v3181 = vld [vmem:[%s838 + $0x58] sm:$0xff]
        %v3182 = vld [vmem:[%s838 + $0x60] sm:$0xff]
        %v3183 = vld [vmem:[%s838 + $0x68] sm:$0xff]
        %v3184 = vld [vmem:[%s838 + $0x70] sm:$0xff]
        %v3185 = vld [vmem:[%s838 + $0x78] sm:$0xff]
        %v3186 = vld [vmem:[%s838 + $0x80] sm:$0xff]
        %v3187 = vld [vmem:[%s838 + $0x88] sm:$0xff]
        %v3188 = vld [vmem:[%s838 + $0x90] sm:$0xff]
        %v3189 = vld [vmem:[%s838 + $0x98] sm:$0xff]
        %v3190 = vld [vmem:[%s838 + $0xa0] sm:$0xff]
        %v3191 = vld [vmem:[%s838 + $0xa8] sm:$0xff]
        %v3192 = vld [vmem:[%s838 + $0xb0] sm:$0xff]
        %v3193 = vld [vmem:[%s838 + $0xb8] sm:$0xff]
        %v3194 = vld [vmem:[%s838 + $0xc0] sm:$0xff]
        %v3195 = vld [vmem:[%s838 + $0xc8] sm:$0xff]
        %v3196 = vld [vmem:[%s838 + $0xd0] sm:$0xff]
        %v3197 = vld [vmem:[%s838 + $0xd8] sm:$0xff]
        %v3198 = vld [vmem:[%s838 + $0xe0] sm:$0xff]
        %v3199 = vld [vmem:[%s838 + $0xe8] sm:$0xff]
        %v3200 = vld [vmem:[%s838 + $0xf0] sm:$0xff]
        %v3201 = vld [vmem:[%s838 + $0xf8] sm:$0xff]
        %v3202 = vld [vmem:[%s848] sm:$0x3]
        %v3204 = vperm.slane %v3202, 0
        %v3205 = vperm.slane %v3202, 1
        %v3240 = vunpack.c.l.b16 %v3170
        %v3241 = vunpack.c.h.b16 %v3170
        %v3242 = vunpack.c.l.b16 %v3171
        %v3243 = vunpack.c.h.b16 %v3171
        %v3244 = vunpack.c.l.b16 %v3172
        %v3245 = vunpack.c.h.b16 %v3172
        %v3246 = vunpack.c.l.b16 %v3173
        %v3247 = vunpack.c.h.b16 %v3173
        %v3248 = vunpack.c.l.b16 %v3174
        %v3249 = vunpack.c.h.b16 %v3174
        %v3250 = vunpack.c.l.b16 %v3175
        %v3251 = vunpack.c.h.b16 %v3175
        %v3252 = vunpack.c.l.b16 %v3176
        %v3253 = vunpack.c.h.b16 %v3176
        %v3254 = vunpack.c.l.b16 %v3177
        %v3255 = vunpack.c.h.b16 %v3177
        %v3256 = vunpack.c.l.b16 %v3178
        %v3257 = vunpack.c.h.b16 %v3178
        %v3258 = vunpack.c.l.b16 %v3179
        %v3259 = vunpack.c.h.b16 %v3179
        %v3260 = vunpack.c.l.b16 %v3180
        %v3261 = vunpack.c.h.b16 %v3180
        %v3262 = vunpack.c.l.b16 %v3181
        %v3263 = vunpack.c.h.b16 %v3181
        %v3264 = vunpack.c.l.b16 %v3182
        %v3265 = vunpack.c.h.b16 %v3182
        %v3266 = vunpack.c.l.b16 %v3183
        %v3267 = vunpack.c.h.b16 %v3183
        %v3268 = vunpack.c.l.b16 %v3184
        %v3269 = vunpack.c.h.b16 %v3184
        %v3270 = vunpack.c.l.b16 %v3185
        %v3271 = vunpack.c.h.b16 %v3185
        %v3272 = vunpack.c.l.b16 %v3186
        %v3273 = vunpack.c.h.b16 %v3186
        %v3274 = vunpack.c.l.b16 %v3187
        %v3275 = vunpack.c.h.b16 %v3187
        %v3276 = vunpack.c.l.b16 %v3188
        %v3277 = vunpack.c.h.b16 %v3188
        %v3278 = vunpack.c.l.b16 %v3189
        %v3279 = vunpack.c.h.b16 %v3189
        %v3280 = vunpack.c.l.b16 %v3190
        %v3281 = vunpack.c.h.b16 %v3190
        %v3282 = vunpack.c.l.b16 %v3191
        %v3283 = vunpack.c.h.b16 %v3191
        %v3284 = vunpack.c.l.b16 %v3192
        %v3285 = vunpack.c.h.b16 %v3192
        %v3286 = vunpack.c.l.b16 %v3193
        %v3287 = vunpack.c.h.b16 %v3193
        %v3288 = vunpack.c.l.b16 %v3194
        %v3289 = vunpack.c.h.b16 %v3194
        %v3290 = vunpack.c.l.b16 %v3195
        %v3291 = vunpack.c.h.b16 %v3195
        %v3292 = vunpack.c.l.b16 %v3196
        %v3293 = vunpack.c.h.b16 %v3196
        %v3294 = vunpack.c.l.b16 %v3197
        %v3295 = vunpack.c.h.b16 %v3197
        %v3296 = vunpack.c.l.b16 %v3198
        %v3297 = vunpack.c.h.b16 %v3198
        %v3298 = vunpack.c.l.b16 %v3199
        %v3299 = vunpack.c.h.b16 %v3199
        %v3300 = vunpack.c.l.b16 %v3200
        %v3301 = vunpack.c.h.b16 %v3200
        %v3302 = vunpack.c.l.b16 %v3201
        %v3303 = vunpack.c.h.b16 %v3201
        %v3304 = vpack.c.b16 %v3242, %v3240
        %v3305 = vpack.c.b16 %v3243, %v3241
        %v3306 = vpack.c.b16 %v3246, %v3244
        %v3307 = vpack.c.b16 %v3247, %v3245
        %v3308 = vpack.c.b16 %v3250, %v3248
        %v3309 = vpack.c.b16 %v3251, %v3249
        %v3310 = vpack.c.b16 %v3254, %v3252
        %v3311 = vpack.c.b16 %v3255, %v3253
        %v3312 = vpack.c.b16 %v3258, %v3256
        %v3313 = vpack.c.b16 %v3259, %v3257
        %v3314 = vpack.c.b16 %v3262, %v3260
        %v3315 = vpack.c.b16 %v3263, %v3261
        %v3316 = vpack.c.b16 %v3266, %v3264
        %v3317 = vpack.c.b16 %v3267, %v3265
        %v3318 = vpack.c.b16 %v3270, %v3268
        %v3319 = vpack.c.b16 %v3271, %v3269
        %v3320 = vpack.c.b16 %v3274, %v3272
        %v3321 = vpack.c.b16 %v3275, %v3273
        %v3322 = vpack.c.b16 %v3278, %v3276
        %v3323 = vpack.c.b16 %v3279, %v3277
        %v3324 = vpack.c.b16 %v3282, %v3280
        %v3325 = vpack.c.b16 %v3283, %v3281
        %v3326 = vpack.c.b16 %v3286, %v3284
        %v3327 = vpack.c.b16 %v3287, %v3285
        %v3328 = vpack.c.b16 %v3290, %v3288
        %v3329 = vpack.c.b16 %v3291, %v3289
        %v3330 = vpack.c.b16 %v3294, %v3292
        %v3331 = vpack.c.b16 %v3295, %v3293
        %v3332 = vpack.c.b16 %v3298, %v3296
        %v3333 = vpack.c.b16 %v3299, %v3297
        %v3334 = vpack.c.b16 %v3302, %v3300
        %v3335 = vpack.c.b16 %v3303, %v3301
        %3368 = vmatpush.bf16.msra.mxu0 %v3318
        %3369 = vmatpush.bf16.msra.mxu0 %v3316
        %3370 = vmatpush.bf16.msra.mxu0 %v3314
        %3371 = vmatpush.bf16.msra.mxu0 %v3312
        %3372 = vmatpush.bf16.msra.mxu0 %v3310
        %3373 = vmatpush.bf16.msra.mxu0 %v3308
        %3374 = vmatpush.bf16.msra.mxu0 %v3306
        %3375 = vmatpush.bf16.msra.mxu0 %v3304
        %3376 = vmatmul.bf16.gmra.mxu0 %v3168
        %v3377 = vpop.f32.mrf.mxu0
        %v3378 = vadd.f32 %v3204, %v3377
        %v3379 = vpop.f32.mrf.mxu0
        %v3380 = vadd.f32 %v3204, %v3379
        %3381 = vdwg.mxu0
        %3382 = vmatpush.bf16.msra.mxu0 %v3334
        %3383 = vmatpush.bf16.msra.mxu0 %v3332
        %3384 = vmatpush.bf16.msra.mxu0 %v3330
        %3385 = vmatpush.bf16.msra.mxu0 %v3328
        %3386 = vmatpush.bf16.msra.mxu0 %v3326
        %3387 = vmatpush.bf16.msra.mxu0 %v3324
        %3388 = vmatpush.bf16.msra.mxu0 %v3322
        %3389 = vmatpush.bf16.msra.mxu0 %v3320
        %3390 = vmatmul.bf16.gmra.mxu0 %v3169
        %v3391 = vpop.f32.mrf.mxu0
        %v3392 = vadd.f32 %v3378, %v3391
        %v3393 = vpop.f32.mrf.mxu0
        %v3394 = vadd.f32 %v3380, %v3393
        %3395 = vdwg.mxu0
        %3396 = vmatpush.bf16.msra.mxu0 %v3319
        %3397 = vmatpush.bf16.msra.mxu0 %v3317
        %3398 = vmatpush.bf16.msra.mxu0 %v3315
        %3399 = vmatpush.bf16.msra.mxu0 %v3313
        %3400 = vmatpush.bf16.msra.mxu0 %v3311
        %3401 = vmatpush.bf16.msra.mxu0 %v3309
        %3402 = vmatpush.bf16.msra.mxu0 %v3307
        %3403 = vmatpush.bf16.msra.mxu0 %v3305
        %3404 = vmatmul.bf16.gmra.mxu0 %v3168
        %v3405 = vpop.f32.mrf.mxu0
        %v3406 = vadd.f32 %v3205, %v3405
        %v3407 = vpop.f32.mrf.mxu0
        %v3408 = vadd.f32 %v3205, %v3407
        %3409 = vdwg.mxu0
        %3410 = vmatpush.bf16.msra.mxu0 %v3335
        %3411 = vmatpush.bf16.msra.mxu0 %v3333
        %3412 = vmatpush.bf16.msra.mxu0 %v3331
        %3413 = vmatpush.bf16.msra.mxu0 %v3329
        %3414 = vmatpush.bf16.msra.mxu0 %v3327
        %3415 = vmatpush.bf16.msra.mxu0 %v3325
        %3416 = vmatpush.bf16.msra.mxu0 %v3323
        %3417 = vmatpush.bf16.msra.mxu0 %v3321
        %3418 = vmatmul.bf16.gmra.mxu0 %v3169
        %v3419 = vpop.f32.mrf.mxu0
        %v3420 = vadd.f32 %v3406, %v3419
        %v3421 = vpop.f32.mrf.mxu0
        %v3422 = vadd.f32 %v3408, %v3421
        %3423 = vdwg.mxu0
        %v3424 = vadd.f32 %v3392, %v2904
        %v3425 = vadd.f32 %v3420, %v2905
        %v3426 = vadd.f32 %v3394, %v2906
        %v3427 = vadd.f32 %v3422, %v2907
        %v3428 = vld [vmem:[%s858] sm:$0x3]
        %v3429 = vld [vmem:[%s868] sm:$0x3]
        %v3430 = vadd.f32 %v3424, %v3425
        %3431 = vadd.xlane.f32.xlu0 %v3430
        %v3432 = vpop.xlane.xlu0 %3431
        %v3433 = vadd.f32 %v3426, %v3427
        %3434 = vadd.xlane.f32.xlu0 %v3433
        %v3435 = vpop.xlane.xlu0 %3434
        %v3436 = vmul.f32 %v3432, %v2811
        %v3437 = vmul.f32 %v3435, %v2811
        %v3438 = vsub.f32 %v3424, %v3436
        %v3439 = vsub.f32 %v3425, %v3436
        %v3440 = vsub.f32 %v3426, %v3437
        %v3441 = vsub.f32 %v3427, %v3437
        %v3442 = vmul.f32 %v3438, %v3438
        %v3443 = vmul.f32 %v3439, %v3439
        %v3444 = vmul.f32 %v3440, %v3440
        %v3445 = vmul.f32 %v3441, %v3441
        %v3446 = vadd.f32 %v3442, %v3443
        %3447 = vadd.xlane.f32.xlu0 %v3446
        %v3448 = vpop.xlane.xlu0 %3447
        %v3449 = vadd.f32 %v3444, %v3445
        %3450 = vadd.xlane.f32.xlu0 %v3449
        %v3451 = vpop.xlane.xlu0 %3450
        %v3452 = vmul.f32 %v3448, 0.003921569
        %v3453 = vmul.f32 %v3451, 0.003921569
        %v3454 = vrsqrt.pop %v3452
        %v3455 = vmul.f32 %v3454, %v3452
        %v3456 = vmul.f32 %v3455, %v3454
        %v3457 = vmul.f32 0.5, %v3456
        %v3458 = vsub.f32 1.5, %v3457
        %v3459 = vmul.f32 %v3454, %v3458
        %v3460 = vmul.f32 %v3452, %v3459
        %vm3461 = vcmp.eq.f32.partialorder %v3452, inf
        %v3462 = vsel %vm3461, %v3452, %v3460
        %vm3463 = vcmp.eq.f32.partialorder %v3452, 0.0
        %v3464 = vand.u32 %v3452, 2147483648
        %v3465 = vsel %vm3463, %v3464, %v3462
        %v3466 = vrsqrt.pop %v3453
        %v3467 = vmul.f32 %v3466, %v3453
        %v3468 = vmul.f32 %v3467, %v3466
        %v3469 = vmul.f32 0.5, %v3468
        %v3470 = vsub.f32 1.5, %v3469
        %v3471 = vmul.f32 %v3466, %v3470
        %v3472 = vmul.f32 %v3453, %v3471
        %vm3473 = vcmp.eq.f32.partialorder %v3453, inf
        %v3474 = vsel %vm3473, %v3453, %v3472
        %vm3475 = vcmp.eq.f32.partialorder %v3453, 0.0
        %v3476 = vand.u32 %v3453, 2147483648
        %v3477 = vsel %vm3475, %v3476, %v3474
        %v3478 = vadd.f32 %v3465, 0.001
        %v3479 = vadd.f32 %v3477, 0.001
        %v3480 = vrcp.pop %v3478
        %v3481 = vmul.f32 %v3478, %v3480
        %v3482 = vsub.f32 1.0, %v3481
        %v3483 = vmul.f32 %v3480, %v3482
        %v3484 = vadd.f32 %v3480, %v3483
        %vm3485 = vweird.f32 %v3478
        %vm3486 = vweird.f32 %v3480
        %vm3487 = vmor %vm3485, %vm3486
        %v3488 = vsel %vm3487, %v3480, %v3484
        %v3489 = vand.u32 2147483647, %v3478
        %vm3490 = vcmp.eq.f32.partialorder %v3489, 8.507059e+37
        %v3491 = vand.u32 %v3478, 2147483648
        %v3492 = vor.u32 1.1754944e-38, %v3491
        %v3493 = vsel %vm3490, %v3492, %v3488
        %v3494 = vmul.f32 1.0, %v3493
        %v3495 = vrcp.pop %v3479
        %v3496 = vmul.f32 %v3479, %v3495
        %v3497 = vsub.f32 1.0, %v3496
        %v3498 = vmul.f32 %v3495, %v3497
        %v3499 = vadd.f32 %v3495, %v3498
        %vm3500 = vweird.f32 %v3479
        %vm3501 = vweird.f32 %v3495
        %vm3502 = vmor %vm3500, %vm3501
        %v3503 = vsel %vm3502, %v3495, %v3499
        %v3504 = vand.u32 2147483647, %v3479
        %vm3505 = vcmp.eq.f32.partialorder %v3504, 8.507059e+37
        %v3506 = vand.u32 %v3479, 2147483648
        %v3507 = vor.u32 1.1754944e-38, %v3506
        %v3508 = vsel %vm3505, %v3507, %v3503
        %v3509 = vmul.f32 1.0, %v3508
        %v3510 = vmul.f32 %v3438, %v3494
        %v3511 = vmul.f32 %v3439, %v3494
        %v3512 = vmul.f32 %v3440, %v3509
        %v3513 = vmul.f32 %v3441, %v3509
        %v3515 = vperm.slane %v3428, 0
        %v3516 = vperm.slane %v3428, 1
        %v3519 = vmul.f32 %v3510, %v3515
        %v3520 = vmul.f32 %v3511, %v3516
        %v3521 = vmul.f32 %v3512, %v3515
        %v3522 = vmul.f32 %v3513, %v3516
        %v3524 = vperm.slane %v3429, 0
        %v3525 = vperm.slane %v3429, 1
        %v3528 = vadd.f32 %v3519, %v3524
        %v3529 = vadd.f32 %v3520, %v3525
        %v3530 = vadd.f32 %v3521, %v3524
        %v3531 = vadd.f32 %v3522, %v3525
        %3532 = vst [vmem:[#allocation2] sm:$0xff] %v3528
        %3533 = vst [vmem:[#allocation2 + $0x8] sm:$0xff] %v3529
        %3534 = vst [vmem:[#allocation2 + $0x10] sm:$0xff] %v3530
        %3535 = vst [vmem:[#allocation2 + $0x18] sm:$0xff] %v3531
        %p3536 = scmp.eq.s32.totalorder %s31, 1
        // Predicated region
        $region149: #{tpu_custom_call.1} parent=83 // pred_check
          %p3537 = pneg %p3536
        $region150: #{tpu_custom_call.1} parent=83 // pred_check_branch
          %3539 = sbr.rel (%p3537) target = $region152
        $region151: #{tpu_custom_call.1} parent=83 // pred_region
          %v3540 = vld [vmem:[#allocation8] sm:$0xff]
          %v3541 = vld [vmem:[#allocation8 + $0x8] sm:$0xff]
          %v3542 = vld [vmem:[#allocation8 + $0x10] sm:$0xff]
          %v3543 = vld [vmem:[#allocation8 + $0x18] sm:$0xff]
          %v3544 = vadd.f32 %v3528, %v3540
          %v3545 = vadd.f32 %v3529, %v3541
          %v3546 = vadd.f32 %v3530, %v3542
          %v3547 = vadd.f32 %v3531, %v3543
          %3548 = vst [vmem:[#allocation22] sm:$0xff] %v3544
          %3549 = vst [vmem:[#allocation22 + $0x8] sm:$0xff] %v3545
          %3550 = vst [vmem:[#allocation22 + $0x10] sm:$0xff] %v3546
          %3551 = vst [vmem:[#allocation22 + $0x18] sm:$0xff] %v3547
        $region152: #{tpu_custom_call.1} parent=83 // pred_fallthru
          _
        // Predicated region
        $region153: #{tpu_custom_call.1} parent=83 // pred_check
          %p3552 = pneg %p435
        $region154: #{tpu_custom_call.1} parent=83 // pred_check_branch
          %3554 = sbr.rel (%p3552) target = $region156
        $region155: #{tpu_custom_call.1} parent=83 // pred_region
          %3556 = vsyncadd [#allocation5], 0
          %s3557 = sshll.u32 [#allocation22], 4
          %s3558 = int_to_ptr.vmem [resolvable:$true] %s3557
          %s3559 = sshll.u32 %s16, 4
          %s3560 = int_to_ptr.hbm [resolvable:$true] %s3559
          %3565 = dma.vmem_to_hbm [thread:$0]  %s3558, 512, %s3560, [#allocation5], 256, 256, 16
        $region156: #{tpu_custom_call.1} parent=83 // pred_fallthru
          _
        // Predicated region
        $region157: #{tpu_custom_call.1} parent=83 // pred_check
          %p3566 = pneg %p435
        $region158: #{tpu_custom_call.1} parent=83 // pred_check_branch
          %3568 = sbr.rel (%p3566) target = $region160
        $region159: #{tpu_custom_call.1} parent=83 // pred_region
          %3570 = dma.done [#allocation5], 512
        $region160: #{tpu_custom_call.1} parent=83 // pred_fallthru
          _
      $region84: #{tpu_custom_call.1} parent=5 // pred_fallthru
        _
      %p3571 = scmp.le.s32.totalorder 2, %s26
      // Predicated region
      $region161: #{tpu_custom_call.1} parent=5 // pred_check
        %p3572 = pneg %p3571
      $region162: #{tpu_custom_call.1} parent=5 // pred_check_branch
        %3574 = sbr.rel (%p3572) target = $region164
      $region163: #{tpu_custom_call.1} parent=5 // pred_region
        %s3575 = ssub.s32 %s26, 2
      $region164: #{tpu_custom_call.1} parent=5 // pred_fallthru
        _
    $region6: #{tpu_custom_call.1} parent=1 // loop_footer
      %s30 = sadd.s32 1, %s26
    $region7: #{tpu_custom_call.1} parent=1 // loop_footer_branch
      %25 = sbr.rel target = $region3
    $region8: #{tpu_custom_call.1} parent=1 // loop_exit
      _
    %3576 = vsyncpa [#allocation4], 1
    %s3577 = scalar_lea.sflag [#allocation4], 1
    %3578 = vsyncpa %s3577, 1
    %3579 = vsyncpa [#allocation7], 1
    %3580 = vsyncpa [#allocation10], 1
    %3581 = vsyncpa [#allocation5], 1
    %s3582 = scalar_lea.sflag [#allocation5], 1
    %3583 = vsyncpa %s3582, 1

</llo_original>
